<compile_context>
chip_gen: v7x
topology: tpu7x:2x2x1
jax: 0.10.0
libtpu: 0.0.40
codegen_flags: <defaults>
</compile_context>

<pallas_src>
import math

import numpy as np
import jax
import jax.numpy as jnp
from jax.experimental import pallas as pl
from jax.experimental.pallas import tpu as pltpu


# ---------------------------------------------------------------------------
# Fused whole-network kernel builder (all structural arguments are static).
# ---------------------------------------------------------------------------
def _make_fused_convdet_kernel(layer_dims, offsets, KH, KW, H, W, N, eps):
    """layer_dims: tuple of (cin, cout, has_bn) per conv layer.
    offsets: per-layer (w_off, b_off, gamma_off, beta_off) into the flat SMEM params."""
    HW = H * W
    pad_t = (KH - 1) // 2
    pad_l = (KW - 1) // 2
    taps = tuple((kh, kw) for kh in range(KH) for kw in range(KW))
    inv_n = 1.0 / float(N * HW)

    def kernel(params_ref, x_ref, mask_ref, o_ref):
        # params_ref: (P,) f32, SMEM            -- all weights / biases / gamma / beta
        # x_ref:      (Cin0, N, HW) f32, VMEM   -- input image, spatial dim on lanes
        # mask_ref:   (KH*KW, N, HW) f32, VMEM  -- per-tap 'same' boundary masks
        # o_ref:      (N, HW) f32, VMEM         -- final conv output (Cout == 1)
        act = [x_ref[ci] for ci in range(layer_dims[0][0])]   # list of (N, HW) f32

        for (cin, cout, has_bn), (w_off, b_off, g_off, be_off) in zip(layer_dims, offsets):
            # ---- Conv2d padding='same': bias folded into the accumulator init.
            acc = [jnp.zeros((N, HW), jnp.float32) + params_ref[b_off + co]
                   for co in range(cout)]
            for t, (kh, kw) in enumerate(taps):
                d = (kh - pad_t) * W + (kw - pad_l)      # flattened spatial shift
                if d == 0:
                    shifted = act                         # centre tap: mask is all-ones
                else:
                    m = mask_ref[t]                       # (N, HW) boundary mask
                    shift = (-d) % HW                     # out[p] = in[(p + d) % HW]
                    shifted = [pltpu.roll(act[ci], shift, axis=1) * m
                               for ci in range(cin)]
                for ci in range(cin):
                    src = shifted[ci]
                    base = w_off + ((kh * KW + kw) * cin + ci) * cout
                    for co in range(cout):
                        acc[co] = acc[co] + params_ref[base + co] * src

            # ---- BatchNorm2d (batch statistics, biased var) + ReLU on the resident acc.
            if has_bn:
                new_act = []
                for co in range(cout):
                    a = acc[co]
                    total = jnp.sum(jnp.sum(a, axis=1, keepdims=True),
                                    axis=0, keepdims=True)              # (1, 1)
                    mean = total * inv_n
                    centered = a - mean
                    sq = jnp.sum(jnp.sum(centered * centered, axis=1, keepdims=True),
                                 axis=0, keepdims=True)                 # (1, 1)
                    scale = jax.lax.rsqrt(sq * inv_n + eps) * params_ref[g_off + co]
                    y = centered * scale + params_ref[be_off + co]
                    new_act.append(jnp.maximum(y, 0.0))
                act = new_act
            else:
                act = acc

        # Final layer has a single output channel; the (N, HW=256) store is lane-dense.
        o_ref[...] = act[0].astype(o_ref.dtype)

    return kernel


# ---------------------------------------------------------------------------
# Forward pass wrapper (dense_final_layer=False path of ConvDet).
# ---------------------------------------------------------------------------
def convdet_forward(x_nchw, convs, bns, eps=1e-5):
    """x_nchw: (N, Cin, H, W) f32 (PyTorch layout). convs: list of (w HWIO, b).
    bns: list of (gamma, beta), one per hidden conv layer."""
    x_nchw = jnp.asarray(x_nchw, jnp.float32)
    N, Cin, H, W = (int(s) for s in x_nchw.shape)
    KH, KW = int(convs[0][0].shape[0]), int(convs[0][0].shape[1])
    HW = H * W
    n_hidden = len(bns)

    # ---- Flatten every parameter into one f32 vector that lives in SMEM.
    flat, offsets, layer_dims = [], [], []
    off = 0
    for li, (w, b) in enumerate(convs):
        kh, kw, ci, co = (int(s) for s in w.shape)
        assert (kh, kw) == (KH, KW)
        w_off = off
        flat.append(jnp.asarray(w, jnp.float32).reshape(-1)); off += kh * kw * ci * co
        b_off = off
        flat.append(jnp.asarray(b, jnp.float32).reshape(-1)); off += co
        if li < n_hidden:
            g, be = bns[li]
            g_off = off
            flat.append(jnp.asarray(g, jnp.float32).reshape(-1)); off += co
            be_off = off
            flat.append(jnp.asarray(be, jnp.float32).reshape(-1)); off += co
            has_bn = True
        else:
            g_off = be_off = 0
            has_bn = False
        offsets.append((w_off, b_off, g_off, be_off))
        layer_dims.append((ci, co, has_bn))
    params = jnp.concatenate(flat)
    assert layer_dims[0][0] == Cin and layer_dims[-1][1] == 1

    # ---- Lane-dense activation layout: (Cin, N, H*W) with the spatial axis on lanes.
    x_lanes = jnp.transpose(x_nchw, (1, 0, 2, 3)).reshape(Cin, N, HW)

    # ---- 'same'-padding boundary masks per kernel tap (host-side compile-time consts).
    pad_t, pad_l = (KH - 1) // 2, (KW - 1) // 2
    hh, ww = np.meshgrid(np.arange(H), np.arange(W), indexing="ij")
    masks_np = np.zeros((KH * KW, HW), np.float32)
    for t, (_kh, _kw) in enumerate((a, b) for a in range(KH) for b in range(KW)):
        dh, dw = _kh - pad_t, _kw - pad_l
        valid = (hh + dh >= 0) & (hh + dh < H) & (ww + dw >= 0) & (ww + dw < W)
        masks_np[t] = valid.reshape(-1).astype(np.float32)
    masks = jnp.asarray(np.ascontiguousarray(
        np.broadcast_to(masks_np[:, None, :], (KH * KW, N, HW))))

    kernel = _make_fused_convdet_kernel(
        tuple(layer_dims), tuple(offsets), KH, KW, H, W, N, float(eps))

    out = pl.pallas_call(
        kernel,
        out_shape=jax.ShapeDtypeStruct((N, HW), jnp.float32),
        grid=(1,),
        in_specs=[
            pl.BlockSpec(memory_space=pltpu.MemorySpace.SMEM),     # flat scalar params
            pl.BlockSpec((Cin, N, HW), lambda i: (0, 0, 0)),       # input image
            pl.BlockSpec((KH * KW, N, HW), lambda i: (0, 0, 0)),   # tap masks
        ],
        out_specs=pl.BlockSpec((N, HW), lambda i: (0, 0)),
        compiler_params=pltpu.CompilerParams(
            dimension_semantics=("arbitrary",),
            vmem_limit_bytes=32 * 1024 * 1024,
        ),
    )(params, x_lanes, masks)

    return out.reshape(N, 1, H, W)


# ---------------------------------------------------------------------------
# Parameter init (deterministic, PyTorch-default-like) and pure-JAX reference.
# ---------------------------------------------------------------------------
def init_convdet_params(key, in_channels, convolutional_layers, filters, kernel_size):
    channel_list = ([(in_channels, filters)]
                    + [(filters, filters)] * (convolutional_layers - 1)
                    + [(filters, 1)])
    keys = jax.random.split(key, len(channel_list))
    convs = []
    for k, (ci, co) in zip(keys, channel_list):
        fan_in = ci * kernel_size * kernel_size
        bound = 1.0 / math.sqrt(fan_in)
        wk, bk = jax.random.split(k)
        w = jax.random.uniform(wk, (kernel_size, kernel_size, ci, co),
                               jnp.float32, -bound, bound)
        b = jax.random.uniform(bk, (co,), jnp.float32, -bound, bound)
        convs.append((w, b))
    bns = [(jnp.ones((filters,), jnp.float32), jnp.zeros((filters,), jnp.float32))
           for _ in range(convolutional_layers)]
    return convs, bns


def convdet_reference(x_nchw, convs, bns, eps=1e-5):
    """Pure-JAX reference (lax.conv) used to validate the fused kernel numerically."""
    x = jnp.asarray(x_nchw, jnp.float32)

    def conv_same(x, w, b):
        kh, kw = int(w.shape[0]), int(w.shape[1])
        pt, pb = (kh - 1) // 2, kh // 2
        pleft, pright = (kw - 1) // 2, kw // 2
        y = jax.lax.conv_general_dilated(
            x, w, window_strides=(1, 1),
            padding=((pt, pb), (pleft, pright)),
            dimension_numbers=("NCHW", "HWIO", "NCHW"),
            precision=jax.lax.Precision.HIGHEST)
        return y + b.reshape(1, -1, 1, 1)

    for i in range(len(bns)):
        w, b = convs[i]
        x = conv_same(x, w, b)
        g, be = bns[i]
        mean = jnp.mean(x, axis=(0, 2, 3), keepdims=True)
        var = jnp.mean((x - mean) ** 2, axis=(0, 2, 3), keepdims=True)
        x = (x - mean) * jax.lax.rsqrt(var + eps) * g.reshape(1, -1, 1, 1) \
            + be.reshape(1, -1, 1, 1)
        x = jnp.maximum(x, 0.0)
    w, b = convs[-1]
    return conv_same(x, w, b)


if __name__ == "__main__":
    # ConvDet(in_channels=1, matrix_dimension=16, convolutional_layers=2, filters=4,
    #         kernel_size=3, dense_final_layer=False)
    in_channels, matrix_dimension = 1, 16
    convolutional_layers, filters, kernel_size = 2, 4, 3
    batch = 2

    key = jax.random.PRNGKey(0)
    pkey, xkey = jax.random.split(key)
    convs, bns = init_convdet_params(pkey, in_channels, convolutional_layers,
                                     filters, kernel_size)
    x = jax.random.normal(
        xkey, (batch, in_channels, matrix_dimension, matrix_dimension), jnp.float32)

    fwd = jax.jit(lambda xx, cc, bb: convdet_forward(xx, cc, bb))
    out = jax.block_until_ready(fwd(x, convs, bns))
    assert out.shape == (batch, 1, matrix_dimension, matrix_dimension), out.shape
    assert bool(jnp.all(jnp.isfinite(out)))

    # Numerical self-check of the fused kernel against the pure-JAX reference.
    ref = jax.block_until_ready(convdet_reference(x, convs, bns))
    max_err = float(jnp.max(jnp.abs(out - ref)))
    assert max_err < 1e-4, f"fused kernel mismatch vs reference: max|err|={max_err}"

    print("KERNEL_OK")
</pallas_src>

<mosaic_0001>
module attributes {stable_mosaic.version = 11 : i64} {
  func.func @kernel(%arg0: i32, %arg1: memref<241xf32, #tpu.memory_space<smem>>, %arg2: memref<1x2x256xf32, #tpu.memory_space<vmem>>, %arg3: memref<9x2x256xf32, #tpu.memory_space<vmem>>, %arg4: memref<2x256xf32, #tpu.memory_space<vmem>>) attributes {dimension_semantics = [#tpu.dimension_semantics<arbitrary>], iteration_bounds = array<i64: 1>, scalar_prefetch = 0 : i64, scratch_operands = 0 : i64, tpu.core_type = #tpu.core_type<tc>, window_params = [{transform_indices = @transform_0, window_bounds = array<i64: 241>}, {pipeline_mode = #tpu.pipeline_mode<synchronous>, transform_indices = @transform_1, window_bounds = array<i64: 1, 2, 256>}, {pipeline_mode = #tpu.pipeline_mode<synchronous>, transform_indices = @transform_2, window_bounds = array<i64: 9, 2, 256>}, {pipeline_mode = #tpu.pipeline_mode<synchronous>, transform_indices = @transform_3, window_bounds = array<i64: 2, 256>}]} {
    %c0 = arith.constant 0 : index
    %c0_0 = arith.constant 0 : index
    %c0_1 = arith.constant 0 : index
    %0 = vector.load %arg2[%c0, %c0_0, %c0_1] : memref<1x2x256xf32, #tpu.memory_space<vmem>>, vector<1x2x256xf32>
    %1 = vector.shape_cast %0 : vector<1x2x256xf32> to vector<2x256xf32>
    %cst = arith.constant 0.000000e+00 : f32
    %2 = vector.broadcast %cst : f32 to vector<2x256xf32>
    %c36 = arith.constant 36 : index
    %3 = memref.load %arg1[%c36] : memref<241xf32, #tpu.memory_space<smem>>
    %4 = vector.broadcast %3 : f32 to vector<2x256xf32>
    %5 = arith.addf %2, %4 : vector<2x256xf32>
    %cst_2 = arith.constant 0.000000e+00 : f32
    %6 = vector.broadcast %cst_2 : f32 to vector<2x256xf32>
    %c37 = arith.constant 37 : index
    %7 = memref.load %arg1[%c37] : memref<241xf32, #tpu.memory_space<smem>>
    %8 = vector.broadcast %7 : f32 to vector<2x256xf32>
    %9 = arith.addf %6, %8 : vector<2x256xf32>
    %cst_3 = arith.constant 0.000000e+00 : f32
    %10 = vector.broadcast %cst_3 : f32 to vector<2x256xf32>
    %c38 = arith.constant 38 : index
    %11 = memref.load %arg1[%c38] : memref<241xf32, #tpu.memory_space<smem>>
    %12 = vector.broadcast %11 : f32 to vector<2x256xf32>
    %13 = arith.addf %10, %12 : vector<2x256xf32>
    %cst_4 = arith.constant 0.000000e+00 : f32
    %14 = vector.broadcast %cst_4 : f32 to vector<2x256xf32>
    %c39 = arith.constant 39 : index
    %15 = memref.load %arg1[%c39] : memref<241xf32, #tpu.memory_space<smem>>
    %16 = vector.broadcast %15 : f32 to vector<2x256xf32>
    %17 = arith.addf %14, %16 : vector<2x256xf32>
    %c0_5 = arith.constant 0 : index
    %c0_6 = arith.constant 0 : index
    %c0_7 = arith.constant 0 : index
    %18 = vector.load %arg3[%c0_5, %c0_6, %c0_7] : memref<9x2x256xf32, #tpu.memory_space<vmem>>, vector<1x2x256xf32>
    %19 = vector.shape_cast %18 : vector<1x2x256xf32> to vector<2x256xf32>
    %c17_i32 = arith.constant 17 : i32
    %20 = tpu.dynamic_rotate %1 by %c17_i32 dim 1 : vector<2x256xf32>, i32 -> vector<2x256xf32>
    %21 = arith.mulf %20, %19 : vector<2x256xf32>
    %c0_8 = arith.constant 0 : index
    %22 = memref.load %arg1[%c0_8] : memref<241xf32, #tpu.memory_space<smem>>
    %23 = vector.broadcast %22 : f32 to vector<2x256xf32>
    %24 = arith.mulf %23, %21 : vector<2x256xf32>
    %25 = arith.addf %5, %24 : vector<2x256xf32>
    %c1 = arith.constant 1 : index
    %26 = memref.load %arg1[%c1] : memref<241xf32, #tpu.memory_space<smem>>
    %27 = vector.broadcast %26 : f32 to vector<2x256xf32>
    %28 = arith.mulf %27, %21 : vector<2x256xf32>
    %29 = arith.addf %9, %28 : vector<2x256xf32>
    %c2 = arith.constant 2 : index
    %30 = memref.load %arg1[%c2] : memref<241xf32, #tpu.memory_space<smem>>
    %31 = vector.broadcast %30 : f32 to vector<2x256xf32>
    %32 = arith.mulf %31, %21 : vector<2x256xf32>
    %33 = arith.addf %13, %32 : vector<2x256xf32>
    %c3 = arith.constant 3 : index
    %34 = memref.load %arg1[%c3] : memref<241xf32, #tpu.memory_space<smem>>
    %35 = vector.broadcast %34 : f32 to vector<2x256xf32>
    %36 = arith.mulf %35, %21 : vector<2x256xf32>
    %37 = arith.addf %17, %36 : vector<2x256xf32>
    %c1_9 = arith.constant 1 : index
    %c0_10 = arith.constant 0 : index
    %c0_11 = arith.constant 0 : index
    %38 = vector.load %arg3[%c1_9, %c0_10, %c0_11] : memref<9x2x256xf32, #tpu.memory_space<vmem>>, vector<1x2x256xf32>
    %39 = vector.shape_cast %38 : vector<1x2x256xf32> to vector<2x256xf32>
    %c16_i32 = arith.constant 16 : i32
    %40 = tpu.dynamic_rotate %1 by %c16_i32 dim 1 : vector<2x256xf32>, i32 -> vector<2x256xf32>
    %41 = arith.mulf %40, %39 : vector<2x256xf32>
    %c4 = arith.constant 4 : index
    %42 = memref.load %arg1[%c4] : memref<241xf32, #tpu.memory_space<smem>>
    %43 = vector.broadcast %42 : f32 to vector<2x256xf32>
    %44 = arith.mulf %43, %41 : vector<2x256xf32>
    %45 = arith.addf %25, %44 : vector<2x256xf32>
    %c5 = arith.constant 5 : index
    %46 = memref.load %arg1[%c5] : memref<241xf32, #tpu.memory_space<smem>>
    %47 = vector.broadcast %46 : f32 to vector<2x256xf32>
    %48 = arith.mulf %47, %41 : vector<2x256xf32>
    %49 = arith.addf %29, %48 : vector<2x256xf32>
    %c6 = arith.constant 6 : index
    %50 = memref.load %arg1[%c6] : memref<241xf32, #tpu.memory_space<smem>>
    %51 = vector.broadcast %50 : f32 to vector<2x256xf32>
    %52 = arith.mulf %51, %41 : vector<2x256xf32>
    %53 = arith.addf %33, %52 : vector<2x256xf32>
    %c7 = arith.constant 7 : index
    %54 = memref.load %arg1[%c7] : memref<241xf32, #tpu.memory_space<smem>>
    %55 = vector.broadcast %54 : f32 to vector<2x256xf32>
    %56 = arith.mulf %55, %41 : vector<2x256xf32>
    %57 = arith.addf %37, %56 : vector<2x256xf32>
    %c2_12 = arith.constant 2 : index
    %c0_13 = arith.constant 0 : index
    %c0_14 = arith.constant 0 : index
    %58 = vector.load %arg3[%c2_12, %c0_13, %c0_14] : memref<9x2x256xf32, #tpu.memory_space<vmem>>, vector<1x2x256xf32>
    %59 = vector.shape_cast %58 : vector<1x2x256xf32> to vector<2x256xf32>
    %c15_i32 = arith.constant 15 : i32
    %60 = tpu.dynamic_rotate %1 by %c15_i32 dim 1 : vector<2x256xf32>, i32 -> vector<2x256xf32>
    %61 = arith.mulf %60, %59 : vector<2x256xf32>
    %c8 = arith.constant 8 : index
    %62 = memref.load %arg1[%c8] : memref<241xf32, #tpu.memory_space<smem>>
    %63 = vector.broadcast %62 : f32 to vector<2x256xf32>
    %64 = arith.mulf %63, %61 : vector<2x256xf32>
    %65 = arith.addf %45, %64 : vector<2x256xf32>
    %c9 = arith.constant 9 : index
    %66 = memref.load %arg1[%c9] : memref<241xf32, #tpu.memory_space<smem>>
    %67 = vector.broadcast %66 : f32 to vector<2x256xf32>
    %68 = arith.mulf %67, %61 : vector<2x256xf32>
    %69 = arith.addf %49, %68 : vector<2x256xf32>
    %c10 = arith.constant 10 : index
    %70 = memref.load %arg1[%c10] : memref<241xf32, #tpu.memory_space<smem>>
    %71 = vector.broadcast %70 : f32 to vector<2x256xf32>
    %72 = arith.mulf %71, %61 : vector<2x256xf32>
    %73 = arith.addf %53, %72 : vector<2x256xf32>
    %c11 = arith.constant 11 : index
    %74 = memref.load %arg1[%c11] : memref<241xf32, #tpu.memory_space<smem>>
    %75 = vector.broadcast %74 : f32 to vector<2x256xf32>
    %76 = arith.mulf %75, %61 : vector<2x256xf32>
    %77 = arith.addf %57, %76 : vector<2x256xf32>
    %c3_15 = arith.constant 3 : index
    %c0_16 = arith.constant 0 : index
    %c0_17 = arith.constant 0 : index
    %78 = vector.load %arg3[%c3_15, %c0_16, %c0_17] : memref<9x2x256xf32, #tpu.memory_space<vmem>>, vector<1x2x256xf32>
    %79 = vector.shape_cast %78 : vector<1x2x256xf32> to vector<2x256xf32>
    %c1_i32 = arith.constant 1 : i32
    %80 = tpu.dynamic_rotate %1 by %c1_i32 dim 1 : vector<2x256xf32>, i32 -> vector<2x256xf32>
    %81 = arith.mulf %80, %79 : vector<2x256xf32>
    %c12 = arith.constant 12 : index
    %82 = memref.load %arg1[%c12] : memref<241xf32, #tpu.memory_space<smem>>
    %83 = vector.broadcast %82 : f32 to vector<2x256xf32>
    %84 = arith.mulf %83, %81 : vector<2x256xf32>
    %85 = arith.addf %65, %84 : vector<2x256xf32>
    %c13 = arith.constant 13 : index
    %86 = memref.load %arg1[%c13] : memref<241xf32, #tpu.memory_space<smem>>
    %87 = vector.broadcast %86 : f32 to vector<2x256xf32>
    %88 = arith.mulf %87, %81 : vector<2x256xf32>
    %89 = arith.addf %69, %88 : vector<2x256xf32>
    %c14 = arith.constant 14 : index
    %90 = memref.load %arg1[%c14] : memref<241xf32, #tpu.memory_space<smem>>
    %91 = vector.broadcast %90 : f32 to vector<2x256xf32>
    %92 = arith.mulf %91, %81 : vector<2x256xf32>
    %93 = arith.addf %73, %92 : vector<2x256xf32>
    %c15 = arith.constant 15 : index
    %94 = memref.load %arg1[%c15] : memref<241xf32, #tpu.memory_space<smem>>
    %95 = vector.broadcast %94 : f32 to vector<2x256xf32>
    %96 = arith.mulf %95, %81 : vector<2x256xf32>
    %97 = arith.addf %77, %96 : vector<2x256xf32>
    %c16 = arith.constant 16 : index
    %98 = memref.load %arg1[%c16] : memref<241xf32, #tpu.memory_space<smem>>
    %99 = vector.broadcast %98 : f32 to vector<2x256xf32>
    %100 = arith.mulf %99, %1 : vector<2x256xf32>
    %101 = arith.addf %85, %100 : vector<2x256xf32>
    %c17 = arith.constant 17 : index
    %102 = memref.load %arg1[%c17] : memref<241xf32, #tpu.memory_space<smem>>
    %103 = vector.broadcast %102 : f32 to vector<2x256xf32>
    %104 = arith.mulf %103, %1 : vector<2x256xf32>
    %105 = arith.addf %89, %104 : vector<2x256xf32>
    %c18 = arith.constant 18 : index
    %106 = memref.load %arg1[%c18] : memref<241xf32, #tpu.memory_space<smem>>
    %107 = vector.broadcast %106 : f32 to vector<2x256xf32>
    %108 = arith.mulf %107, %1 : vector<2x256xf32>
    %109 = arith.addf %93, %108 : vector<2x256xf32>
    %c19 = arith.constant 19 : index
    %110 = memref.load %arg1[%c19] : memref<241xf32, #tpu.memory_space<smem>>
    %111 = vector.broadcast %110 : f32 to vector<2x256xf32>
    %112 = arith.mulf %111, %1 : vector<2x256xf32>
    %113 = arith.addf %97, %112 : vector<2x256xf32>
    %c5_18 = arith.constant 5 : index
    %c0_19 = arith.constant 0 : index
    %c0_20 = arith.constant 0 : index
    %114 = vector.load %arg3[%c5_18, %c0_19, %c0_20] : memref<9x2x256xf32, #tpu.memory_space<vmem>>, vector<1x2x256xf32>
    %115 = vector.shape_cast %114 : vector<1x2x256xf32> to vector<2x256xf32>
    %c255_i32 = arith.constant 255 : i32
    %116 = tpu.dynamic_rotate %1 by %c255_i32 dim 1 : vector<2x256xf32>, i32 -> vector<2x256xf32>
    %117 = arith.mulf %116, %115 : vector<2x256xf32>
    %c20 = arith.constant 20 : index
    %118 = memref.load %arg1[%c20] : memref<241xf32, #tpu.memory_space<smem>>
    %119 = vector.broadcast %118 : f32 to vector<2x256xf32>
    %120 = arith.mulf %119, %117 : vector<2x256xf32>
    %121 = arith.addf %101, %120 : vector<2x256xf32>
    %c21 = arith.constant 21 : index
    %122 = memref.load %arg1[%c21] : memref<241xf32, #tpu.memory_space<smem>>
    %123 = vector.broadcast %122 : f32 to vector<2x256xf32>
    %124 = arith.mulf %123, %117 : vector<2x256xf32>
    %125 = arith.addf %105, %124 : vector<2x256xf32>
    %c22 = arith.constant 22 : index
    %126 = memref.load %arg1[%c22] : memref<241xf32, #tpu.memory_space<smem>>
    %127 = vector.broadcast %126 : f32 to vector<2x256xf32>
    %128 = arith.mulf %127, %117 : vector<2x256xf32>
    %129 = arith.addf %109, %128 : vector<2x256xf32>
    %c23 = arith.constant 23 : index
    %130 = memref.load %arg1[%c23] : memref<241xf32, #tpu.memory_space<smem>>
    %131 = vector.broadcast %130 : f32 to vector<2x256xf32>
    %132 = arith.mulf %131, %117 : vector<2x256xf32>
    %133 = arith.addf %113, %132 : vector<2x256xf32>
    %c6_21 = arith.constant 6 : index
    %c0_22 = arith.constant 0 : index
    %c0_23 = arith.constant 0 : index
    %134 = vector.load %arg3[%c6_21, %c0_22, %c0_23] : memref<9x2x256xf32, #tpu.memory_space<vmem>>, vector<1x2x256xf32>
    %135 = vector.shape_cast %134 : vector<1x2x256xf32> to vector<2x256xf32>
    %c241_i32 = arith.constant 241 : i32
    %136 = tpu.dynamic_rotate %1 by %c241_i32 dim 1 : vector<2x256xf32>, i32 -> vector<2x256xf32>
    %137 = arith.mulf %136, %135 : vector<2x256xf32>
    %c24 = arith.constant 24 : index
    %138 = memref.load %arg1[%c24] : memref<241xf32, #tpu.memory_space<smem>>
    %139 = vector.broadcast %138 : f32 to vector<2x256xf32>
    %140 = arith.mulf %139, %137 : vector<2x256xf32>
    %141 = arith.addf %121, %140 : vector<2x256xf32>
    %c25 = arith.constant 25 : index
    %142 = memref.load %arg1[%c25] : memref<241xf32, #tpu.memory_space<smem>>
    %143 = vector.broadcast %142 : f32 to vector<2x256xf32>
    %144 = arith.mulf %143, %137 : vector<2x256xf32>
    %145 = arith.addf %125, %144 : vector<2x256xf32>
    %c26 = arith.constant 26 : index
    %146 = memref.load %arg1[%c26] : memref<241xf32, #tpu.memory_space<smem>>
    %147 = vector.broadcast %146 : f32 to vector<2x256xf32>
    %148 = arith.mulf %147, %137 : vector<2x256xf32>
    %149 = arith.addf %129, %148 : vector<2x256xf32>
    %c27 = arith.constant 27 : index
    %150 = memref.load %arg1[%c27] : memref<241xf32, #tpu.memory_space<smem>>
    %151 = vector.broadcast %150 : f32 to vector<2x256xf32>
    %152 = arith.mulf %151, %137 : vector<2x256xf32>
    %153 = arith.addf %133, %152 : vector<2x256xf32>
    %c7_24 = arith.constant 7 : index
    %c0_25 = arith.constant 0 : index
    %c0_26 = arith.constant 0 : index
    %154 = vector.load %arg3[%c7_24, %c0_25, %c0_26] : memref<9x2x256xf32, #tpu.memory_space<vmem>>, vector<1x2x256xf32>
    %155 = vector.shape_cast %154 : vector<1x2x256xf32> to vector<2x256xf32>
    %c240_i32 = arith.constant 240 : i32
    %156 = tpu.dynamic_rotate %1 by %c240_i32 dim 1 : vector<2x256xf32>, i32 -> vector<2x256xf32>
    %157 = arith.mulf %156, %155 : vector<2x256xf32>
    %c28 = arith.constant 28 : index
    %158 = memref.load %arg1[%c28] : memref<241xf32, #tpu.memory_space<smem>>
    %159 = vector.broadcast %158 : f32 to vector<2x256xf32>
    %160 = arith.mulf %159, %157 : vector<2x256xf32>
    %161 = arith.addf %141, %160 : vector<2x256xf32>
    %c29 = arith.constant 29 : index
    %162 = memref.load %arg1[%c29] : memref<241xf32, #tpu.memory_space<smem>>
    %163 = vector.broadcast %162 : f32 to vector<2x256xf32>
    %164 = arith.mulf %163, %157 : vector<2x256xf32>
    %165 = arith.addf %145, %164 : vector<2x256xf32>
    %c30 = arith.constant 30 : index
    %166 = memref.load %arg1[%c30] : memref<241xf32, #tpu.memory_space<smem>>
    %167 = vector.broadcast %166 : f32 to vector<2x256xf32>
    %168 = arith.mulf %167, %157 : vector<2x256xf32>
    %169 = arith.addf %149, %168 : vector<2x256xf32>
    %c31 = arith.constant 31 : index
    %170 = memref.load %arg1[%c31] : memref<241xf32, #tpu.memory_space<smem>>
    %171 = vector.broadcast %170 : f32 to vector<2x256xf32>
    %172 = arith.mulf %171, %157 : vector<2x256xf32>
    %173 = arith.addf %153, %172 : vector<2x256xf32>
    %c8_27 = arith.constant 8 : index
    %c0_28 = arith.constant 0 : index
    %c0_29 = arith.constant 0 : index
    %174 = vector.load %arg3[%c8_27, %c0_28, %c0_29] : memref<9x2x256xf32, #tpu.memory_space<vmem>>, vector<1x2x256xf32>
    %175 = vector.shape_cast %174 : vector<1x2x256xf32> to vector<2x256xf32>
    %c239_i32 = arith.constant 239 : i32
    %176 = tpu.dynamic_rotate %1 by %c239_i32 dim 1 : vector<2x256xf32>, i32 -> vector<2x256xf32>
    %177 = arith.mulf %176, %175 : vector<2x256xf32>
    %c32 = arith.constant 32 : index
    %178 = memref.load %arg1[%c32] : memref<241xf32, #tpu.memory_space<smem>>
    %179 = vector.broadcast %178 : f32 to vector<2x256xf32>
    %180 = arith.mulf %179, %177 : vector<2x256xf32>
    %181 = arith.addf %161, %180 : vector<2x256xf32>
    %c33 = arith.constant 33 : index
    %182 = memref.load %arg1[%c33] : memref<241xf32, #tpu.memory_space<smem>>
    %183 = vector.broadcast %182 : f32 to vector<2x256xf32>
    %184 = arith.mulf %183, %177 : vector<2x256xf32>
    %185 = arith.addf %165, %184 : vector<2x256xf32>
    %c34 = arith.constant 34 : index
    %186 = memref.load %arg1[%c34] : memref<241xf32, #tpu.memory_space<smem>>
    %187 = vector.broadcast %186 : f32 to vector<2x256xf32>
    %188 = arith.mulf %187, %177 : vector<2x256xf32>
    %189 = arith.addf %169, %188 : vector<2x256xf32>
    %c35 = arith.constant 35 : index
    %190 = memref.load %arg1[%c35] : memref<241xf32, #tpu.memory_space<smem>>
    %191 = vector.broadcast %190 : f32 to vector<2x256xf32>
    %192 = arith.mulf %191, %177 : vector<2x256xf32>
    %193 = arith.addf %173, %192 : vector<2x256xf32>
    %cst_30 = arith.constant dense<0.000000e+00> : vector<2xf32>
    %194 = vector.multi_reduction <add>, %181, %cst_30 [1] : vector<2x256xf32> to vector<2xf32>
    %195 = vector.shape_cast %194 : vector<2xf32> to vector<2x1xf32>
    %cst_31 = arith.constant dense<0.000000e+00> : vector<1xf32>
    %196 = vector.multi_reduction <add>, %195, %cst_31 [0] : vector<2x1xf32> to vector<1xf32>
    %197 = vector.shape_cast %196 : vector<1xf32> to vector<1x1xf32>
    %cst_32 = arith.constant 0.001953125 : f32
    %198 = vector.broadcast %cst_32 : f32 to vector<1x1xf32>
    %199 = arith.mulf %197, %198 : vector<1x1xf32>
    %200 = vector.broadcast %199 : vector<1x1xf32> to vector<2x256xf32>
    %201 = arith.subf %181, %200 : vector<2x256xf32>
    %202 = arith.mulf %201, %201 : vector<2x256xf32>
    %cst_33 = arith.constant dense<0.000000e+00> : vector<2xf32>
    %203 = vector.multi_reduction <add>, %202, %cst_33 [1] : vector<2x256xf32> to vector<2xf32>
    %204 = vector.shape_cast %203 : vector<2xf32> to vector<2x1xf32>
    %cst_34 = arith.constant dense<0.000000e+00> : vector<1xf32>
    %205 = vector.multi_reduction <add>, %204, %cst_34 [0] : vector<2x1xf32> to vector<1xf32>
    %206 = vector.shape_cast %205 : vector<1xf32> to vector<1x1xf32>
    %cst_35 = arith.constant 0.001953125 : f32
    %207 = vector.broadcast %cst_35 : f32 to vector<1x1xf32>
    %208 = arith.mulf %206, %207 : vector<1x1xf32>
    %cst_36 = arith.constant 9.99999974E-6 : f32
    %209 = vector.broadcast %cst_36 : f32 to vector<1x1xf32>
    %210 = arith.addf %208, %209 : vector<1x1xf32>
    %211 = math.rsqrt %210 : vector<1x1xf32>
    %c40 = arith.constant 40 : index
    %212 = memref.load %arg1[%c40] : memref<241xf32, #tpu.memory_space<smem>>
    %213 = vector.broadcast %212 : f32 to vector<1x1xf32>
    %214 = arith.mulf %211, %213 : vector<1x1xf32>
    %215 = vector.broadcast %214 : vector<1x1xf32> to vector<2x256xf32>
    %216 = arith.mulf %201, %215 : vector<2x256xf32>
    %c44 = arith.constant 44 : index
    %217 = memref.load %arg1[%c44] : memref<241xf32, #tpu.memory_space<smem>>
    %218 = vector.broadcast %217 : f32 to vector<2x256xf32>
    %219 = arith.addf %216, %218 : vector<2x256xf32>
    %cst_37 = arith.constant 0.000000e+00 : f32
    %220 = vector.broadcast %cst_37 : f32 to vector<2x256xf32>
    %221 = arith.maximumf %219, %220 : vector<2x256xf32>
    %cst_38 = arith.constant dense<0.000000e+00> : vector<2xf32>
    %222 = vector.multi_reduction <add>, %185, %cst_38 [1] : vector<2x256xf32> to vector<2xf32>
    %223 = vector.shape_cast %222 : vector<2xf32> to vector<2x1xf32>
    %cst_39 = arith.constant dense<0.000000e+00> : vector<1xf32>
    %224 = vector.multi_reduction <add>, %223, %cst_39 [0] : vector<2x1xf32> to vector<1xf32>
    %225 = vector.shape_cast %224 : vector<1xf32> to vector<1x1xf32>
    %cst_40 = arith.constant 0.001953125 : f32
    %226 = vector.broadcast %cst_40 : f32 to vector<1x1xf32>
    %227 = arith.mulf %225, %226 : vector<1x1xf32>
    %228 = vector.broadcast %227 : vector<1x1xf32> to vector<2x256xf32>
    %229 = arith.subf %185, %228 : vector<2x256xf32>
    %230 = arith.mulf %229, %229 : vector<2x256xf32>
    %cst_41 = arith.constant dense<0.000000e+00> : vector<2xf32>
    %231 = vector.multi_reduction <add>, %230, %cst_41 [1] : vector<2x256xf32> to vector<2xf32>
    %232 = vector.shape_cast %231 : vector<2xf32> to vector<2x1xf32>
    %cst_42 = arith.constant dense<0.000000e+00> : vector<1xf32>
    %233 = vector.multi_reduction <add>, %232, %cst_42 [0] : vector<2x1xf32> to vector<1xf32>
    %234 = vector.shape_cast %233 : vector<1xf32> to vector<1x1xf32>
    %cst_43 = arith.constant 0.001953125 : f32
    %235 = vector.broadcast %cst_43 : f32 to vector<1x1xf32>
    %236 = arith.mulf %234, %235 : vector<1x1xf32>
    %cst_44 = arith.constant 9.99999974E-6 : f32
    %237 = vector.broadcast %cst_44 : f32 to vector<1x1xf32>
    %238 = arith.addf %236, %237 : vector<1x1xf32>
    %239 = math.rsqrt %238 : vector<1x1xf32>
    %c41 = arith.constant 41 : index
    %240 = memref.load %arg1[%c41] : memref<241xf32, #tpu.memory_space<smem>>
    %241 = vector.broadcast %240 : f32 to vector<1x1xf32>
    %242 = arith.mulf %239, %241 : vector<1x1xf32>
    %243 = vector.broadcast %242 : vector<1x1xf32> to vector<2x256xf32>
    %244 = arith.mulf %229, %243 : vector<2x256xf32>
    %c45 = arith.constant 45 : index
    %245 = memref.load %arg1[%c45] : memref<241xf32, #tpu.memory_space<smem>>
    %246 = vector.broadcast %245 : f32 to vector<2x256xf32>
    %247 = arith.addf %244, %246 : vector<2x256xf32>
    %cst_45 = arith.constant 0.000000e+00 : f32
    %248 = vector.broadcast %cst_45 : f32 to vector<2x256xf32>
    %249 = arith.maximumf %247, %248 : vector<2x256xf32>
    %cst_46 = arith.constant dense<0.000000e+00> : vector<2xf32>
    %250 = vector.multi_reduction <add>, %189, %cst_46 [1] : vector<2x256xf32> to vector<2xf32>
    %251 = vector.shape_cast %250 : vector<2xf32> to vector<2x1xf32>
    %cst_47 = arith.constant dense<0.000000e+00> : vector<1xf32>
    %252 = vector.multi_reduction <add>, %251, %cst_47 [0] : vector<2x1xf32> to vector<1xf32>
    %253 = vector.shape_cast %252 : vector<1xf32> to vector<1x1xf32>
    %cst_48 = arith.constant 0.001953125 : f32
    %254 = vector.broadcast %cst_48 : f32 to vector<1x1xf32>
    %255 = arith.mulf %253, %254 : vector<1x1xf32>
    %256 = vector.broadcast %255 : vector<1x1xf32> to vector<2x256xf32>
    %257 = arith.subf %189, %256 : vector<2x256xf32>
    %258 = arith.mulf %257, %257 : vector<2x256xf32>
    %cst_49 = arith.constant dense<0.000000e+00> : vector<2xf32>
    %259 = vector.multi_reduction <add>, %258, %cst_49 [1] : vector<2x256xf32> to vector<2xf32>
    %260 = vector.shape_cast %259 : vector<2xf32> to vector<2x1xf32>
    %cst_50 = arith.constant dense<0.000000e+00> : vector<1xf32>
    %261 = vector.multi_reduction <add>, %260, %cst_50 [0] : vector<2x1xf32> to vector<1xf32>
    %262 = vector.shape_cast %261 : vector<1xf32> to vector<1x1xf32>
    %cst_51 = arith.constant 0.001953125 : f32
    %263 = vector.broadcast %cst_51 : f32 to vector<1x1xf32>
    %264 = arith.mulf %262, %263 : vector<1x1xf32>
    %cst_52 = arith.constant 9.99999974E-6 : f32
    %265 = vector.broadcast %cst_52 : f32 to vector<1x1xf32>
    %266 = arith.addf %264, %265 : vector<1x1xf32>
    %267 = math.rsqrt %266 : vector<1x1xf32>
    %c42 = arith.constant 42 : index
    %268 = memref.load %arg1[%c42] : memref<241xf32, #tpu.memory_space<smem>>
    %269 = vector.broadcast %268 : f32 to vector<1x1xf32>
    %270 = arith.mulf %267, %269 : vector<1x1xf32>
    %271 = vector.broadcast %270 : vector<1x1xf32> to vector<2x256xf32>
    %272 = arith.mulf %257, %271 : vector<2x256xf32>
    %c46 = arith.constant 46 : index
    %273 = memref.load %arg1[%c46] : memref<241xf32, #tpu.memory_space<smem>>
    %274 = vector.broadcast %273 : f32 to vector<2x256xf32>
    %275 = arith.addf %272, %274 : vector<2x256xf32>
    %cst_53 = arith.constant 0.000000e+00 : f32
    %276 = vector.broadcast %cst_53 : f32 to vector<2x256xf32>
    %277 = arith.maximumf %275, %276 : vector<2x256xf32>
    %cst_54 = arith.constant dense<0.000000e+00> : vector<2xf32>
    %278 = vector.multi_reduction <add>, %193, %cst_54 [1] : vector<2x256xf32> to vector<2xf32>
    %279 = vector.shape_cast %278 : vector<2xf32> to vector<2x1xf32>
    %cst_55 = arith.constant dense<0.000000e+00> : vector<1xf32>
    %280 = vector.multi_reduction <add>, %279, %cst_55 [0] : vector<2x1xf32> to vector<1xf32>
    %281 = vector.shape_cast %280 : vector<1xf32> to vector<1x1xf32>
    %cst_56 = arith.constant 0.001953125 : f32
    %282 = vector.broadcast %cst_56 : f32 to vector<1x1xf32>
    %283 = arith.mulf %281, %282 : vector<1x1xf32>
    %284 = vector.broadcast %283 : vector<1x1xf32> to vector<2x256xf32>
    %285 = arith.subf %193, %284 : vector<2x256xf32>
    %286 = arith.mulf %285, %285 : vector<2x256xf32>
    %cst_57 = arith.constant dense<0.000000e+00> : vector<2xf32>
    %287 = vector.multi_reduction <add>, %286, %cst_57 [1] : vector<2x256xf32> to vector<2xf32>
    %288 = vector.shape_cast %287 : vector<2xf32> to vector<2x1xf32>
    %cst_58 = arith.constant dense<0.000000e+00> : vector<1xf32>
    %289 = vector.multi_reduction <add>, %288, %cst_58 [0] : vector<2x1xf32> to vector<1xf32>
    %290 = vector.shape_cast %289 : vector<1xf32> to vector<1x1xf32>
    %cst_59 = arith.constant 0.001953125 : f32
    %291 = vector.broadcast %cst_59 : f32 to vector<1x1xf32>
    %292 = arith.mulf %290, %291 : vector<1x1xf32>
    %cst_60 = arith.constant 9.99999974E-6 : f32
    %293 = vector.broadcast %cst_60 : f32 to vector<1x1xf32>
    %294 = arith.addf %292, %293 : vector<1x1xf32>
    %295 = math.rsqrt %294 : vector<1x1xf32>
    %c43 = arith.constant 43 : index
    %296 = memref.load %arg1[%c43] : memref<241xf32, #tpu.memory_space<smem>>
    %297 = vector.broadcast %296 : f32 to vector<1x1xf32>
    %298 = arith.mulf %295, %297 : vector<1x1xf32>
    %299 = vector.broadcast %298 : vector<1x1xf32> to vector<2x256xf32>
    %300 = arith.mulf %285, %299 : vector<2x256xf32>
    %c47 = arith.constant 47 : index
    %301 = memref.load %arg1[%c47] : memref<241xf32, #tpu.memory_space<smem>>
    %302 = vector.broadcast %301 : f32 to vector<2x256xf32>
    %303 = arith.addf %300, %302 : vector<2x256xf32>
    %cst_61 = arith.constant 0.000000e+00 : f32
    %304 = vector.broadcast %cst_61 : f32 to vector<2x256xf32>
    %305 = arith.maximumf %303, %304 : vector<2x256xf32>
    %cst_62 = arith.constant 0.000000e+00 : f32
    %306 = vector.broadcast %cst_62 : f32 to vector<2x256xf32>
    %c192 = arith.constant 192 : index
    %307 = memref.load %arg1[%c192] : memref<241xf32, #tpu.memory_space<smem>>
    %308 = vector.broadcast %307 : f32 to vector<2x256xf32>
    %309 = arith.addf %306, %308 : vector<2x256xf32>
    %cst_63 = arith.constant 0.000000e+00 : f32
    %310 = vector.broadcast %cst_63 : f32 to vector<2x256xf32>
    %c193 = arith.constant 193 : index
    %311 = memref.load %arg1[%c193] : memref<241xf32, #tpu.memory_space<smem>>
    %312 = vector.broadcast %311 : f32 to vector<2x256xf32>
    %313 = arith.addf %310, %312 : vector<2x256xf32>
    %cst_64 = arith.constant 0.000000e+00 : f32
    %314 = vector.broadcast %cst_64 : f32 to vector<2x256xf32>
    %c194 = arith.constant 194 : index
    %315 = memref.load %arg1[%c194] : memref<241xf32, #tpu.memory_space<smem>>
    %316 = vector.broadcast %315 : f32 to vector<2x256xf32>
    %317 = arith.addf %314, %316 : vector<2x256xf32>
    %cst_65 = arith.constant 0.000000e+00 : f32
    %318 = vector.broadcast %cst_65 : f32 to vector<2x256xf32>
    %c195 = arith.constant 195 : index
    %319 = memref.load %arg1[%c195] : memref<241xf32, #tpu.memory_space<smem>>
    %320 = vector.broadcast %319 : f32 to vector<2x256xf32>
    %321 = arith.addf %318, %320 : vector<2x256xf32>
    %c0_66 = arith.constant 0 : index
    %c0_67 = arith.constant 0 : index
    %c0_68 = arith.constant 0 : index
    %322 = vector.load %arg3[%c0_66, %c0_67, %c0_68] : memref<9x2x256xf32, #tpu.memory_space<vmem>>, vector<1x2x256xf32>
    %323 = vector.shape_cast %322 : vector<1x2x256xf32> to vector<2x256xf32>
    %c17_i32_69 = arith.constant 17 : i32
    %324 = tpu.dynamic_rotate %221 by %c17_i32_69 dim 1 : vector<2x256xf32>, i32 -> vector<2x256xf32>
    %325 = arith.mulf %324, %323 : vector<2x256xf32>
    %c17_i32_70 = arith.constant 17 : i32
    %326 = tpu.dynamic_rotate %249 by %c17_i32_70 dim 1 : vector<2x256xf32>, i32 -> vector<2x256xf32>
    %327 = arith.mulf %326, %323 : vector<2x256xf32>
    %c17_i32_71 = arith.constant 17 : i32
    %328 = tpu.dynamic_rotate %277 by %c17_i32_71 dim 1 : vector<2x256xf32>, i32 -> vector<2x256xf32>
    %329 = arith.mulf %328, %323 : vector<2x256xf32>
    %c17_i32_72 = arith.constant 17 : i32
    %330 = tpu.dynamic_rotate %305 by %c17_i32_72 dim 1 : vector<2x256xf32>, i32 -> vector<2x256xf32>
    %331 = arith.mulf %330, %323 : vector<2x256xf32>
    %c48 = arith.constant 48 : index
    %332 = memref.load %arg1[%c48] : memref<241xf32, #tpu.memory_space<smem>>
    %333 = vector.broadcast %332 : f32 to vector<2x256xf32>
    %334 = arith.mulf %333, %325 : vector<2x256xf32>
    %335 = arith.addf %309, %334 : vector<2x256xf32>
    %c49 = arith.constant 49 : index
    %336 = memref.load %arg1[%c49] : memref<241xf32, #tpu.memory_space<smem>>
    %337 = vector.broadcast %336 : f32 to vector<2x256xf32>
    %338 = arith.mulf %337, %325 : vector<2x256xf32>
    %339 = arith.addf %313, %338 : vector<2x256xf32>
    %c50 = arith.constant 50 : index
    %340 = memref.load %arg1[%c50] : memref<241xf32, #tpu.memory_space<smem>>
    %341 = vector.broadcast %340 : f32 to vector<2x256xf32>
    %342 = arith.mulf %341, %325 : vector<2x256xf32>
    %343 = arith.addf %317, %342 : vector<2x256xf32>
    %c51 = arith.constant 51 : index
    %344 = memref.load %arg1[%c51] : memref<241xf32, #tpu.memory_space<smem>>
    %345 = vector.broadcast %344 : f32 to vector<2x256xf32>
    %346 = arith.mulf %345, %325 : vector<2x256xf32>
    %347 = arith.addf %321, %346 : vector<2x256xf32>
    %c52 = arith.constant 52 : index
    %348 = memref.load %arg1[%c52] : memref<241xf32, #tpu.memory_space<smem>>
    %349 = vector.broadcast %348 : f32 to vector<2x256xf32>
    %350 = arith.mulf %349, %327 : vector<2x256xf32>
    %351 = arith.addf %335, %350 : vector<2x256xf32>
    %c53 = arith.constant 53 : index
    %352 = memref.load %arg1[%c53] : memref<241xf32, #tpu.memory_space<smem>>
    %353 = vector.broadcast %352 : f32 to vector<2x256xf32>
    %354 = arith.mulf %353, %327 : vector<2x256xf32>
    %355 = arith.addf %339, %354 : vector<2x256xf32>
    %c54 = arith.constant 54 : index
    %356 = memref.load %arg1[%c54] : memref<241xf32, #tpu.memory_space<smem>>
    %357 = vector.broadcast %356 : f32 to vector<2x256xf32>
    %358 = arith.mulf %357, %327 : vector<2x256xf32>
    %359 = arith.addf %343, %358 : vector<2x256xf32>
    %c55 = arith.constant 55 : index
    %360 = memref.load %arg1[%c55] : memref<241xf32, #tpu.memory_space<smem>>
    %361 = vector.broadcast %360 : f32 to vector<2x256xf32>
    %362 = arith.mulf %361, %327 : vector<2x256xf32>
    %363 = arith.addf %347, %362 : vector<2x256xf32>
    %c56 = arith.constant 56 : index
    %364 = memref.load %arg1[%c56] : memref<241xf32, #tpu.memory_space<smem>>
    %365 = vector.broadcast %364 : f32 to vector<2x256xf32>
    %366 = arith.mulf %365, %329 : vector<2x256xf32>
    %367 = arith.addf %351, %366 : vector<2x256xf32>
    %c57 = arith.constant 57 : index
    %368 = memref.load %arg1[%c57] : memref<241xf32, #tpu.memory_space<smem>>
    %369 = vector.broadcast %368 : f32 to vector<2x256xf32>
    %370 = arith.mulf %369, %329 : vector<2x256xf32>
    %371 = arith.addf %355, %370 : vector<2x256xf32>
    %c58 = arith.constant 58 : index
    %372 = memref.load %arg1[%c58] : memref<241xf32, #tpu.memory_space<smem>>
    %373 = vector.broadcast %372 : f32 to vector<2x256xf32>
    %374 = arith.mulf %373, %329 : vector<2x256xf32>
    %375 = arith.addf %359, %374 : vector<2x256xf32>
    %c59 = arith.constant 59 : index
    %376 = memref.load %arg1[%c59] : memref<241xf32, #tpu.memory_space<smem>>
    %377 = vector.broadcast %376 : f32 to vector<2x256xf32>
    %378 = arith.mulf %377, %329 : vector<2x256xf32>
    %379 = arith.addf %363, %378 : vector<2x256xf32>
    %c60 = arith.constant 60 : index
    %380 = memref.load %arg1[%c60] : memref<241xf32, #tpu.memory_space<smem>>
    %381 = vector.broadcast %380 : f32 to vector<2x256xf32>
    %382 = arith.mulf %381, %331 : vector<2x256xf32>
    %383 = arith.addf %367, %382 : vector<2x256xf32>
    %c61 = arith.constant 61 : index
    %384 = memref.load %arg1[%c61] : memref<241xf32, #tpu.memory_space<smem>>
    %385 = vector.broadcast %384 : f32 to vector<2x256xf32>
    %386 = arith.mulf %385, %331 : vector<2x256xf32>
    %387 = arith.addf %371, %386 : vector<2x256xf32>
    %c62 = arith.constant 62 : index
    %388 = memref.load %arg1[%c62] : memref<241xf32, #tpu.memory_space<smem>>
    %389 = vector.broadcast %388 : f32 to vector<2x256xf32>
    %390 = arith.mulf %389, %331 : vector<2x256xf32>
    %391 = arith.addf %375, %390 : vector<2x256xf32>
    %c63 = arith.constant 63 : index
    %392 = memref.load %arg1[%c63] : memref<241xf32, #tpu.memory_space<smem>>
    %393 = vector.broadcast %392 : f32 to vector<2x256xf32>
    %394 = arith.mulf %393, %331 : vector<2x256xf32>
    %395 = arith.addf %379, %394 : vector<2x256xf32>
    %c1_73 = arith.constant 1 : index
    %c0_74 = arith.constant 0 : index
    %c0_75 = arith.constant 0 : index
    %396 = vector.load %arg3[%c1_73, %c0_74, %c0_75] : memref<9x2x256xf32, #tpu.memory_space<vmem>>, vector<1x2x256xf32>
    %397 = vector.shape_cast %396 : vector<1x2x256xf32> to vector<2x256xf32>
    %c16_i32_76 = arith.constant 16 : i32
    %398 = tpu.dynamic_rotate %221 by %c16_i32_76 dim 1 : vector<2x256xf32>, i32 -> vector<2x256xf32>
    %399 = arith.mulf %398, %397 : vector<2x256xf32>
    %c16_i32_77 = arith.constant 16 : i32
    %400 = tpu.dynamic_rotate %249 by %c16_i32_77 dim 1 : vector<2x256xf32>, i32 -> vector<2x256xf32>
    %401 = arith.mulf %400, %397 : vector<2x256xf32>
    %c16_i32_78 = arith.constant 16 : i32
    %402 = tpu.dynamic_rotate %277 by %c16_i32_78 dim 1 : vector<2x256xf32>, i32 -> vector<2x256xf32>
    %403 = arith.mulf %402, %397 : vector<2x256xf32>
    %c16_i32_79 = arith.constant 16 : i32
    %404 = tpu.dynamic_rotate %305 by %c16_i32_79 dim 1 : vector<2x256xf32>, i32 -> vector<2x256xf32>
    %405 = arith.mulf %404, %397 : vector<2x256xf32>
    %c64 = arith.constant 64 : index
    %406 = memref.load %arg1[%c64] : memref<241xf32, #tpu.memory_space<smem>>
    %407 = vector.broadcast %406 : f32 to vector<2x256xf32>
    %408 = arith.mulf %407, %399 : vector<2x256xf32>
    %409 = arith.addf %383, %408 : vector<2x256xf32>
    %c65 = arith.constant 65 : index
    %410 = memref.load %arg1[%c65] : memref<241xf32, #tpu.memory_space<smem>>
    %411 = vector.broadcast %410 : f32 to vector<2x256xf32>
    %412 = arith.mulf %411, %399 : vector<2x256xf32>
    %413 = arith.addf %387, %412 : vector<2x256xf32>
    %c66 = arith.constant 66 : index
    %414 = memref.load %arg1[%c66] : memref<241xf32, #tpu.memory_space<smem>>
    %415 = vector.broadcast %414 : f32 to vector<2x256xf32>
    %416 = arith.mulf %415, %399 : vector<2x256xf32>
    %417 = arith.addf %391, %416 : vector<2x256xf32>
    %c67 = arith.constant 67 : index
    %418 = memref.load %arg1[%c67] : memref<241xf32, #tpu.memory_space<smem>>
    %419 = vector.broadcast %418 : f32 to vector<2x256xf32>
    %420 = arith.mulf %419, %399 : vector<2x256xf32>
    %421 = arith.addf %395, %420 : vector<2x256xf32>
    %c68 = arith.constant 68 : index
    %422 = memref.load %arg1[%c68] : memref<241xf32, #tpu.memory_space<smem>>
    %423 = vector.broadcast %422 : f32 to vector<2x256xf32>
    %424 = arith.mulf %423, %401 : vector<2x256xf32>
    %425 = arith.addf %409, %424 : vector<2x256xf32>
    %c69 = arith.constant 69 : index
    %426 = memref.load %arg1[%c69] : memref<241xf32, #tpu.memory_space<smem>>
    %427 = vector.broadcast %426 : f32 to vector<2x256xf32>
    %428 = arith.mulf %427, %401 : vector<2x256xf32>
    %429 = arith.addf %413, %428 : vector<2x256xf32>
    %c70 = arith.constant 70 : index
    %430 = memref.load %arg1[%c70] : memref<241xf32, #tpu.memory_space<smem>>
    %431 = vector.broadcast %430 : f32 to vector<2x256xf32>
    %432 = arith.mulf %431, %401 : vector<2x256xf32>
    %433 = arith.addf %417, %432 : vector<2x256xf32>
    %c71 = arith.constant 71 : index
    %434 = memref.load %arg1[%c71] : memref<241xf32, #tpu.memory_space<smem>>
    %435 = vector.broadcast %434 : f32 to vector<2x256xf32>
    %436 = arith.mulf %435, %401 : vector<2x256xf32>
    %437 = arith.addf %421, %436 : vector<2x256xf32>
    %c72 = arith.constant 72 : index
    %438 = memref.load %arg1[%c72] : memref<241xf32, #tpu.memory_space<smem>>
    %439 = vector.broadcast %438 : f32 to vector<2x256xf32>
    %440 = arith.mulf %439, %403 : vector<2x256xf32>
    %441 = arith.addf %425, %440 : vector<2x256xf32>
    %c73 = arith.constant 73 : index
    %442 = memref.load %arg1[%c73] : memref<241xf32, #tpu.memory_space<smem>>
    %443 = vector.broadcast %442 : f32 to vector<2x256xf32>
    %444 = arith.mulf %443, %403 : vector<2x256xf32>
    %445 = arith.addf %429, %444 : vector<2x256xf32>
    %c74 = arith.constant 74 : index
    %446 = memref.load %arg1[%c74] : memref<241xf32, #tpu.memory_space<smem>>
    %447 = vector.broadcast %446 : f32 to vector<2x256xf32>
    %448 = arith.mulf %447, %403 : vector<2x256xf32>
    %449 = arith.addf %433, %448 : vector<2x256xf32>
    %c75 = arith.constant 75 : index
    %450 = memref.load %arg1[%c75] : memref<241xf32, #tpu.memory_space<smem>>
    %451 = vector.broadcast %450 : f32 to vector<2x256xf32>
    %452 = arith.mulf %451, %403 : vector<2x256xf32>
    %453 = arith.addf %437, %452 : vector<2x256xf32>
    %c76 = arith.constant 76 : index
    %454 = memref.load %arg1[%c76] : memref<241xf32, #tpu.memory_space<smem>>
    %455 = vector.broadcast %454 : f32 to vector<2x256xf32>
    %456 = arith.mulf %455, %405 : vector<2x256xf32>
    %457 = arith.addf %441, %456 : vector<2x256xf32>
    %c77 = arith.constant 77 : index
    %458 = memref.load %arg1[%c77] : memref<241xf32, #tpu.memory_space<smem>>
    %459 = vector.broadcast %458 : f32 to vector<2x256xf32>
    %460 = arith.mulf %459, %405 : vector<2x256xf32>
    %461 = arith.addf %445, %460 : vector<2x256xf32>
    %c78 = arith.constant 78 : index
    %462 = memref.load %arg1[%c78] : memref<241xf32, #tpu.memory_space<smem>>
    %463 = vector.broadcast %462 : f32 to vector<2x256xf32>
    %464 = arith.mulf %463, %405 : vector<2x256xf32>
    %465 = arith.addf %449, %464 : vector<2x256xf32>
    %c79 = arith.constant 79 : index
    %466 = memref.load %arg1[%c79] : memref<241xf32, #tpu.memory_space<smem>>
    %467 = vector.broadcast %466 : f32 to vector<2x256xf32>
    %468 = arith.mulf %467, %405 : vector<2x256xf32>
    %469 = arith.addf %453, %468 : vector<2x256xf32>
    %c2_80 = arith.constant 2 : index
    %c0_81 = arith.constant 0 : index
    %c0_82 = arith.constant 0 : index
    %470 = vector.load %arg3[%c2_80, %c0_81, %c0_82] : memref<9x2x256xf32, #tpu.memory_space<vmem>>, vector<1x2x256xf32>
    %471 = vector.shape_cast %470 : vector<1x2x256xf32> to vector<2x256xf32>
    %c15_i32_83 = arith.constant 15 : i32
    %472 = tpu.dynamic_rotate %221 by %c15_i32_83 dim 1 : vector<2x256xf32>, i32 -> vector<2x256xf32>
    %473 = arith.mulf %472, %471 : vector<2x256xf32>
    %c15_i32_84 = arith.constant 15 : i32
    %474 = tpu.dynamic_rotate %249 by %c15_i32_84 dim 1 : vector<2x256xf32>, i32 -> vector<2x256xf32>
    %475 = arith.mulf %474, %471 : vector<2x256xf32>
    %c15_i32_85 = arith.constant 15 : i32
    %476 = tpu.dynamic_rotate %277 by %c15_i32_85 dim 1 : vector<2x256xf32>, i32 -> vector<2x256xf32>
    %477 = arith.mulf %476, %471 : vector<2x256xf32>
    %c15_i32_86 = arith.constant 15 : i32
    %478 = tpu.dynamic_rotate %305 by %c15_i32_86 dim 1 : vector<2x256xf32>, i32 -> vector<2x256xf32>
    %479 = arith.mulf %478, %471 : vector<2x256xf32>
    %c80 = arith.constant 80 : index
    %480 = memref.load %arg1[%c80] : memref<241xf32, #tpu.memory_space<smem>>
    %481 = vector.broadcast %480 : f32 to vector<2x256xf32>
    %482 = arith.mulf %481, %473 : vector<2x256xf32>
    %483 = arith.addf %457, %482 : vector<2x256xf32>
    %c81 = arith.constant 81 : index
    %484 = memref.load %arg1[%c81] : memref<241xf32, #tpu.memory_space<smem>>
    %485 = vector.broadcast %484 : f32 to vector<2x256xf32>
    %486 = arith.mulf %485, %473 : vector<2x256xf32>
    %487 = arith.addf %461, %486 : vector<2x256xf32>
    %c82 = arith.constant 82 : index
    %488 = memref.load %arg1[%c82] : memref<241xf32, #tpu.memory_space<smem>>
    %489 = vector.broadcast %488 : f32 to vector<2x256xf32>
    %490 = arith.mulf %489, %473 : vector<2x256xf32>
    %491 = arith.addf %465, %490 : vector<2x256xf32>
    %c83 = arith.constant 83 : index
    %492 = memref.load %arg1[%c83] : memref<241xf32, #tpu.memory_space<smem>>
    %493 = vector.broadcast %492 : f32 to vector<2x256xf32>
    %494 = arith.mulf %493, %473 : vector<2x256xf32>
    %495 = arith.addf %469, %494 : vector<2x256xf32>
    %c84 = arith.constant 84 : index
    %496 = memref.load %arg1[%c84] : memref<241xf32, #tpu.memory_space<smem>>
    %497 = vector.broadcast %496 : f32 to vector<2x256xf32>
    %498 = arith.mulf %497, %475 : vector<2x256xf32>
    %499 = arith.addf %483, %498 : vector<2x256xf32>
    %c85 = arith.constant 85 : index
    %500 = memref.load %arg1[%c85] : memref<241xf32, #tpu.memory_space<smem>>
    %501 = vector.broadcast %500 : f32 to vector<2x256xf32>
    %502 = arith.mulf %501, %475 : vector<2x256xf32>
    %503 = arith.addf %487, %502 : vector<2x256xf32>
    %c86 = arith.constant 86 : index
    %504 = memref.load %arg1[%c86] : memref<241xf32, #tpu.memory_space<smem>>
    %505 = vector.broadcast %504 : f32 to vector<2x256xf32>
    %506 = arith.mulf %505, %475 : vector<2x256xf32>
    %507 = arith.addf %491, %506 : vector<2x256xf32>
    %c87 = arith.constant 87 : index
    %508 = memref.load %arg1[%c87] : memref<241xf32, #tpu.memory_space<smem>>
    %509 = vector.broadcast %508 : f32 to vector<2x256xf32>
    %510 = arith.mulf %509, %475 : vector<2x256xf32>
    %511 = arith.addf %495, %510 : vector<2x256xf32>
    %c88 = arith.constant 88 : index
    %512 = memref.load %arg1[%c88] : memref<241xf32, #tpu.memory_space<smem>>
    %513 = vector.broadcast %512 : f32 to vector<2x256xf32>
    %514 = arith.mulf %513, %477 : vector<2x256xf32>
    %515 = arith.addf %499, %514 : vector<2x256xf32>
    %c89 = arith.constant 89 : index
    %516 = memref.load %arg1[%c89] : memref<241xf32, #tpu.memory_space<smem>>
    %517 = vector.broadcast %516 : f32 to vector<2x256xf32>
    %518 = arith.mulf %517, %477 : vector<2x256xf32>
    %519 = arith.addf %503, %518 : vector<2x256xf32>
    %c90 = arith.constant 90 : index
    %520 = memref.load %arg1[%c90] : memref<241xf32, #tpu.memory_space<smem>>
    %521 = vector.broadcast %520 : f32 to vector<2x256xf32>
    %522 = arith.mulf %521, %477 : vector<2x256xf32>
    %523 = arith.addf %507, %522 : vector<2x256xf32>
    %c91 = arith.constant 91 : index
    %524 = memref.load %arg1[%c91] : memref<241xf32, #tpu.memory_space<smem>>
    %525 = vector.broadcast %524 : f32 to vector<2x256xf32>
    %526 = arith.mulf %525, %477 : vector<2x256xf32>
    %527 = arith.addf %511, %526 : vector<2x256xf32>
    %c92 = arith.constant 92 : index
    %528 = memref.load %arg1[%c92] : memref<241xf32, #tpu.memory_space<smem>>
    %529 = vector.broadcast %528 : f32 to vector<2x256xf32>
    %530 = arith.mulf %529, %479 : vector<2x256xf32>
    %531 = arith.addf %515, %530 : vector<2x256xf32>
    %c93 = arith.constant 93 : index
    %532 = memref.load %arg1[%c93] : memref<241xf32, #tpu.memory_space<smem>>
    %533 = vector.broadcast %532 : f32 to vector<2x256xf32>
    %534 = arith.mulf %533, %479 : vector<2x256xf32>
    %535 = arith.addf %519, %534 : vector<2x256xf32>
    %c94 = arith.constant 94 : index
    %536 = memref.load %arg1[%c94] : memref<241xf32, #tpu.memory_space<smem>>
    %537 = vector.broadcast %536 : f32 to vector<2x256xf32>
    %538 = arith.mulf %537, %479 : vector<2x256xf32>
    %539 = arith.addf %523, %538 : vector<2x256xf32>
    %c95 = arith.constant 95 : index
    %540 = memref.load %arg1[%c95] : memref<241xf32, #tpu.memory_space<smem>>
    %541 = vector.broadcast %540 : f32 to vector<2x256xf32>
    %542 = arith.mulf %541, %479 : vector<2x256xf32>
    %543 = arith.addf %527, %542 : vector<2x256xf32>
    %c3_87 = arith.constant 3 : index
    %c0_88 = arith.constant 0 : index
    %c0_89 = arith.constant 0 : index
    %544 = vector.load %arg3[%c3_87, %c0_88, %c0_89] : memref<9x2x256xf32, #tpu.memory_space<vmem>>, vector<1x2x256xf32>
    %545 = vector.shape_cast %544 : vector<1x2x256xf32> to vector<2x256xf32>
    %c1_i32_90 = arith.constant 1 : i32
    %546 = tpu.dynamic_rotate %221 by %c1_i32_90 dim 1 : vector<2x256xf32>, i32 -> vector<2x256xf32>
    %547 = arith.mulf %546, %545 : vector<2x256xf32>
    %c1_i32_91 = arith.constant 1 : i32
    %548 = tpu.dynamic_rotate %249 by %c1_i32_91 dim 1 : vector<2x256xf32>, i32 -> vector<2x256xf32>
    %549 = arith.mulf %548, %545 : vector<2x256xf32>
    %c1_i32_92 = arith.constant 1 : i32
    %550 = tpu.dynamic_rotate %277 by %c1_i32_92 dim 1 : vector<2x256xf32>, i32 -> vector<2x256xf32>
    %551 = arith.mulf %550, %545 : vector<2x256xf32>
    %c1_i32_93 = arith.constant 1 : i32
    %552 = tpu.dynamic_rotate %305 by %c1_i32_93 dim 1 : vector<2x256xf32>, i32 -> vector<2x256xf32>
    %553 = arith.mulf %552, %545 : vector<2x256xf32>
    %c96 = arith.constant 96 : index
    %554 = memref.load %arg1[%c96] : memref<241xf32, #tpu.memory_space<smem>>
    %555 = vector.broadcast %554 : f32 to vector<2x256xf32>
    %556 = arith.mulf %555, %547 : vector<2x256xf32>
    %557 = arith.addf %531, %556 : vector<2x256xf32>
    %c97 = arith.constant 97 : index
    %558 = memref.load %arg1[%c97] : memref<241xf32, #tpu.memory_space<smem>>
    %559 = vector.broadcast %558 : f32 to vector<2x256xf32>
    %560 = arith.mulf %559, %547 : vector<2x256xf32>
    %561 = arith.addf %535, %560 : vector<2x256xf32>
    %c98 = arith.constant 98 : index
    %562 = memref.load %arg1[%c98] : memref<241xf32, #tpu.memory_space<smem>>
    %563 = vector.broadcast %562 : f32 to vector<2x256xf32>
    %564 = arith.mulf %563, %547 : vector<2x256xf32>
    %565 = arith.addf %539, %564 : vector<2x256xf32>
    %c99 = arith.constant 99 : index
    %566 = memref.load %arg1[%c99] : memref<241xf32, #tpu.memory_space<smem>>
    %567 = vector.broadcast %566 : f32 to vector<2x256xf32>
    %568 = arith.mulf %567, %547 : vector<2x256xf32>
    %569 = arith.addf %543, %568 : vector<2x256xf32>
    %c100 = arith.constant 100 : index
    %570 = memref.load %arg1[%c100] : memref<241xf32, #tpu.memory_space<smem>>
    %571 = vector.broadcast %570 : f32 to vector<2x256xf32>
    %572 = arith.mulf %571, %549 : vector<2x256xf32>
    %573 = arith.addf %557, %572 : vector<2x256xf32>
    %c101 = arith.constant 101 : index
    %574 = memref.load %arg1[%c101] : memref<241xf32, #tpu.memory_space<smem>>
    %575 = vector.broadcast %574 : f32 to vector<2x256xf32>
    %576 = arith.mulf %575, %549 : vector<2x256xf32>
    %577 = arith.addf %561, %576 : vector<2x256xf32>
    %c102 = arith.constant 102 : index
    %578 = memref.load %arg1[%c102] : memref<241xf32, #tpu.memory_space<smem>>
    %579 = vector.broadcast %578 : f32 to vector<2x256xf32>
    %580 = arith.mulf %579, %549 : vector<2x256xf32>
    %581 = arith.addf %565, %580 : vector<2x256xf32>
    %c103 = arith.constant 103 : index
    %582 = memref.load %arg1[%c103] : memref<241xf32, #tpu.memory_space<smem>>
    %583 = vector.broadcast %582 : f32 to vector<2x256xf32>
    %584 = arith.mulf %583, %549 : vector<2x256xf32>
    %585 = arith.addf %569, %584 : vector<2x256xf32>
    %c104 = arith.constant 104 : index
    %586 = memref.load %arg1[%c104] : memref<241xf32, #tpu.memory_space<smem>>
    %587 = vector.broadcast %586 : f32 to vector<2x256xf32>
    %588 = arith.mulf %587, %551 : vector<2x256xf32>
    %589 = arith.addf %573, %588 : vector<2x256xf32>
    %c105 = arith.constant 105 : index
    %590 = memref.load %arg1[%c105] : memref<241xf32, #tpu.memory_space<smem>>
    %591 = vector.broadcast %590 : f32 to vector<2x256xf32>
    %592 = arith.mulf %591, %551 : vector<2x256xf32>
    %593 = arith.addf %577, %592 : vector<2x256xf32>
    %c106 = arith.constant 106 : index
    %594 = memref.load %arg1[%c106] : memref<241xf32, #tpu.memory_space<smem>>
    %595 = vector.broadcast %594 : f32 to vector<2x256xf32>
    %596 = arith.mulf %595, %551 : vector<2x256xf32>
    %597 = arith.addf %581, %596 : vector<2x256xf32>
    %c107 = arith.constant 107 : index
    %598 = memref.load %arg1[%c107] : memref<241xf32, #tpu.memory_space<smem>>
    %599 = vector.broadcast %598 : f32 to vector<2x256xf32>
    %600 = arith.mulf %599, %551 : vector<2x256xf32>
    %601 = arith.addf %585, %600 : vector<2x256xf32>
    %c108 = arith.constant 108 : index
    %602 = memref.load %arg1[%c108] : memref<241xf32, #tpu.memory_space<smem>>
    %603 = vector.broadcast %602 : f32 to vector<2x256xf32>
    %604 = arith.mulf %603, %553 : vector<2x256xf32>
    %605 = arith.addf %589, %604 : vector<2x256xf32>
    %c109 = arith.constant 109 : index
    %606 = memref.load %arg1[%c109] : memref<241xf32, #tpu.memory_space<smem>>
    %607 = vector.broadcast %606 : f32 to vector<2x256xf32>
    %608 = arith.mulf %607, %553 : vector<2x256xf32>
    %609 = arith.addf %593, %608 : vector<2x256xf32>
    %c110 = arith.constant 110 : index
    %610 = memref.load %arg1[%c110] : memref<241xf32, #tpu.memory_space<smem>>
    %611 = vector.broadcast %610 : f32 to vector<2x256xf32>
    %612 = arith.mulf %611, %553 : vector<2x256xf32>
    %613 = arith.addf %597, %612 : vector<2x256xf32>
    %c111 = arith.constant 111 : index
    %614 = memref.load %arg1[%c111] : memref<241xf32, #tpu.memory_space<smem>>
    %615 = vector.broadcast %614 : f32 to vector<2x256xf32>
    %616 = arith.mulf %615, %553 : vector<2x256xf32>
    %617 = arith.addf %601, %616 : vector<2x256xf32>
    %c112 = arith.constant 112 : index
    %618 = memref.load %arg1[%c112] : memref<241xf32, #tpu.memory_space<smem>>
    %619 = vector.broadcast %618 : f32 to vector<2x256xf32>
    %620 = arith.mulf %619, %221 : vector<2x256xf32>
    %621 = arith.addf %605, %620 : vector<2x256xf32>
    %c113 = arith.constant 113 : index
    %622 = memref.load %arg1[%c113] : memref<241xf32, #tpu.memory_space<smem>>
    %623 = vector.broadcast %622 : f32 to vector<2x256xf32>
    %624 = arith.mulf %623, %221 : vector<2x256xf32>
    %625 = arith.addf %609, %624 : vector<2x256xf32>
    %c114 = arith.constant 114 : index
    %626 = memref.load %arg1[%c114] : memref<241xf32, #tpu.memory_space<smem>>
    %627 = vector.broadcast %626 : f32 to vector<2x256xf32>
    %628 = arith.mulf %627, %221 : vector<2x256xf32>
    %629 = arith.addf %613, %628 : vector<2x256xf32>
    %c115 = arith.constant 115 : index
    %630 = memref.load %arg1[%c115] : memref<241xf32, #tpu.memory_space<smem>>
    %631 = vector.broadcast %630 : f32 to vector<2x256xf32>
    %632 = arith.mulf %631, %221 : vector<2x256xf32>
    %633 = arith.addf %617, %632 : vector<2x256xf32>
    %c116 = arith.constant 116 : index
    %634 = memref.load %arg1[%c116] : memref<241xf32, #tpu.memory_space<smem>>
    %635 = vector.broadcast %634 : f32 to vector<2x256xf32>
    %636 = arith.mulf %635, %249 : vector<2x256xf32>
    %637 = arith.addf %621, %636 : vector<2x256xf32>
    %c117 = arith.constant 117 : index
    %638 = memref.load %arg1[%c117] : memref<241xf32, #tpu.memory_space<smem>>
    %639 = vector.broadcast %638 : f32 to vector<2x256xf32>
    %640 = arith.mulf %639, %249 : vector<2x256xf32>
    %641 = arith.addf %625, %640 : vector<2x256xf32>
    %c118 = arith.constant 118 : index
    %642 = memref.load %arg1[%c118] : memref<241xf32, #tpu.memory_space<smem>>
    %643 = vector.broadcast %642 : f32 to vector<2x256xf32>
    %644 = arith.mulf %643, %249 : vector<2x256xf32>
    %645 = arith.addf %629, %644 : vector<2x256xf32>
    %c119 = arith.constant 119 : index
    %646 = memref.load %arg1[%c119] : memref<241xf32, #tpu.memory_space<smem>>
    %647 = vector.broadcast %646 : f32 to vector<2x256xf32>
    %648 = arith.mulf %647, %249 : vector<2x256xf32>
    %649 = arith.addf %633, %648 : vector<2x256xf32>
    %c120 = arith.constant 120 : index
    %650 = memref.load %arg1[%c120] : memref<241xf32, #tpu.memory_space<smem>>
    %651 = vector.broadcast %650 : f32 to vector<2x256xf32>
    %652 = arith.mulf %651, %277 : vector<2x256xf32>
    %653 = arith.addf %637, %652 : vector<2x256xf32>
    %c121 = arith.constant 121 : index
    %654 = memref.load %arg1[%c121] : memref<241xf32, #tpu.memory_space<smem>>
    %655 = vector.broadcast %654 : f32 to vector<2x256xf32>
    %656 = arith.mulf %655, %277 : vector<2x256xf32>
    %657 = arith.addf %641, %656 : vector<2x256xf32>
    %c122 = arith.constant 122 : index
    %658 = memref.load %arg1[%c122] : memref<241xf32, #tpu.memory_space<smem>>
    %659 = vector.broadcast %658 : f32 to vector<2x256xf32>
    %660 = arith.mulf %659, %277 : vector<2x256xf32>
    %661 = arith.addf %645, %660 : vector<2x256xf32>
    %c123 = arith.constant 123 : index
    %662 = memref.load %arg1[%c123] : memref<241xf32, #tpu.memory_space<smem>>
    %663 = vector.broadcast %662 : f32 to vector<2x256xf32>
    %664 = arith.mulf %663, %277 : vector<2x256xf32>
    %665 = arith.addf %649, %664 : vector<2x256xf32>
    %c124 = arith.constant 124 : index
    %666 = memref.load %arg1[%c124] : memref<241xf32, #tpu.memory_space<smem>>
    %667 = vector.broadcast %666 : f32 to vector<2x256xf32>
    %668 = arith.mulf %667, %305 : vector<2x256xf32>
    %669 = arith.addf %653, %668 : vector<2x256xf32>
    %c125 = arith.constant 125 : index
    %670 = memref.load %arg1[%c125] : memref<241xf32, #tpu.memory_space<smem>>
    %671 = vector.broadcast %670 : f32 to vector<2x256xf32>
    %672 = arith.mulf %671, %305 : vector<2x256xf32>
    %673 = arith.addf %657, %672 : vector<2x256xf32>
    %c126 = arith.constant 126 : index
    %674 = memref.load %arg1[%c126] : memref<241xf32, #tpu.memory_space<smem>>
    %675 = vector.broadcast %674 : f32 to vector<2x256xf32>
    %676 = arith.mulf %675, %305 : vector<2x256xf32>
    %677 = arith.addf %661, %676 : vector<2x256xf32>
    %c127 = arith.constant 127 : index
    %678 = memref.load %arg1[%c127] : memref<241xf32, #tpu.memory_space<smem>>
    %679 = vector.broadcast %678 : f32 to vector<2x256xf32>
    %680 = arith.mulf %679, %305 : vector<2x256xf32>
    %681 = arith.addf %665, %680 : vector<2x256xf32>
    %c5_94 = arith.constant 5 : index
    %c0_95 = arith.constant 0 : index
    %c0_96 = arith.constant 0 : index
    %682 = vector.load %arg3[%c5_94, %c0_95, %c0_96] : memref<9x2x256xf32, #tpu.memory_space<vmem>>, vector<1x2x256xf32>
    %683 = vector.shape_cast %682 : vector<1x2x256xf32> to vector<2x256xf32>
    %c255_i32_97 = arith.constant 255 : i32
    %684 = tpu.dynamic_rotate %221 by %c255_i32_97 dim 1 : vector<2x256xf32>, i32 -> vector<2x256xf32>
    %685 = arith.mulf %684, %683 : vector<2x256xf32>
    %c255_i32_98 = arith.constant 255 : i32
    %686 = tpu.dynamic_rotate %249 by %c255_i32_98 dim 1 : vector<2x256xf32>, i32 -> vector<2x256xf32>
    %687 = arith.mulf %686, %683 : vector<2x256xf32>
    %c255_i32_99 = arith.constant 255 : i32
    %688 = tpu.dynamic_rotate %277 by %c255_i32_99 dim 1 : vector<2x256xf32>, i32 -> vector<2x256xf32>
    %689 = arith.mulf %688, %683 : vector<2x256xf32>
    %c255_i32_100 = arith.constant 255 : i32
    %690 = tpu.dynamic_rotate %305 by %c255_i32_100 dim 1 : vector<2x256xf32>, i32 -> vector<2x256xf32>
    %691 = arith.mulf %690, %683 : vector<2x256xf32>
    %c128 = arith.constant 128 : index
    %692 = memref.load %arg1[%c128] : memref<241xf32, #tpu.memory_space<smem>>
    %693 = vector.broadcast %692 : f32 to vector<2x256xf32>
    %694 = arith.mulf %693, %685 : vector<2x256xf32>
    %695 = arith.addf %669, %694 : vector<2x256xf32>
    %c129 = arith.constant 129 : index
    %696 = memref.load %arg1[%c129] : memref<241xf32, #tpu.memory_space<smem>>
    %697 = vector.broadcast %696 : f32 to vector<2x256xf32>
    %698 = arith.mulf %697, %685 : vector<2x256xf32>
    %699 = arith.addf %673, %698 : vector<2x256xf32>
    %c130 = arith.constant 130 : index
    %700 = memref.load %arg1[%c130] : memref<241xf32, #tpu.memory_space<smem>>
    %701 = vector.broadcast %700 : f32 to vector<2x256xf32>
    %702 = arith.mulf %701, %685 : vector<2x256xf32>
    %703 = arith.addf %677, %702 : vector<2x256xf32>
    %c131 = arith.constant 131 : index
    %704 = memref.load %arg1[%c131] : memref<241xf32, #tpu.memory_space<smem>>
    %705 = vector.broadcast %704 : f32 to vector<2x256xf32>
    %706 = arith.mulf %705, %685 : vector<2x256xf32>
    %707 = arith.addf %681, %706 : vector<2x256xf32>
    %c132 = arith.constant 132 : index
    %708 = memref.load %arg1[%c132] : memref<241xf32, #tpu.memory_space<smem>>
    %709 = vector.broadcast %708 : f32 to vector<2x256xf32>
    %710 = arith.mulf %709, %687 : vector<2x256xf32>
    %711 = arith.addf %695, %710 : vector<2x256xf32>
    %c133 = arith.constant 133 : index
    %712 = memref.load %arg1[%c133] : memref<241xf32, #tpu.memory_space<smem>>
    %713 = vector.broadcast %712 : f32 to vector<2x256xf32>
    %714 = arith.mulf %713, %687 : vector<2x256xf32>
    %715 = arith.addf %699, %714 : vector<2x256xf32>
    %c134 = arith.constant 134 : index
    %716 = memref.load %arg1[%c134] : memref<241xf32, #tpu.memory_space<smem>>
    %717 = vector.broadcast %716 : f32 to vector<2x256xf32>
    %718 = arith.mulf %717, %687 : vector<2x256xf32>
    %719 = arith.addf %703, %718 : vector<2x256xf32>
    %c135 = arith.constant 135 : index
    %720 = memref.load %arg1[%c135] : memref<241xf32, #tpu.memory_space<smem>>
    %721 = vector.broadcast %720 : f32 to vector<2x256xf32>
    %722 = arith.mulf %721, %687 : vector<2x256xf32>
    %723 = arith.addf %707, %722 : vector<2x256xf32>
    %c136 = arith.constant 136 : index
    %724 = memref.load %arg1[%c136] : memref<241xf32, #tpu.memory_space<smem>>
    %725 = vector.broadcast %724 : f32 to vector<2x256xf32>
    %726 = arith.mulf %725, %689 : vector<2x256xf32>
    %727 = arith.addf %711, %726 : vector<2x256xf32>
    %c137 = arith.constant 137 : index
    %728 = memref.load %arg1[%c137] : memref<241xf32, #tpu.memory_space<smem>>
    %729 = vector.broadcast %728 : f32 to vector<2x256xf32>
    %730 = arith.mulf %729, %689 : vector<2x256xf32>
    %731 = arith.addf %715, %730 : vector<2x256xf32>
    %c138 = arith.constant 138 : index
    %732 = memref.load %arg1[%c138] : memref<241xf32, #tpu.memory_space<smem>>
    %733 = vector.broadcast %732 : f32 to vector<2x256xf32>
    %734 = arith.mulf %733, %689 : vector<2x256xf32>
    %735 = arith.addf %719, %734 : vector<2x256xf32>
    %c139 = arith.constant 139 : index
    %736 = memref.load %arg1[%c139] : memref<241xf32, #tpu.memory_space<smem>>
    %737 = vector.broadcast %736 : f32 to vector<2x256xf32>
    %738 = arith.mulf %737, %689 : vector<2x256xf32>
    %739 = arith.addf %723, %738 : vector<2x256xf32>
    %c140 = arith.constant 140 : index
    %740 = memref.load %arg1[%c140] : memref<241xf32, #tpu.memory_space<smem>>
    %741 = vector.broadcast %740 : f32 to vector<2x256xf32>
    %742 = arith.mulf %741, %691 : vector<2x256xf32>
    %743 = arith.addf %727, %742 : vector<2x256xf32>
    %c141 = arith.constant 141 : index
    %744 = memref.load %arg1[%c141] : memref<241xf32, #tpu.memory_space<smem>>
    %745 = vector.broadcast %744 : f32 to vector<2x256xf32>
    %746 = arith.mulf %745, %691 : vector<2x256xf32>
    %747 = arith.addf %731, %746 : vector<2x256xf32>
    %c142 = arith.constant 142 : index
    %748 = memref.load %arg1[%c142] : memref<241xf32, #tpu.memory_space<smem>>
    %749 = vector.broadcast %748 : f32 to vector<2x256xf32>
    %750 = arith.mulf %749, %691 : vector<2x256xf32>
    %751 = arith.addf %735, %750 : vector<2x256xf32>
    %c143 = arith.constant 143 : index
    %752 = memref.load %arg1[%c143] : memref<241xf32, #tpu.memory_space<smem>>
    %753 = vector.broadcast %752 : f32 to vector<2x256xf32>
    %754 = arith.mulf %753, %691 : vector<2x256xf32>
    %755 = arith.addf %739, %754 : vector<2x256xf32>
    %c6_101 = arith.constant 6 : index
    %c0_102 = arith.constant 0 : index
    %c0_103 = arith.constant 0 : index
    %756 = vector.load %arg3[%c6_101, %c0_102, %c0_103] : memref<9x2x256xf32, #tpu.memory_space<vmem>>, vector<1x2x256xf32>
    %757 = vector.shape_cast %756 : vector<1x2x256xf32> to vector<2x256xf32>
    %c241_i32_104 = arith.constant 241 : i32
    %758 = tpu.dynamic_rotate %221 by %c241_i32_104 dim 1 : vector<2x256xf32>, i32 -> vector<2x256xf32>
    %759 = arith.mulf %758, %757 : vector<2x256xf32>
    %c241_i32_105 = arith.constant 241 : i32
    %760 = tpu.dynamic_rotate %249 by %c241_i32_105 dim 1 : vector<2x256xf32>, i32 -> vector<2x256xf32>
    %761 = arith.mulf %760, %757 : vector<2x256xf32>
    %c241_i32_106 = arith.constant 241 : i32
    %762 = tpu.dynamic_rotate %277 by %c241_i32_106 dim 1 : vector<2x256xf32>, i32 -> vector<2x256xf32>
    %763 = arith.mulf %762, %757 : vector<2x256xf32>
    %c241_i32_107 = arith.constant 241 : i32
    %764 = tpu.dynamic_rotate %305 by %c241_i32_107 dim 1 : vector<2x256xf32>, i32 -> vector<2x256xf32>
    %765 = arith.mulf %764, %757 : vector<2x256xf32>
    %c144 = arith.constant 144 : index
    %766 = memref.load %arg1[%c144] : memref<241xf32, #tpu.memory_space<smem>>
    %767 = vector.broadcast %766 : f32 to vector<2x256xf32>
    %768 = arith.mulf %767, %759 : vector<2x256xf32>
    %769 = arith.addf %743, %768 : vector<2x256xf32>
    %c145 = arith.constant 145 : index
    %770 = memref.load %arg1[%c145] : memref<241xf32, #tpu.memory_space<smem>>
    %771 = vector.broadcast %770 : f32 to vector<2x256xf32>
    %772 = arith.mulf %771, %759 : vector<2x256xf32>
    %773 = arith.addf %747, %772 : vector<2x256xf32>
    %c146 = arith.constant 146 : index
    %774 = memref.load %arg1[%c146] : memref<241xf32, #tpu.memory_space<smem>>
    %775 = vector.broadcast %774 : f32 to vector<2x256xf32>
    %776 = arith.mulf %775, %759 : vector<2x256xf32>
    %777 = arith.addf %751, %776 : vector<2x256xf32>
    %c147 = arith.constant 147 : index
    %778 = memref.load %arg1[%c147] : memref<241xf32, #tpu.memory_space<smem>>
    %779 = vector.broadcast %778 : f32 to vector<2x256xf32>
    %780 = arith.mulf %779, %759 : vector<2x256xf32>
    %781 = arith.addf %755, %780 : vector<2x256xf32>
    %c148 = arith.constant 148 : index
    %782 = memref.load %arg1[%c148] : memref<241xf32, #tpu.memory_space<smem>>
    %783 = vector.broadcast %782 : f32 to vector<2x256xf32>
    %784 = arith.mulf %783, %761 : vector<2x256xf32>
    %785 = arith.addf %769, %784 : vector<2x256xf32>
    %c149 = arith.constant 149 : index
    %786 = memref.load %arg1[%c149] : memref<241xf32, #tpu.memory_space<smem>>
    %787 = vector.broadcast %786 : f32 to vector<2x256xf32>
    %788 = arith.mulf %787, %761 : vector<2x256xf32>
    %789 = arith.addf %773, %788 : vector<2x256xf32>
    %c150 = arith.constant 150 : index
    %790 = memref.load %arg1[%c150] : memref<241xf32, #tpu.memory_space<smem>>
    %791 = vector.broadcast %790 : f32 to vector<2x256xf32>
    %792 = arith.mulf %791, %761 : vector<2x256xf32>
    %793 = arith.addf %777, %792 : vector<2x256xf32>
    %c151 = arith.constant 151 : index
    %794 = memref.load %arg1[%c151] : memref<241xf32, #tpu.memory_space<smem>>
    %795 = vector.broadcast %794 : f32 to vector<2x256xf32>
    %796 = arith.mulf %795, %761 : vector<2x256xf32>
    %797 = arith.addf %781, %796 : vector<2x256xf32>
    %c152 = arith.constant 152 : index
    %798 = memref.load %arg1[%c152] : memref<241xf32, #tpu.memory_space<smem>>
    %799 = vector.broadcast %798 : f32 to vector<2x256xf32>
    %800 = arith.mulf %799, %763 : vector<2x256xf32>
    %801 = arith.addf %785, %800 : vector<2x256xf32>
    %c153 = arith.constant 153 : index
    %802 = memref.load %arg1[%c153] : memref<241xf32, #tpu.memory_space<smem>>
    %803 = vector.broadcast %802 : f32 to vector<2x256xf32>
    %804 = arith.mulf %803, %763 : vector<2x256xf32>
    %805 = arith.addf %789, %804 : vector<2x256xf32>
    %c154 = arith.constant 154 : index
    %806 = memref.load %arg1[%c154] : memref<241xf32, #tpu.memory_space<smem>>
    %807 = vector.broadcast %806 : f32 to vector<2x256xf32>
    %808 = arith.mulf %807, %763 : vector<2x256xf32>
    %809 = arith.addf %793, %808 : vector<2x256xf32>
    %c155 = arith.constant 155 : index
    %810 = memref.load %arg1[%c155] : memref<241xf32, #tpu.memory_space<smem>>
    %811 = vector.broadcast %810 : f32 to vector<2x256xf32>
    %812 = arith.mulf %811, %763 : vector<2x256xf32>
    %813 = arith.addf %797, %812 : vector<2x256xf32>
    %c156 = arith.constant 156 : index
    %814 = memref.load %arg1[%c156] : memref<241xf32, #tpu.memory_space<smem>>
    %815 = vector.broadcast %814 : f32 to vector<2x256xf32>
    %816 = arith.mulf %815, %765 : vector<2x256xf32>
    %817 = arith.addf %801, %816 : vector<2x256xf32>
    %c157 = arith.constant 157 : index
    %818 = memref.load %arg1[%c157] : memref<241xf32, #tpu.memory_space<smem>>
    %819 = vector.broadcast %818 : f32 to vector<2x256xf32>
    %820 = arith.mulf %819, %765 : vector<2x256xf32>
    %821 = arith.addf %805, %820 : vector<2x256xf32>
    %c158 = arith.constant 158 : index
    %822 = memref.load %arg1[%c158] : memref<241xf32, #tpu.memory_space<smem>>
    %823 = vector.broadcast %822 : f32 to vector<2x256xf32>
    %824 = arith.mulf %823, %765 : vector<2x256xf32>
    %825 = arith.addf %809, %824 : vector<2x256xf32>
    %c159 = arith.constant 159 : index
    %826 = memref.load %arg1[%c159] : memref<241xf32, #tpu.memory_space<smem>>
    %827 = vector.broadcast %826 : f32 to vector<2x256xf32>
    %828 = arith.mulf %827, %765 : vector<2x256xf32>
    %829 = arith.addf %813, %828 : vector<2x256xf32>
    %c7_108 = arith.constant 7 : index
    %c0_109 = arith.constant 0 : index
    %c0_110 = arith.constant 0 : index
    %830 = vector.load %arg3[%c7_108, %c0_109, %c0_110] : memref<9x2x256xf32, #tpu.memory_space<vmem>>, vector<1x2x256xf32>
    %831 = vector.shape_cast %830 : vector<1x2x256xf32> to vector<2x256xf32>
    %c240_i32_111 = arith.constant 240 : i32
    %832 = tpu.dynamic_rotate %221 by %c240_i32_111 dim 1 : vector<2x256xf32>, i32 -> vector<2x256xf32>
    %833 = arith.mulf %832, %831 : vector<2x256xf32>
    %c240_i32_112 = arith.constant 240 : i32
    %834 = tpu.dynamic_rotate %249 by %c240_i32_112 dim 1 : vector<2x256xf32>, i32 -> vector<2x256xf32>
    %835 = arith.mulf %834, %831 : vector<2x256xf32>
    %c240_i32_113 = arith.constant 240 : i32
    %836 = tpu.dynamic_rotate %277 by %c240_i32_113 dim 1 : vector<2x256xf32>, i32 -> vector<2x256xf32>
    %837 = arith.mulf %836, %831 : vector<2x256xf32>
    %c240_i32_114 = arith.constant 240 : i32
    %838 = tpu.dynamic_rotate %305 by %c240_i32_114 dim 1 : vector<2x256xf32>, i32 -> vector<2x256xf32>
    %839 = arith.mulf %838, %831 : vector<2x256xf32>
    %c160 = arith.constant 160 : index
    %840 = memref.load %arg1[%c160] : memref<241xf32, #tpu.memory_space<smem>>
    %841 = vector.broadcast %840 : f32 to vector<2x256xf32>
    %842 = arith.mulf %841, %833 : vector<2x256xf32>
    %843 = arith.addf %817, %842 : vector<2x256xf32>
    %c161 = arith.constant 161 : index
    %844 = memref.load %arg1[%c161] : memref<241xf32, #tpu.memory_space<smem>>
    %845 = vector.broadcast %844 : f32 to vector<2x256xf32>
    %846 = arith.mulf %845, %833 : vector<2x256xf32>
    %847 = arith.addf %821, %846 : vector<2x256xf32>
    %c162 = arith.constant 162 : index
    %848 = memref.load %arg1[%c162] : memref<241xf32, #tpu.memory_space<smem>>
    %849 = vector.broadcast %848 : f32 to vector<2x256xf32>
    %850 = arith.mulf %849, %833 : vector<2x256xf32>
    %851 = arith.addf %825, %850 : vector<2x256xf32>
    %c163 = arith.constant 163 : index
    %852 = memref.load %arg1[%c163] : memref<241xf32, #tpu.memory_space<smem>>
    %853 = vector.broadcast %852 : f32 to vector<2x256xf32>
    %854 = arith.mulf %853, %833 : vector<2x256xf32>
    %855 = arith.addf %829, %854 : vector<2x256xf32>
    %c164 = arith.constant 164 : index
    %856 = memref.load %arg1[%c164] : memref<241xf32, #tpu.memory_space<smem>>
    %857 = vector.broadcast %856 : f32 to vector<2x256xf32>
    %858 = arith.mulf %857, %835 : vector<2x256xf32>
    %859 = arith.addf %843, %858 : vector<2x256xf32>
    %c165 = arith.constant 165 : index
    %860 = memref.load %arg1[%c165] : memref<241xf32, #tpu.memory_space<smem>>
    %861 = vector.broadcast %860 : f32 to vector<2x256xf32>
    %862 = arith.mulf %861, %835 : vector<2x256xf32>
    %863 = arith.addf %847, %862 : vector<2x256xf32>
    %c166 = arith.constant 166 : index
    %864 = memref.load %arg1[%c166] : memref<241xf32, #tpu.memory_space<smem>>
    %865 = vector.broadcast %864 : f32 to vector<2x256xf32>
    %866 = arith.mulf %865, %835 : vector<2x256xf32>
    %867 = arith.addf %851, %866 : vector<2x256xf32>
    %c167 = arith.constant 167 : index
    %868 = memref.load %arg1[%c167] : memref<241xf32, #tpu.memory_space<smem>>
    %869 = vector.broadcast %868 : f32 to vector<2x256xf32>
    %870 = arith.mulf %869, %835 : vector<2x256xf32>
    %871 = arith.addf %855, %870 : vector<2x256xf32>
    %c168 = arith.constant 168 : index
    %872 = memref.load %arg1[%c168] : memref<241xf32, #tpu.memory_space<smem>>
    %873 = vector.broadcast %872 : f32 to vector<2x256xf32>
    %874 = arith.mulf %873, %837 : vector<2x256xf32>
    %875 = arith.addf %859, %874 : vector<2x256xf32>
    %c169 = arith.constant 169 : index
    %876 = memref.load %arg1[%c169] : memref<241xf32, #tpu.memory_space<smem>>
    %877 = vector.broadcast %876 : f32 to vector<2x256xf32>
    %878 = arith.mulf %877, %837 : vector<2x256xf32>
    %879 = arith.addf %863, %878 : vector<2x256xf32>
    %c170 = arith.constant 170 : index
    %880 = memref.load %arg1[%c170] : memref<241xf32, #tpu.memory_space<smem>>
    %881 = vector.broadcast %880 : f32 to vector<2x256xf32>
    %882 = arith.mulf %881, %837 : vector<2x256xf32>
    %883 = arith.addf %867, %882 : vector<2x256xf32>
    %c171 = arith.constant 171 : index
    %884 = memref.load %arg1[%c171] : memref<241xf32, #tpu.memory_space<smem>>
    %885 = vector.broadcast %884 : f32 to vector<2x256xf32>
    %886 = arith.mulf %885, %837 : vector<2x256xf32>
    %887 = arith.addf %871, %886 : vector<2x256xf32>
    %c172 = arith.constant 172 : index
    %888 = memref.load %arg1[%c172] : memref<241xf32, #tpu.memory_space<smem>>
    %889 = vector.broadcast %888 : f32 to vector<2x256xf32>
    %890 = arith.mulf %889, %839 : vector<2x256xf32>
    %891 = arith.addf %875, %890 : vector<2x256xf32>
    %c173 = arith.constant 173 : index
    %892 = memref.load %arg1[%c173] : memref<241xf32, #tpu.memory_space<smem>>
    %893 = vector.broadcast %892 : f32 to vector<2x256xf32>
    %894 = arith.mulf %893, %839 : vector<2x256xf32>
    %895 = arith.addf %879, %894 : vector<2x256xf32>
    %c174 = arith.constant 174 : index
    %896 = memref.load %arg1[%c174] : memref<241xf32, #tpu.memory_space<smem>>
    %897 = vector.broadcast %896 : f32 to vector<2x256xf32>
    %898 = arith.mulf %897, %839 : vector<2x256xf32>
    %899 = arith.addf %883, %898 : vector<2x256xf32>
    %c175 = arith.constant 175 : index
    %900 = memref.load %arg1[%c175] : memref<241xf32, #tpu.memory_space<smem>>
    %901 = vector.broadcast %900 : f32 to vector<2x256xf32>
    %902 = arith.mulf %901, %839 : vector<2x256xf32>
    %903 = arith.addf %887, %902 : vector<2x256xf32>
    %c8_115 = arith.constant 8 : index
    %c0_116 = arith.constant 0 : index
    %c0_117 = arith.constant 0 : index
    %904 = vector.load %arg3[%c8_115, %c0_116, %c0_117] : memref<9x2x256xf32, #tpu.memory_space<vmem>>, vector<1x2x256xf32>
    %905 = vector.shape_cast %904 : vector<1x2x256xf32> to vector<2x256xf32>
    %c239_i32_118 = arith.constant 239 : i32
    %906 = tpu.dynamic_rotate %221 by %c239_i32_118 dim 1 : vector<2x256xf32>, i32 -> vector<2x256xf32>
    %907 = arith.mulf %906, %905 : vector<2x256xf32>
    %c239_i32_119 = arith.constant 239 : i32
    %908 = tpu.dynamic_rotate %249 by %c239_i32_119 dim 1 : vector<2x256xf32>, i32 -> vector<2x256xf32>
    %909 = arith.mulf %908, %905 : vector<2x256xf32>
    %c239_i32_120 = arith.constant 239 : i32
    %910 = tpu.dynamic_rotate %277 by %c239_i32_120 dim 1 : vector<2x256xf32>, i32 -> vector<2x256xf32>
    %911 = arith.mulf %910, %905 : vector<2x256xf32>
    %c239_i32_121 = arith.constant 239 : i32
    %912 = tpu.dynamic_rotate %305 by %c239_i32_121 dim 1 : vector<2x256xf32>, i32 -> vector<2x256xf32>
    %913 = arith.mulf %912, %905 : vector<2x256xf32>
    %c176 = arith.constant 176 : index
    %914 = memref.load %arg1[%c176] : memref<241xf32, #tpu.memory_space<smem>>
    %915 = vector.broadcast %914 : f32 to vector<2x256xf32>
    %916 = arith.mulf %915, %907 : vector<2x256xf32>
    %917 = arith.addf %891, %916 : vector<2x256xf32>
    %c177 = arith.constant 177 : index
    %918 = memref.load %arg1[%c177] : memref<241xf32, #tpu.memory_space<smem>>
    %919 = vector.broadcast %918 : f32 to vector<2x256xf32>
    %920 = arith.mulf %919, %907 : vector<2x256xf32>
    %921 = arith.addf %895, %920 : vector<2x256xf32>
    %c178 = arith.constant 178 : index
    %922 = memref.load %arg1[%c178] : memref<241xf32, #tpu.memory_space<smem>>
    %923 = vector.broadcast %922 : f32 to vector<2x256xf32>
    %924 = arith.mulf %923, %907 : vector<2x256xf32>
    %925 = arith.addf %899, %924 : vector<2x256xf32>
    %c179 = arith.constant 179 : index
    %926 = memref.load %arg1[%c179] : memref<241xf32, #tpu.memory_space<smem>>
    %927 = vector.broadcast %926 : f32 to vector<2x256xf32>
    %928 = arith.mulf %927, %907 : vector<2x256xf32>
    %929 = arith.addf %903, %928 : vector<2x256xf32>
    %c180 = arith.constant 180 : index
    %930 = memref.load %arg1[%c180] : memref<241xf32, #tpu.memory_space<smem>>
    %931 = vector.broadcast %930 : f32 to vector<2x256xf32>
    %932 = arith.mulf %931, %909 : vector<2x256xf32>
    %933 = arith.addf %917, %932 : vector<2x256xf32>
    %c181 = arith.constant 181 : index
    %934 = memref.load %arg1[%c181] : memref<241xf32, #tpu.memory_space<smem>>
    %935 = vector.broadcast %934 : f32 to vector<2x256xf32>
    %936 = arith.mulf %935, %909 : vector<2x256xf32>
    %937 = arith.addf %921, %936 : vector<2x256xf32>
    %c182 = arith.constant 182 : index
    %938 = memref.load %arg1[%c182] : memref<241xf32, #tpu.memory_space<smem>>
    %939 = vector.broadcast %938 : f32 to vector<2x256xf32>
    %940 = arith.mulf %939, %909 : vector<2x256xf32>
    %941 = arith.addf %925, %940 : vector<2x256xf32>
    %c183 = arith.constant 183 : index
    %942 = memref.load %arg1[%c183] : memref<241xf32, #tpu.memory_space<smem>>
    %943 = vector.broadcast %942 : f32 to vector<2x256xf32>
    %944 = arith.mulf %943, %909 : vector<2x256xf32>
    %945 = arith.addf %929, %944 : vector<2x256xf32>
    %c184 = arith.constant 184 : index
    %946 = memref.load %arg1[%c184] : memref<241xf32, #tpu.memory_space<smem>>
    %947 = vector.broadcast %946 : f32 to vector<2x256xf32>
    %948 = arith.mulf %947, %911 : vector<2x256xf32>
    %949 = arith.addf %933, %948 : vector<2x256xf32>
    %c185 = arith.constant 185 : index
    %950 = memref.load %arg1[%c185] : memref<241xf32, #tpu.memory_space<smem>>
    %951 = vector.broadcast %950 : f32 to vector<2x256xf32>
    %952 = arith.mulf %951, %911 : vector<2x256xf32>
    %953 = arith.addf %937, %952 : vector<2x256xf32>
    %c186 = arith.constant 186 : index
    %954 = memref.load %arg1[%c186] : memref<241xf32, #tpu.memory_space<smem>>
    %955 = vector.broadcast %954 : f32 to vector<2x256xf32>
    %956 = arith.mulf %955, %911 : vector<2x256xf32>
    %957 = arith.addf %941, %956 : vector<2x256xf32>
    %c187 = arith.constant 187 : index
    %958 = memref.load %arg1[%c187] : memref<241xf32, #tpu.memory_space<smem>>
    %959 = vector.broadcast %958 : f32 to vector<2x256xf32>
    %960 = arith.mulf %959, %911 : vector<2x256xf32>
    %961 = arith.addf %945, %960 : vector<2x256xf32>
    %c188 = arith.constant 188 : index
    %962 = memref.load %arg1[%c188] : memref<241xf32, #tpu.memory_space<smem>>
    %963 = vector.broadcast %962 : f32 to vector<2x256xf32>
    %964 = arith.mulf %963, %913 : vector<2x256xf32>
    %965 = arith.addf %949, %964 : vector<2x256xf32>
    %c189 = arith.constant 189 : index
    %966 = memref.load %arg1[%c189] : memref<241xf32, #tpu.memory_space<smem>>
    %967 = vector.broadcast %966 : f32 to vector<2x256xf32>
    %968 = arith.mulf %967, %913 : vector<2x256xf32>
    %969 = arith.addf %953, %968 : vector<2x256xf32>
    %c190 = arith.constant 190 : index
    %970 = memref.load %arg1[%c190] : memref<241xf32, #tpu.memory_space<smem>>
    %971 = vector.broadcast %970 : f32 to vector<2x256xf32>
    %972 = arith.mulf %971, %913 : vector<2x256xf32>
    %973 = arith.addf %957, %972 : vector<2x256xf32>
    %c191 = arith.constant 191 : index
    %974 = memref.load %arg1[%c191] : memref<241xf32, #tpu.memory_space<smem>>
    %975 = vector.broadcast %974 : f32 to vector<2x256xf32>
    %976 = arith.mulf %975, %913 : vector<2x256xf32>
    %977 = arith.addf %961, %976 : vector<2x256xf32>
    %cst_122 = arith.constant dense<0.000000e+00> : vector<2xf32>
    %978 = vector.multi_reduction <add>, %965, %cst_122 [1] : vector<2x256xf32> to vector<2xf32>
    %979 = vector.shape_cast %978 : vector<2xf32> to vector<2x1xf32>
    %cst_123 = arith.constant dense<0.000000e+00> : vector<1xf32>
    %980 = vector.multi_reduction <add>, %979, %cst_123 [0] : vector<2x1xf32> to vector<1xf32>
    %981 = vector.shape_cast %980 : vector<1xf32> to vector<1x1xf32>
    %cst_124 = arith.constant 0.001953125 : f32
    %982 = vector.broadcast %cst_124 : f32 to vector<1x1xf32>
    %983 = arith.mulf %981, %982 : vector<1x1xf32>
    %984 = vector.broadcast %983 : vector<1x1xf32> to vector<2x256xf32>
    %985 = arith.subf %965, %984 : vector<2x256xf32>
    %986 = arith.mulf %985, %985 : vector<2x256xf32>
    %cst_125 = arith.constant dense<0.000000e+00> : vector<2xf32>
    %987 = vector.multi_reduction <add>, %986, %cst_125 [1] : vector<2x256xf32> to vector<2xf32>
    %988 = vector.shape_cast %987 : vector<2xf32> to vector<2x1xf32>
    %cst_126 = arith.constant dense<0.000000e+00> : vector<1xf32>
    %989 = vector.multi_reduction <add>, %988, %cst_126 [0] : vector<2x1xf32> to vector<1xf32>
    %990 = vector.shape_cast %989 : vector<1xf32> to vector<1x1xf32>
    %cst_127 = arith.constant 0.001953125 : f32
    %991 = vector.broadcast %cst_127 : f32 to vector<1x1xf32>
    %992 = arith.mulf %990, %991 : vector<1x1xf32>
    %cst_128 = arith.constant 9.99999974E-6 : f32
    %993 = vector.broadcast %cst_128 : f32 to vector<1x1xf32>
    %994 = arith.addf %992, %993 : vector<1x1xf32>
    %995 = math.rsqrt %994 : vector<1x1xf32>
    %c196 = arith.constant 196 : index
    %996 = memref.load %arg1[%c196] : memref<241xf32, #tpu.memory_space<smem>>
    %997 = vector.broadcast %996 : f32 to vector<1x1xf32>
    %998 = arith.mulf %995, %997 : vector<1x1xf32>
    %999 = vector.broadcast %998 : vector<1x1xf32> to vector<2x256xf32>
    %1000 = arith.mulf %985, %999 : vector<2x256xf32>
    %c200 = arith.constant 200 : index
    %1001 = memref.load %arg1[%c200] : memref<241xf32, #tpu.memory_space<smem>>
    %1002 = vector.broadcast %1001 : f32 to vector<2x256xf32>
    %1003 = arith.addf %1000, %1002 : vector<2x256xf32>
    %cst_129 = arith.constant 0.000000e+00 : f32
    %1004 = vector.broadcast %cst_129 : f32 to vector<2x256xf32>
    %1005 = arith.maximumf %1003, %1004 : vector<2x256xf32>
    %cst_130 = arith.constant dense<0.000000e+00> : vector<2xf32>
    %1006 = vector.multi_reduction <add>, %969, %cst_130 [1] : vector<2x256xf32> to vector<2xf32>
    %1007 = vector.shape_cast %1006 : vector<2xf32> to vector<2x1xf32>
    %cst_131 = arith.constant dense<0.000000e+00> : vector<1xf32>
    %1008 = vector.multi_reduction <add>, %1007, %cst_131 [0] : vector<2x1xf32> to vector<1xf32>
    %1009 = vector.shape_cast %1008 : vector<1xf32> to vector<1x1xf32>
    %cst_132 = arith.constant 0.001953125 : f32
    %1010 = vector.broadcast %cst_132 : f32 to vector<1x1xf32>
    %1011 = arith.mulf %1009, %1010 : vector<1x1xf32>
    %1012 = vector.broadcast %1011 : vector<1x1xf32> to vector<2x256xf32>
    %1013 = arith.subf %969, %1012 : vector<2x256xf32>
    %1014 = arith.mulf %1013, %1013 : vector<2x256xf32>
    %cst_133 = arith.constant dense<0.000000e+00> : vector<2xf32>
    %1015 = vector.multi_reduction <add>, %1014, %cst_133 [1] : vector<2x256xf32> to vector<2xf32>
    %1016 = vector.shape_cast %1015 : vector<2xf32> to vector<2x1xf32>
    %cst_134 = arith.constant dense<0.000000e+00> : vector<1xf32>
    %1017 = vector.multi_reduction <add>, %1016, %cst_134 [0] : vector<2x1xf32> to vector<1xf32>
    %1018 = vector.shape_cast %1017 : vector<1xf32> to vector<1x1xf32>
    %cst_135 = arith.constant 0.001953125 : f32
    %1019 = vector.broadcast %cst_135 : f32 to vector<1x1xf32>
    %1020 = arith.mulf %1018, %1019 : vector<1x1xf32>
    %cst_136 = arith.constant 9.99999974E-6 : f32
    %1021 = vector.broadcast %cst_136 : f32 to vector<1x1xf32>
    %1022 = arith.addf %1020, %1021 : vector<1x1xf32>
    %1023 = math.rsqrt %1022 : vector<1x1xf32>
    %c197 = arith.constant 197 : index
    %1024 = memref.load %arg1[%c197] : memref<241xf32, #tpu.memory_space<smem>>
    %1025 = vector.broadcast %1024 : f32 to vector<1x1xf32>
    %1026 = arith.mulf %1023, %1025 : vector<1x1xf32>
    %1027 = vector.broadcast %1026 : vector<1x1xf32> to vector<2x256xf32>
    %1028 = arith.mulf %1013, %1027 : vector<2x256xf32>
    %c201 = arith.constant 201 : index
    %1029 = memref.load %arg1[%c201] : memref<241xf32, #tpu.memory_space<smem>>
    %1030 = vector.broadcast %1029 : f32 to vector<2x256xf32>
    %1031 = arith.addf %1028, %1030 : vector<2x256xf32>
    %cst_137 = arith.constant 0.000000e+00 : f32
    %1032 = vector.broadcast %cst_137 : f32 to vector<2x256xf32>
    %1033 = arith.maximumf %1031, %1032 : vector<2x256xf32>
    %cst_138 = arith.constant dense<0.000000e+00> : vector<2xf32>
    %1034 = vector.multi_reduction <add>, %973, %cst_138 [1] : vector<2x256xf32> to vector<2xf32>
    %1035 = vector.shape_cast %1034 : vector<2xf32> to vector<2x1xf32>
    %cst_139 = arith.constant dense<0.000000e+00> : vector<1xf32>
    %1036 = vector.multi_reduction <add>, %1035, %cst_139 [0] : vector<2x1xf32> to vector<1xf32>
    %1037 = vector.shape_cast %1036 : vector<1xf32> to vector<1x1xf32>
    %cst_140 = arith.constant 0.001953125 : f32
    %1038 = vector.broadcast %cst_140 : f32 to vector<1x1xf32>
    %1039 = arith.mulf %1037, %1038 : vector<1x1xf32>
    %1040 = vector.broadcast %1039 : vector<1x1xf32> to vector<2x256xf32>
    %1041 = arith.subf %973, %1040 : vector<2x256xf32>
    %1042 = arith.mulf %1041, %1041 : vector<2x256xf32>
    %cst_141 = arith.constant dense<0.000000e+00> : vector<2xf32>
    %1043 = vector.multi_reduction <add>, %1042, %cst_141 [1] : vector<2x256xf32> to vector<2xf32>
    %1044 = vector.shape_cast %1043 : vector<2xf32> to vector<2x1xf32>
    %cst_142 = arith.constant dense<0.000000e+00> : vector<1xf32>
    %1045 = vector.multi_reduction <add>, %1044, %cst_142 [0] : vector<2x1xf32> to vector<1xf32>
    %1046 = vector.shape_cast %1045 : vector<1xf32> to vector<1x1xf32>
    %cst_143 = arith.constant 0.001953125 : f32
    %1047 = vector.broadcast %cst_143 : f32 to vector<1x1xf32>
    %1048 = arith.mulf %1046, %1047 : vector<1x1xf32>
    %cst_144 = arith.constant 9.99999974E-6 : f32
    %1049 = vector.broadcast %cst_144 : f32 to vector<1x1xf32>
    %1050 = arith.addf %1048, %1049 : vector<1x1xf32>
    %1051 = math.rsqrt %1050 : vector<1x1xf32>
    %c198 = arith.constant 198 : index
    %1052 = memref.load %arg1[%c198] : memref<241xf32, #tpu.memory_space<smem>>
    %1053 = vector.broadcast %1052 : f32 to vector<1x1xf32>
    %1054 = arith.mulf %1051, %1053 : vector<1x1xf32>
    %1055 = vector.broadcast %1054 : vector<1x1xf32> to vector<2x256xf32>
    %1056 = arith.mulf %1041, %1055 : vector<2x256xf32>
    %c202 = arith.constant 202 : index
    %1057 = memref.load %arg1[%c202] : memref<241xf32, #tpu.memory_space<smem>>
    %1058 = vector.broadcast %1057 : f32 to vector<2x256xf32>
    %1059 = arith.addf %1056, %1058 : vector<2x256xf32>
    %cst_145 = arith.constant 0.000000e+00 : f32
    %1060 = vector.broadcast %cst_145 : f32 to vector<2x256xf32>
    %1061 = arith.maximumf %1059, %1060 : vector<2x256xf32>
    %cst_146 = arith.constant dense<0.000000e+00> : vector<2xf32>
    %1062 = vector.multi_reduction <add>, %977, %cst_146 [1] : vector<2x256xf32> to vector<2xf32>
    %1063 = vector.shape_cast %1062 : vector<2xf32> to vector<2x1xf32>
    %cst_147 = arith.constant dense<0.000000e+00> : vector<1xf32>
    %1064 = vector.multi_reduction <add>, %1063, %cst_147 [0] : vector<2x1xf32> to vector<1xf32>
    %1065 = vector.shape_cast %1064 : vector<1xf32> to vector<1x1xf32>
    %cst_148 = arith.constant 0.001953125 : f32
    %1066 = vector.broadcast %cst_148 : f32 to vector<1x1xf32>
    %1067 = arith.mulf %1065, %1066 : vector<1x1xf32>
    %1068 = vector.broadcast %1067 : vector<1x1xf32> to vector<2x256xf32>
    %1069 = arith.subf %977, %1068 : vector<2x256xf32>
    %1070 = arith.mulf %1069, %1069 : vector<2x256xf32>
    %cst_149 = arith.constant dense<0.000000e+00> : vector<2xf32>
    %1071 = vector.multi_reduction <add>, %1070, %cst_149 [1] : vector<2x256xf32> to vector<2xf32>
    %1072 = vector.shape_cast %1071 : vector<2xf32> to vector<2x1xf32>
    %cst_150 = arith.constant dense<0.000000e+00> : vector<1xf32>
    %1073 = vector.multi_reduction <add>, %1072, %cst_150 [0] : vector<2x1xf32> to vector<1xf32>
    %1074 = vector.shape_cast %1073 : vector<1xf32> to vector<1x1xf32>
    %cst_151 = arith.constant 0.001953125 : f32
    %1075 = vector.broadcast %cst_151 : f32 to vector<1x1xf32>
    %1076 = arith.mulf %1074, %1075 : vector<1x1xf32>
    %cst_152 = arith.constant 9.99999974E-6 : f32
    %1077 = vector.broadcast %cst_152 : f32 to vector<1x1xf32>
    %1078 = arith.addf %1076, %1077 : vector<1x1xf32>
    %1079 = math.rsqrt %1078 : vector<1x1xf32>
    %c199 = arith.constant 199 : index
    %1080 = memref.load %arg1[%c199] : memref<241xf32, #tpu.memory_space<smem>>
    %1081 = vector.broadcast %1080 : f32 to vector<1x1xf32>
    %1082 = arith.mulf %1079, %1081 : vector<1x1xf32>
    %1083 = vector.broadcast %1082 : vector<1x1xf32> to vector<2x256xf32>
    %1084 = arith.mulf %1069, %1083 : vector<2x256xf32>
    %c203 = arith.constant 203 : index
    %1085 = memref.load %arg1[%c203] : memref<241xf32, #tpu.memory_space<smem>>
    %1086 = vector.broadcast %1085 : f32 to vector<2x256xf32>
    %1087 = arith.addf %1084, %1086 : vector<2x256xf32>
    %cst_153 = arith.constant 0.000000e+00 : f32
    %1088 = vector.broadcast %cst_153 : f32 to vector<2x256xf32>
    %1089 = arith.maximumf %1087, %1088 : vector<2x256xf32>
    %cst_154 = arith.constant 0.000000e+00 : f32
    %1090 = vector.broadcast %cst_154 : f32 to vector<2x256xf32>
    %c240 = arith.constant 240 : index
    %1091 = memref.load %arg1[%c240] : memref<241xf32, #tpu.memory_space<smem>>
    %1092 = vector.broadcast %1091 : f32 to vector<2x256xf32>
    %1093 = arith.addf %1090, %1092 : vector<2x256xf32>
    %c0_155 = arith.constant 0 : index
    %c0_156 = arith.constant 0 : index
    %c0_157 = arith.constant 0 : index
    %1094 = vector.load %arg3[%c0_155, %c0_156, %c0_157] : memref<9x2x256xf32, #tpu.memory_space<vmem>>, vector<1x2x256xf32>
    %1095 = vector.shape_cast %1094 : vector<1x2x256xf32> to vector<2x256xf32>
    %c17_i32_158 = arith.constant 17 : i32
    %1096 = tpu.dynamic_rotate %1005 by %c17_i32_158 dim 1 : vector<2x256xf32>, i32 -> vector<2x256xf32>
    %1097 = arith.mulf %1096, %1095 : vector<2x256xf32>
    %c17_i32_159 = arith.constant 17 : i32
    %1098 = tpu.dynamic_rotate %1033 by %c17_i32_159 dim 1 : vector<2x256xf32>, i32 -> vector<2x256xf32>
    %1099 = arith.mulf %1098, %1095 : vector<2x256xf32>
    %c17_i32_160 = arith.constant 17 : i32
    %1100 = tpu.dynamic_rotate %1061 by %c17_i32_160 dim 1 : vector<2x256xf32>, i32 -> vector<2x256xf32>
    %1101 = arith.mulf %1100, %1095 : vector<2x256xf32>
    %c17_i32_161 = arith.constant 17 : i32
    %1102 = tpu.dynamic_rotate %1089 by %c17_i32_161 dim 1 : vector<2x256xf32>, i32 -> vector<2x256xf32>
    %1103 = arith.mulf %1102, %1095 : vector<2x256xf32>
    %c204 = arith.constant 204 : index
    %1104 = memref.load %arg1[%c204] : memref<241xf32, #tpu.memory_space<smem>>
    %1105 = vector.broadcast %1104 : f32 to vector<2x256xf32>
    %1106 = arith.mulf %1105, %1097 : vector<2x256xf32>
    %1107 = arith.addf %1093, %1106 : vector<2x256xf32>
    %c205 = arith.constant 205 : index
    %1108 = memref.load %arg1[%c205] : memref<241xf32, #tpu.memory_space<smem>>
    %1109 = vector.broadcast %1108 : f32 to vector<2x256xf32>
    %1110 = arith.mulf %1109, %1099 : vector<2x256xf32>
    %1111 = arith.addf %1107, %1110 : vector<2x256xf32>
    %c206 = arith.constant 206 : index
    %1112 = memref.load %arg1[%c206] : memref<241xf32, #tpu.memory_space<smem>>
    %1113 = vector.broadcast %1112 : f32 to vector<2x256xf32>
    %1114 = arith.mulf %1113, %1101 : vector<2x256xf32>
    %1115 = arith.addf %1111, %1114 : vector<2x256xf32>
    %c207 = arith.constant 207 : index
    %1116 = memref.load %arg1[%c207] : memref<241xf32, #tpu.memory_space<smem>>
    %1117 = vector.broadcast %1116 : f32 to vector<2x256xf32>
    %1118 = arith.mulf %1117, %1103 : vector<2x256xf32>
    %1119 = arith.addf %1115, %1118 : vector<2x256xf32>
    %c1_162 = arith.constant 1 : index
    %c0_163 = arith.constant 0 : index
    %c0_164 = arith.constant 0 : index
    %1120 = vector.load %arg3[%c1_162, %c0_163, %c0_164] : memref<9x2x256xf32, #tpu.memory_space<vmem>>, vector<1x2x256xf32>
    %1121 = vector.shape_cast %1120 : vector<1x2x256xf32> to vector<2x256xf32>
    %c16_i32_165 = arith.constant 16 : i32
    %1122 = tpu.dynamic_rotate %1005 by %c16_i32_165 dim 1 : vector<2x256xf32>, i32 -> vector<2x256xf32>
    %1123 = arith.mulf %1122, %1121 : vector<2x256xf32>
    %c16_i32_166 = arith.constant 16 : i32
    %1124 = tpu.dynamic_rotate %1033 by %c16_i32_166 dim 1 : vector<2x256xf32>, i32 -> vector<2x256xf32>
    %1125 = arith.mulf %1124, %1121 : vector<2x256xf32>
    %c16_i32_167 = arith.constant 16 : i32
    %1126 = tpu.dynamic_rotate %1061 by %c16_i32_167 dim 1 : vector<2x256xf32>, i32 -> vector<2x256xf32>
    %1127 = arith.mulf %1126, %1121 : vector<2x256xf32>
    %c16_i32_168 = arith.constant 16 : i32
    %1128 = tpu.dynamic_rotate %1089 by %c16_i32_168 dim 1 : vector<2x256xf32>, i32 -> vector<2x256xf32>
    %1129 = arith.mulf %1128, %1121 : vector<2x256xf32>
    %c208 = arith.constant 208 : index
    %1130 = memref.load %arg1[%c208] : memref<241xf32, #tpu.memory_space<smem>>
    %1131 = vector.broadcast %1130 : f32 to vector<2x256xf32>
    %1132 = arith.mulf %1131, %1123 : vector<2x256xf32>
    %1133 = arith.addf %1119, %1132 : vector<2x256xf32>
    %c209 = arith.constant 209 : index
    %1134 = memref.load %arg1[%c209] : memref<241xf32, #tpu.memory_space<smem>>
    %1135 = vector.broadcast %1134 : f32 to vector<2x256xf32>
    %1136 = arith.mulf %1135, %1125 : vector<2x256xf32>
    %1137 = arith.addf %1133, %1136 : vector<2x256xf32>
    %c210 = arith.constant 210 : index
    %1138 = memref.load %arg1[%c210] : memref<241xf32, #tpu.memory_space<smem>>
    %1139 = vector.broadcast %1138 : f32 to vector<2x256xf32>
    %1140 = arith.mulf %1139, %1127 : vector<2x256xf32>
    %1141 = arith.addf %1137, %1140 : vector<2x256xf32>
    %c211 = arith.constant 211 : index
    %1142 = memref.load %arg1[%c211] : memref<241xf32, #tpu.memory_space<smem>>
    %1143 = vector.broadcast %1142 : f32 to vector<2x256xf32>
    %1144 = arith.mulf %1143, %1129 : vector<2x256xf32>
    %1145 = arith.addf %1141, %1144 : vector<2x256xf32>
    %c2_169 = arith.constant 2 : index
    %c0_170 = arith.constant 0 : index
    %c0_171 = arith.constant 0 : index
    %1146 = vector.load %arg3[%c2_169, %c0_170, %c0_171] : memref<9x2x256xf32, #tpu.memory_space<vmem>>, vector<1x2x256xf32>
    %1147 = vector.shape_cast %1146 : vector<1x2x256xf32> to vector<2x256xf32>
    %c15_i32_172 = arith.constant 15 : i32
    %1148 = tpu.dynamic_rotate %1005 by %c15_i32_172 dim 1 : vector<2x256xf32>, i32 -> vector<2x256xf32>
    %1149 = arith.mulf %1148, %1147 : vector<2x256xf32>
    %c15_i32_173 = arith.constant 15 : i32
    %1150 = tpu.dynamic_rotate %1033 by %c15_i32_173 dim 1 : vector<2x256xf32>, i32 -> vector<2x256xf32>
    %1151 = arith.mulf %1150, %1147 : vector<2x256xf32>
    %c15_i32_174 = arith.constant 15 : i32
    %1152 = tpu.dynamic_rotate %1061 by %c15_i32_174 dim 1 : vector<2x256xf32>, i32 -> vector<2x256xf32>
    %1153 = arith.mulf %1152, %1147 : vector<2x256xf32>
    %c15_i32_175 = arith.constant 15 : i32
    %1154 = tpu.dynamic_rotate %1089 by %c15_i32_175 dim 1 : vector<2x256xf32>, i32 -> vector<2x256xf32>
    %1155 = arith.mulf %1154, %1147 : vector<2x256xf32>
    %c212 = arith.constant 212 : index
    %1156 = memref.load %arg1[%c212] : memref<241xf32, #tpu.memory_space<smem>>
    %1157 = vector.broadcast %1156 : f32 to vector<2x256xf32>
    %1158 = arith.mulf %1157, %1149 : vector<2x256xf32>
    %1159 = arith.addf %1145, %1158 : vector<2x256xf32>
    %c213 = arith.constant 213 : index
    %1160 = memref.load %arg1[%c213] : memref<241xf32, #tpu.memory_space<smem>>
    %1161 = vector.broadcast %1160 : f32 to vector<2x256xf32>
    %1162 = arith.mulf %1161, %1151 : vector<2x256xf32>
    %1163 = arith.addf %1159, %1162 : vector<2x256xf32>
    %c214 = arith.constant 214 : index
    %1164 = memref.load %arg1[%c214] : memref<241xf32, #tpu.memory_space<smem>>
    %1165 = vector.broadcast %1164 : f32 to vector<2x256xf32>
    %1166 = arith.mulf %1165, %1153 : vector<2x256xf32>
    %1167 = arith.addf %1163, %1166 : vector<2x256xf32>
    %c215 = arith.constant 215 : index
    %1168 = memref.load %arg1[%c215] : memref<241xf32, #tpu.memory_space<smem>>
    %1169 = vector.broadcast %1168 : f32 to vector<2x256xf32>
    %1170 = arith.mulf %1169, %1155 : vector<2x256xf32>
    %1171 = arith.addf %1167, %1170 : vector<2x256xf32>
    %c3_176 = arith.constant 3 : index
    %c0_177 = arith.constant 0 : index
    %c0_178 = arith.constant 0 : index
    %1172 = vector.load %arg3[%c3_176, %c0_177, %c0_178] : memref<9x2x256xf32, #tpu.memory_space<vmem>>, vector<1x2x256xf32>
    %1173 = vector.shape_cast %1172 : vector<1x2x256xf32> to vector<2x256xf32>
    %c1_i32_179 = arith.constant 1 : i32
    %1174 = tpu.dynamic_rotate %1005 by %c1_i32_179 dim 1 : vector<2x256xf32>, i32 -> vector<2x256xf32>
    %1175 = arith.mulf %1174, %1173 : vector<2x256xf32>
    %c1_i32_180 = arith.constant 1 : i32
    %1176 = tpu.dynamic_rotate %1033 by %c1_i32_180 dim 1 : vector<2x256xf32>, i32 -> vector<2x256xf32>
    %1177 = arith.mulf %1176, %1173 : vector<2x256xf32>
    %c1_i32_181 = arith.constant 1 : i32
    %1178 = tpu.dynamic_rotate %1061 by %c1_i32_181 dim 1 : vector<2x256xf32>, i32 -> vector<2x256xf32>
    %1179 = arith.mulf %1178, %1173 : vector<2x256xf32>
    %c1_i32_182 = arith.constant 1 : i32
    %1180 = tpu.dynamic_rotate %1089 by %c1_i32_182 dim 1 : vector<2x256xf32>, i32 -> vector<2x256xf32>
    %1181 = arith.mulf %1180, %1173 : vector<2x256xf32>
    %c216 = arith.constant 216 : index
    %1182 = memref.load %arg1[%c216] : memref<241xf32, #tpu.memory_space<smem>>
    %1183 = vector.broadcast %1182 : f32 to vector<2x256xf32>
    %1184 = arith.mulf %1183, %1175 : vector<2x256xf32>
    %1185 = arith.addf %1171, %1184 : vector<2x256xf32>
    %c217 = arith.constant 217 : index
    %1186 = memref.load %arg1[%c217] : memref<241xf32, #tpu.memory_space<smem>>
    %1187 = vector.broadcast %1186 : f32 to vector<2x256xf32>
    %1188 = arith.mulf %1187, %1177 : vector<2x256xf32>
    %1189 = arith.addf %1185, %1188 : vector<2x256xf32>
    %c218 = arith.constant 218 : index
    %1190 = memref.load %arg1[%c218] : memref<241xf32, #tpu.memory_space<smem>>
    %1191 = vector.broadcast %1190 : f32 to vector<2x256xf32>
    %1192 = arith.mulf %1191, %1179 : vector<2x256xf32>
    %1193 = arith.addf %1189, %1192 : vector<2x256xf32>
    %c219 = arith.constant 219 : index
    %1194 = memref.load %arg1[%c219] : memref<241xf32, #tpu.memory_space<smem>>
    %1195 = vector.broadcast %1194 : f32 to vector<2x256xf32>
    %1196 = arith.mulf %1195, %1181 : vector<2x256xf32>
    %1197 = arith.addf %1193, %1196 : vector<2x256xf32>
    %c220 = arith.constant 220 : index
    %1198 = memref.load %arg1[%c220] : memref<241xf32, #tpu.memory_space<smem>>
    %1199 = vector.broadcast %1198 : f32 to vector<2x256xf32>
    %1200 = arith.mulf %1199, %1005 : vector<2x256xf32>
    %1201 = arith.addf %1197, %1200 : vector<2x256xf32>
    %c221 = arith.constant 221 : index
    %1202 = memref.load %arg1[%c221] : memref<241xf32, #tpu.memory_space<smem>>
    %1203 = vector.broadcast %1202 : f32 to vector<2x256xf32>
    %1204 = arith.mulf %1203, %1033 : vector<2x256xf32>
    %1205 = arith.addf %1201, %1204 : vector<2x256xf32>
    %c222 = arith.constant 222 : index
    %1206 = memref.load %arg1[%c222] : memref<241xf32, #tpu.memory_space<smem>>
    %1207 = vector.broadcast %1206 : f32 to vector<2x256xf32>
    %1208 = arith.mulf %1207, %1061 : vector<2x256xf32>
    %1209 = arith.addf %1205, %1208 : vector<2x256xf32>
    %c223 = arith.constant 223 : index
    %1210 = memref.load %arg1[%c223] : memref<241xf32, #tpu.memory_space<smem>>
    %1211 = vector.broadcast %1210 : f32 to vector<2x256xf32>
    %1212 = arith.mulf %1211, %1089 : vector<2x256xf32>
    %1213 = arith.addf %1209, %1212 : vector<2x256xf32>
    %c5_183 = arith.constant 5 : index
    %c0_184 = arith.constant 0 : index
    %c0_185 = arith.constant 0 : index
    %1214 = vector.load %arg3[%c5_183, %c0_184, %c0_185] : memref<9x2x256xf32, #tpu.memory_space<vmem>>, vector<1x2x256xf32>
    %1215 = vector.shape_cast %1214 : vector<1x2x256xf32> to vector<2x256xf32>
    %c255_i32_186 = arith.constant 255 : i32
    %1216 = tpu.dynamic_rotate %1005 by %c255_i32_186 dim 1 : vector<2x256xf32>, i32 -> vector<2x256xf32>
    %1217 = arith.mulf %1216, %1215 : vector<2x256xf32>
    %c255_i32_187 = arith.constant 255 : i32
    %1218 = tpu.dynamic_rotate %1033 by %c255_i32_187 dim 1 : vector<2x256xf32>, i32 -> vector<2x256xf32>
    %1219 = arith.mulf %1218, %1215 : vector<2x256xf32>
    %c255_i32_188 = arith.constant 255 : i32
    %1220 = tpu.dynamic_rotate %1061 by %c255_i32_188 dim 1 : vector<2x256xf32>, i32 -> vector<2x256xf32>
    %1221 = arith.mulf %1220, %1215 : vector<2x256xf32>
    %c255_i32_189 = arith.constant 255 : i32
    %1222 = tpu.dynamic_rotate %1089 by %c255_i32_189 dim 1 : vector<2x256xf32>, i32 -> vector<2x256xf32>
    %1223 = arith.mulf %1222, %1215 : vector<2x256xf32>
    %c224 = arith.constant 224 : index
    %1224 = memref.load %arg1[%c224] : memref<241xf32, #tpu.memory_space<smem>>
    %1225 = vector.broadcast %1224 : f32 to vector<2x256xf32>
    %1226 = arith.mulf %1225, %1217 : vector<2x256xf32>
    %1227 = arith.addf %1213, %1226 : vector<2x256xf32>
    %c225 = arith.constant 225 : index
    %1228 = memref.load %arg1[%c225] : memref<241xf32, #tpu.memory_space<smem>>
    %1229 = vector.broadcast %1228 : f32 to vector<2x256xf32>
    %1230 = arith.mulf %1229, %1219 : vector<2x256xf32>
    %1231 = arith.addf %1227, %1230 : vector<2x256xf32>
    %c226 = arith.constant 226 : index
    %1232 = memref.load %arg1[%c226] : memref<241xf32, #tpu.memory_space<smem>>
    %1233 = vector.broadcast %1232 : f32 to vector<2x256xf32>
    %1234 = arith.mulf %1233, %1221 : vector<2x256xf32>
    %1235 = arith.addf %1231, %1234 : vector<2x256xf32>
    %c227 = arith.constant 227 : index
    %1236 = memref.load %arg1[%c227] : memref<241xf32, #tpu.memory_space<smem>>
    %1237 = vector.broadcast %1236 : f32 to vector<2x256xf32>
    %1238 = arith.mulf %1237, %1223 : vector<2x256xf32>
    %1239 = arith.addf %1235, %1238 : vector<2x256xf32>
    %c6_190 = arith.constant 6 : index
    %c0_191 = arith.constant 0 : index
    %c0_192 = arith.constant 0 : index
    %1240 = vector.load %arg3[%c6_190, %c0_191, %c0_192] : memref<9x2x256xf32, #tpu.memory_space<vmem>>, vector<1x2x256xf32>
    %1241 = vector.shape_cast %1240 : vector<1x2x256xf32> to vector<2x256xf32>
    %c241_i32_193 = arith.constant 241 : i32
    %1242 = tpu.dynamic_rotate %1005 by %c241_i32_193 dim 1 : vector<2x256xf32>, i32 -> vector<2x256xf32>
    %1243 = arith.mulf %1242, %1241 : vector<2x256xf32>
    %c241_i32_194 = arith.constant 241 : i32
    %1244 = tpu.dynamic_rotate %1033 by %c241_i32_194 dim 1 : vector<2x256xf32>, i32 -> vector<2x256xf32>
    %1245 = arith.mulf %1244, %1241 : vector<2x256xf32>
    %c241_i32_195 = arith.constant 241 : i32
    %1246 = tpu.dynamic_rotate %1061 by %c241_i32_195 dim 1 : vector<2x256xf32>, i32 -> vector<2x256xf32>
    %1247 = arith.mulf %1246, %1241 : vector<2x256xf32>
    %c241_i32_196 = arith.constant 241 : i32
    %1248 = tpu.dynamic_rotate %1089 by %c241_i32_196 dim 1 : vector<2x256xf32>, i32 -> vector<2x256xf32>
    %1249 = arith.mulf %1248, %1241 : vector<2x256xf32>
    %c228 = arith.constant 228 : index
    %1250 = memref.load %arg1[%c228] : memref<241xf32, #tpu.memory_space<smem>>
    %1251 = vector.broadcast %1250 : f32 to vector<2x256xf32>
    %1252 = arith.mulf %1251, %1243 : vector<2x256xf32>
    %1253 = arith.addf %1239, %1252 : vector<2x256xf32>
    %c229 = arith.constant 229 : index
    %1254 = memref.load %arg1[%c229] : memref<241xf32, #tpu.memory_space<smem>>
    %1255 = vector.broadcast %1254 : f32 to vector<2x256xf32>
    %1256 = arith.mulf %1255, %1245 : vector<2x256xf32>
    %1257 = arith.addf %1253, %1256 : vector<2x256xf32>
    %c230 = arith.constant 230 : index
    %1258 = memref.load %arg1[%c230] : memref<241xf32, #tpu.memory_space<smem>>
    %1259 = vector.broadcast %1258 : f32 to vector<2x256xf32>
    %1260 = arith.mulf %1259, %1247 : vector<2x256xf32>
    %1261 = arith.addf %1257, %1260 : vector<2x256xf32>
    %c231 = arith.constant 231 : index
    %1262 = memref.load %arg1[%c231] : memref<241xf32, #tpu.memory_space<smem>>
    %1263 = vector.broadcast %1262 : f32 to vector<2x256xf32>
    %1264 = arith.mulf %1263, %1249 : vector<2x256xf32>
    %1265 = arith.addf %1261, %1264 : vector<2x256xf32>
    %c7_197 = arith.constant 7 : index
    %c0_198 = arith.constant 0 : index
    %c0_199 = arith.constant 0 : index
    %1266 = vector.load %arg3[%c7_197, %c0_198, %c0_199] : memref<9x2x256xf32, #tpu.memory_space<vmem>>, vector<1x2x256xf32>
    %1267 = vector.shape_cast %1266 : vector<1x2x256xf32> to vector<2x256xf32>
    %c240_i32_200 = arith.constant 240 : i32
    %1268 = tpu.dynamic_rotate %1005 by %c240_i32_200 dim 1 : vector<2x256xf32>, i32 -> vector<2x256xf32>
    %1269 = arith.mulf %1268, %1267 : vector<2x256xf32>
    %c240_i32_201 = arith.constant 240 : i32
    %1270 = tpu.dynamic_rotate %1033 by %c240_i32_201 dim 1 : vector<2x256xf32>, i32 -> vector<2x256xf32>
    %1271 = arith.mulf %1270, %1267 : vector<2x256xf32>
    %c240_i32_202 = arith.constant 240 : i32
    %1272 = tpu.dynamic_rotate %1061 by %c240_i32_202 dim 1 : vector<2x256xf32>, i32 -> vector<2x256xf32>
    %1273 = arith.mulf %1272, %1267 : vector<2x256xf32>
    %c240_i32_203 = arith.constant 240 : i32
    %1274 = tpu.dynamic_rotate %1089 by %c240_i32_203 dim 1 : vector<2x256xf32>, i32 -> vector<2x256xf32>
    %1275 = arith.mulf %1274, %1267 : vector<2x256xf32>
    %c232 = arith.constant 232 : index
    %1276 = memref.load %arg1[%c232] : memref<241xf32, #tpu.memory_space<smem>>
    %1277 = vector.broadcast %1276 : f32 to vector<2x256xf32>
    %1278 = arith.mulf %1277, %1269 : vector<2x256xf32>
    %1279 = arith.addf %1265, %1278 : vector<2x256xf32>
    %c233 = arith.constant 233 : index
    %1280 = memref.load %arg1[%c233] : memref<241xf32, #tpu.memory_space<smem>>
    %1281 = vector.broadcast %1280 : f32 to vector<2x256xf32>
    %1282 = arith.mulf %1281, %1271 : vector<2x256xf32>
    %1283 = arith.addf %1279, %1282 : vector<2x256xf32>
    %c234 = arith.constant 234 : index
    %1284 = memref.load %arg1[%c234] : memref<241xf32, #tpu.memory_space<smem>>
    %1285 = vector.broadcast %1284 : f32 to vector<2x256xf32>
    %1286 = arith.mulf %1285, %1273 : vector<2x256xf32>
    %1287 = arith.addf %1283, %1286 : vector<2x256xf32>
    %c235 = arith.constant 235 : index
    %1288 = memref.load %arg1[%c235] : memref<241xf32, #tpu.memory_space<smem>>
    %1289 = vector.broadcast %1288 : f32 to vector<2x256xf32>
    %1290 = arith.mulf %1289, %1275 : vector<2x256xf32>
    %1291 = arith.addf %1287, %1290 : vector<2x256xf32>
    %c8_204 = arith.constant 8 : index
    %c0_205 = arith.constant 0 : index
    %c0_206 = arith.constant 0 : index
    %1292 = vector.load %arg3[%c8_204, %c0_205, %c0_206] : memref<9x2x256xf32, #tpu.memory_space<vmem>>, vector<1x2x256xf32>
    %1293 = vector.shape_cast %1292 : vector<1x2x256xf32> to vector<2x256xf32>
    %c239_i32_207 = arith.constant 239 : i32
    %1294 = tpu.dynamic_rotate %1005 by %c239_i32_207 dim 1 : vector<2x256xf32>, i32 -> vector<2x256xf32>
    %1295 = arith.mulf %1294, %1293 : vector<2x256xf32>
    %c239_i32_208 = arith.constant 239 : i32
    %1296 = tpu.dynamic_rotate %1033 by %c239_i32_208 dim 1 : vector<2x256xf32>, i32 -> vector<2x256xf32>
    %1297 = arith.mulf %1296, %1293 : vector<2x256xf32>
    %c239_i32_209 = arith.constant 239 : i32
    %1298 = tpu.dynamic_rotate %1061 by %c239_i32_209 dim 1 : vector<2x256xf32>, i32 -> vector<2x256xf32>
    %1299 = arith.mulf %1298, %1293 : vector<2x256xf32>
    %c239_i32_210 = arith.constant 239 : i32
    %1300 = tpu.dynamic_rotate %1089 by %c239_i32_210 dim 1 : vector<2x256xf32>, i32 -> vector<2x256xf32>
    %1301 = arith.mulf %1300, %1293 : vector<2x256xf32>
    %c236 = arith.constant 236 : index
    %1302 = memref.load %arg1[%c236] : memref<241xf32, #tpu.memory_space<smem>>
    %1303 = vector.broadcast %1302 : f32 to vector<2x256xf32>
    %1304 = arith.mulf %1303, %1295 : vector<2x256xf32>
    %1305 = arith.addf %1291, %1304 : vector<2x256xf32>
    %c237 = arith.constant 237 : index
    %1306 = memref.load %arg1[%c237] : memref<241xf32, #tpu.memory_space<smem>>
    %1307 = vector.broadcast %1306 : f32 to vector<2x256xf32>
    %1308 = arith.mulf %1307, %1297 : vector<2x256xf32>
    %1309 = arith.addf %1305, %1308 : vector<2x256xf32>
    %c238 = arith.constant 238 : index
    %1310 = memref.load %arg1[%c238] : memref<241xf32, #tpu.memory_space<smem>>
    %1311 = vector.broadcast %1310 : f32 to vector<2x256xf32>
    %1312 = arith.mulf %1311, %1299 : vector<2x256xf32>
    %1313 = arith.addf %1309, %1312 : vector<2x256xf32>
    %c239 = arith.constant 239 : index
    %1314 = memref.load %arg1[%c239] : memref<241xf32, #tpu.memory_space<smem>>
    %1315 = vector.broadcast %1314 : f32 to vector<2x256xf32>
    %1316 = arith.mulf %1315, %1301 : vector<2x256xf32>
    %1317 = arith.addf %1313, %1316 : vector<2x256xf32>
    %c0_211 = arith.constant 0 : index
    %c0_212 = arith.constant 0 : index
    %1318 = vector.load %arg4[%c0_211, %c0_212] : memref<2x256xf32, #tpu.memory_space<vmem>>, vector<2x256xf32>
    tpu.vector_store %arg4[%c0_211, %c0_212], %1317 {strides = array<i32>} : memref<2x256xf32, #tpu.memory_space<vmem>>, vector<2x256xf32>,
    return
  }
  func.func @transform_0(%arg0: i32) -> i32 {
    %c0_i32 = arith.constant 0 : i32
    %c0_i32_0 = arith.constant 0 : i32
    return %c0_i32 : i32
  }
  func.func @transform_1(%arg0: i32) -> (i32, i32, i32) {
    %c0_i32 = arith.constant 0 : i32
    %c0_i32_0 = arith.constant 0 : i32
    %c0_i32_1 = arith.constant 0 : i32
    %c0_i32_2 = arith.constant 0 : i32
    return %c0_i32, %c0_i32_0, %c0_i32_1 : i32, i32, i32
  }
  func.func @transform_2(%arg0: i32) -> (i32, i32, i32) {
    %c0_i32 = arith.constant 0 : i32
    %c0_i32_0 = arith.constant 0 : i32
    %c0_i32_1 = arith.constant 0 : i32
    %c0_i32_2 = arith.constant 0 : i32
    return %c0_i32, %c0_i32_0, %c0_i32_1 : i32, i32, i32
  }
  func.func @transform_3(%arg0: i32) -> (i32, i32) {
    %c0_i32 = arith.constant 0 : i32
    %c0_i32_0 = arith.constant 0 : i32
    %c0_i32_1 = arith.constant 0 : i32
    return %c0_i32, %c0_i32_0 : i32, i32
  }
}

</mosaic_0001>

<llo_original>
// kernel: _lambda_.1
$region0: #{_lambda_.1}
  #allocation0 [shape = 'u32[]', space=smem, size = 0x4, offset = 0x4, fixed_abs, tag = 'smem constant byte address 0x4 - core index']
  #allocation1 [shape = 'u32[144,128]{1,0:T(1,128)}', space=vmem, size = 0x12000, scoped, tag = 'internal scratch']
  %s0 = inlined_call_operand.vmem [shape: f32[241], index: 0, kind: input, shape index: {}]
  %s1 = inlined_call_operand.vmem [shape: f32[1,2,256], index: 1, kind: input, shape index: {}]
  %s2 = inlined_call_operand.vmem [shape: f32[9,2,256], index: 2, kind: input, shape index: {}]
  %s3 = inlined_call_operand.vmem [shape: f32[2,256], index: 3, kind: output, shape index: {}]
  %s4 = sld [smem:[#allocation0]]
  $region26: #{_lambda_.1} parent=0
    _
  %s6 = ssub.s32 1, %s4
  %s7 = scalar_select 0, %s6, %s4
  $region1: #{_lambda_.1} parent=0
    #allocation2 [shape = 'u8[1024]{0}', space=smem, size = 0x400, scoped, tag = 'input window, operand 0, single buffered']
    #allocation3 [shape = 's32[1]{0}', space=sflag, size = 0x4, scoped, tag = 'scoped memory for _lambda_.1']
    %8 = vsyncpa [#allocation3], 0
    // Predicated region
    $region2: #{_lambda_.1} parent=1 // pred_check
      _
    $region3: #{_lambda_.1} parent=1 // pred_check_branch
      %10 = sbr.rel (0) target = $region5
    $region4: #{_lambda_.1} parent=1 // pred_region
      %s12 = ssub.s32 32, 32
      %13 = vsyncadd [#allocation3], %s12
      %s15 = sshll.u32 %s0, 4
      %s16 = int_to_ptr.vmem [resolvable:$true] %s15
      %18 = dma.vmem_to_smem %s16, 32, [#allocation2], [#allocation3]
    $region5: #{_lambda_.1} parent=1 // pred_fallthru
      _
    // Predicated region
    $region6: #{_lambda_.1} parent=1 // pred_check
      _
    $region7: #{_lambda_.1} parent=1 // pred_check_branch
      %20 = sbr.rel (0) target = $region9
    $region8: #{_lambda_.1} parent=1 // pred_region
      _
    $region9: #{_lambda_.1} parent=1 // pred_fallthru
      _
    // Predicated region
    $region10: #{_lambda_.1} parent=1 // pred_check
      _
    $region11: #{_lambda_.1} parent=1 // pred_check_branch
      %22 = sbr.rel (0) target = $region13
    $region12: #{_lambda_.1} parent=1 // pred_region
      _
    $region13: #{_lambda_.1} parent=1 // pred_fallthru
      _
    // Predicated region
    $region14: #{_lambda_.1} parent=1 // pred_check
      _
    $region15: #{_lambda_.1} parent=1 // pred_check_branch
      %24 = sbr.rel (0) target = $region17
    $region16: #{_lambda_.1} parent=1 // pred_region
      %25 = dma.done [#allocation3], 32
    $region17: #{_lambda_.1} parent=1 // pred_fallthru
      _
    %26 = sfence
    %v27 = vld [vmem:[%s1] sm:$0xf]
    %s28 = sld [smem:[#allocation2 + $0x24]]
    %v29 = vstv %s28
    %v30 = vadd.f32 %v29, 0.0
    %s31 = sld [smem:[#allocation2 + $0x25]]
    %v32 = vstv %s31
    %v33 = vadd.f32 %v32, 0.0
    %s34 = sld [smem:[#allocation2 + $0x26]]
    %v35 = vstv %s34
    %v36 = vadd.f32 %v35, 0.0
    %s37 = sld [smem:[#allocation2 + $0x27]]
    %v38 = vstv %s37
    %v39 = vadd.f32 %v38, 0.0
    %v40 = vld [vmem:[%s2] sm:$0xf]
    %v43 = vunpack.c.l.s4 1983009808
    %v44 = vunpack.c.0.s8 %v43
    %v45 = vlaneseq
    %v46 = vshrl.u32 %v45, 7
    %v47 = vsub.s32 %v44, %v46
    %v48 = vrot.slane %v27, %v47
    %v49 = vcombine.high %v48, %v48
    %52 = vrot.lane.b32.xlu0 %v48, 17
    %v53 = vpop.permute.xlu0 %52
    %54 = vrot.lane.b32.xlu0 %v49, 17
    %v55 = vpop.permute.xlu0 %54
    %v56 = vlaneseq
    %v57 = vand.u32 %v56, 127
    %vm58 = vcmp.lt.s32.totalorder %v57, 17
    %v59 = vsel %vm58, %v53, %v55
    %v60 = vsel %vm58, %v55, %v53
    %v63 = vunpack.c.l.s4 1983009808
    %v64 = vunpack.c.0.s8 %v63
    %v65 = vlaneseq
    %v66 = vshrl.u32 %v65, 7
    %v67 = vsub.s32 %v64, %v66
    %v68 = vrot.slane %v40, %v67
    %v69 = vcombine.high %v68, %v68
    %v72 = vmul.f32 %v60, %v68
    %v73 = vmul.f32 %v59, %v69
    %s74 = sld [smem:[#allocation2]]
    %v75 = vstv %s74
    %v76 = vmul.f32 %v75, %v72
    %v77 = vmul.f32 %v75, %v73
    %v78 = vadd.f32 %v30, %v76
    %v79 = vadd.f32 %v30, %v77
    %s80 = sld [smem:[#allocation2 + $0x1]]
    %v81 = vstv %s80
    %v82 = vmul.f32 %v81, %v72
    %v83 = vmul.f32 %v81, %v73
    %v84 = vadd.f32 %v33, %v82
    %v85 = vadd.f32 %v33, %v83
    %s86 = sld [smem:[#allocation2 + $0x2]]
    %v87 = vstv %s86
    %v88 = vmul.f32 %v87, %v72
    %v89 = vmul.f32 %v87, %v73
    %v90 = vadd.f32 %v36, %v88
    %v91 = vadd.f32 %v36, %v89
    %s92 = sld [smem:[#allocation2 + $0x3]]
    %v93 = vstv %s92
    %v94 = vmul.f32 %v93, %v72
    %v95 = vmul.f32 %v93, %v73
    %v96 = vadd.f32 %v39, %v94
    %v97 = vadd.f32 %v39, %v95
    %s98 = scalar_lea.vmem %s2, 4
    %v99 = vld [vmem:[%s98] sm:$0xf]
    %100 = vrot.lane.b32.xlu0 %v48, 16
    %v101 = vpop.permute.xlu0 %100
    %102 = vrot.lane.b32.xlu0 %v49, 16
    %v103 = vpop.permute.xlu0 %102
    %vm104 = vcmp.lt.s32.totalorder %v57, 16
    %v105 = vsel %vm104, %v101, %v103
    %v106 = vsel %vm104, %v103, %v101
    %v109 = vunpack.c.l.s4 1983009808
    %v110 = vunpack.c.0.s8 %v109
    %v111 = vlaneseq
    %v112 = vshrl.u32 %v111, 7
    %v113 = vsub.s32 %v110, %v112
    %v114 = vrot.slane %v99, %v113
    %v115 = vcombine.high %v114, %v114
    %v118 = vmul.f32 %v106, %v114
    %v119 = vmul.f32 %v105, %v115
    %s120 = sld [smem:[#allocation2 + $0x4]]
    %v121 = vstv %s120
    %v122 = vmul.f32 %v121, %v118
    %v123 = vmul.f32 %v121, %v119
    %v124 = vadd.f32 %v78, %v122
    %v125 = vadd.f32 %v79, %v123
    %s126 = sld [smem:[#allocation2 + $0x5]]
    %v127 = vstv %s126
    %v128 = vmul.f32 %v127, %v118
    %v129 = vmul.f32 %v127, %v119
    %v130 = vadd.f32 %v84, %v128
    %v131 = vadd.f32 %v85, %v129
    %s132 = sld [smem:[#allocation2 + $0x6]]
    %v133 = vstv %s132
    %v134 = vmul.f32 %v133, %v118
    %v135 = vmul.f32 %v133, %v119
    %v136 = vadd.f32 %v90, %v134
    %v137 = vadd.f32 %v91, %v135
    %s138 = sld [smem:[#allocation2 + $0x7]]
    %v139 = vstv %s138
    %v140 = vmul.f32 %v139, %v118
    %v141 = vmul.f32 %v139, %v119
    %v142 = vadd.f32 %v96, %v140
    %v143 = vadd.f32 %v97, %v141
    %s144 = scalar_lea.vmem %s2, 8
    %v145 = vld [vmem:[%s144] sm:$0xf]
    %146 = vrot.lane.b32.xlu0 %v48, 15
    %v147 = vpop.permute.xlu0 %146
    %148 = vrot.lane.b32.xlu0 %v49, 15
    %v149 = vpop.permute.xlu0 %148
    %vm150 = vcmp.lt.s32.totalorder %v57, 15
    %v151 = vsel %vm150, %v147, %v149
    %v152 = vsel %vm150, %v149, %v147
    %v155 = vunpack.c.l.s4 1983009808
    %v156 = vunpack.c.0.s8 %v155
    %v157 = vlaneseq
    %v158 = vshrl.u32 %v157, 7
    %v159 = vsub.s32 %v156, %v158
    %v160 = vrot.slane %v145, %v159
    %v161 = vcombine.high %v160, %v160
    %v164 = vmul.f32 %v152, %v160
    %v165 = vmul.f32 %v151, %v161
    %s166 = sld [smem:[#allocation2 + $0x8]]
    %v167 = vstv %s166
    %v168 = vmul.f32 %v167, %v164
    %v169 = vmul.f32 %v167, %v165
    %v170 = vadd.f32 %v124, %v168
    %v171 = vadd.f32 %v125, %v169
    %s172 = sld [smem:[#allocation2 + $0x9]]
    %v173 = vstv %s172
    %v174 = vmul.f32 %v173, %v164
    %v175 = vmul.f32 %v173, %v165
    %v176 = vadd.f32 %v130, %v174
    %v177 = vadd.f32 %v131, %v175
    %s178 = sld [smem:[#allocation2 + $0xa]]
    %v179 = vstv %s178
    %v180 = vmul.f32 %v179, %v164
    %v181 = vmul.f32 %v179, %v165
    %v182 = vadd.f32 %v136, %v180
    %v183 = vadd.f32 %v137, %v181
    %s184 = sld [smem:[#allocation2 + $0xb]]
    %v185 = vstv %s184
    %v186 = vmul.f32 %v185, %v164
    %v187 = vmul.f32 %v185, %v165
    %v188 = vadd.f32 %v142, %v186
    %v189 = vadd.f32 %v143, %v187
    %s190 = scalar_lea.vmem %s2, 12
    %v191 = vld [vmem:[%s190] sm:$0xf]
    %192 = vrot.lane.b32.xlu0 %v48, 1
    %v193 = vpop.permute.xlu0 %192
    %194 = vrot.lane.b32.xlu0 %v49, 1
    %v195 = vpop.permute.xlu0 %194
    %vm196 = vcmp.lt.s32.totalorder %v57, 1
    %v197 = vsel %vm196, %v193, %v195
    %v198 = vsel %vm196, %v195, %v193
    %v201 = vunpack.c.l.s4 1983009808
    %v202 = vunpack.c.0.s8 %v201
    %v203 = vlaneseq
    %v204 = vshrl.u32 %v203, 7
    %v205 = vsub.s32 %v202, %v204
    %v206 = vrot.slane %v191, %v205
    %v207 = vcombine.high %v206, %v206
    %v210 = vmul.f32 %v198, %v206
    %v211 = vmul.f32 %v197, %v207
    %s212 = sld [smem:[#allocation2 + $0xc]]
    %v213 = vstv %s212
    %v214 = vmul.f32 %v213, %v210
    %v215 = vmul.f32 %v213, %v211
    %v216 = vadd.f32 %v170, %v214
    %v217 = vadd.f32 %v171, %v215
    %s218 = sld [smem:[#allocation2 + $0xd]]
    %v219 = vstv %s218
    %v220 = vmul.f32 %v219, %v210
    %v221 = vmul.f32 %v219, %v211
    %v222 = vadd.f32 %v176, %v220
    %v223 = vadd.f32 %v177, %v221
    %s224 = sld [smem:[#allocation2 + $0xe]]
    %v225 = vstv %s224
    %v226 = vmul.f32 %v225, %v210
    %v227 = vmul.f32 %v225, %v211
    %v228 = vadd.f32 %v182, %v226
    %v229 = vadd.f32 %v183, %v227
    %s230 = sld [smem:[#allocation2 + $0xf]]
    %v231 = vstv %s230
    %v232 = vmul.f32 %v231, %v210
    %v233 = vmul.f32 %v231, %v211
    %v234 = vadd.f32 %v188, %v232
    %v235 = vadd.f32 %v189, %v233
    %s236 = sld [smem:[#allocation2 + $0x10]]
    %v237 = vstv %s236
    %v238 = vmul.f32 %v237, %v27
    %v241 = vunpack.c.l.s4 1983009808
    %v242 = vunpack.c.0.s8 %v241
    %v243 = vlaneseq
    %v244 = vshrl.u32 %v243, 7
    %v245 = vsub.s32 %v242, %v244
    %v246 = vrot.slane %v238, %v245
    %v247 = vcombine.high %v246, %v246
    %v250 = vadd.f32 %v216, %v246
    %v251 = vadd.f32 %v217, %v247
    %s252 = sld [smem:[#allocation2 + $0x11]]
    %v253 = vstv %s252
    %v254 = vmul.f32 %v253, %v27
    %v257 = vunpack.c.l.s4 1983009808
    %v258 = vunpack.c.0.s8 %v257
    %v259 = vlaneseq
    %v260 = vshrl.u32 %v259, 7
    %v261 = vsub.s32 %v258, %v260
    %v262 = vrot.slane %v254, %v261
    %v263 = vcombine.high %v262, %v262
    %v266 = vadd.f32 %v222, %v262
    %v267 = vadd.f32 %v223, %v263
    %s268 = sld [smem:[#allocation2 + $0x12]]
    %v269 = vstv %s268
    %v270 = vmul.f32 %v269, %v27
    %v273 = vunpack.c.l.s4 1983009808
    %v274 = vunpack.c.0.s8 %v273
    %v275 = vlaneseq
    %v276 = vshrl.u32 %v275, 7
    %v277 = vsub.s32 %v274, %v276
    %v278 = vrot.slane %v270, %v277
    %v279 = vcombine.high %v278, %v278
    %v282 = vadd.f32 %v228, %v278
    %v283 = vadd.f32 %v229, %v279
    %s284 = sld [smem:[#allocation2 + $0x13]]
    %v285 = vstv %s284
    %v286 = vmul.f32 %v285, %v27
    %v289 = vunpack.c.l.s4 1983009808
    %v290 = vunpack.c.0.s8 %v289
    %v291 = vlaneseq
    %v292 = vshrl.u32 %v291, 7
    %v293 = vsub.s32 %v290, %v292
    %v294 = vrot.slane %v286, %v293
    %v295 = vcombine.high %v294, %v294
    %v298 = vadd.f32 %v234, %v294
    %v299 = vadd.f32 %v235, %v295
    %s300 = scalar_lea.vmem %s2, 20
    %v301 = vld [vmem:[%s300] sm:$0xf]
    %302 = vrot.lane.b32.xlu0 %v48, 127
    %v303 = vpop.permute.xlu0 %302
    %304 = vrot.lane.b32.xlu0 %v49, 127
    %v305 = vpop.permute.xlu0 %304
    %vm306 = vcmp.lt.s32.totalorder %v57, 127
    %v307 = vsel %vm306, %v303, %v305
    %v308 = vsel %vm306, %v305, %v303
    %v311 = vunpack.c.l.s4 1983009808
    %v312 = vunpack.c.0.s8 %v311
    %v313 = vlaneseq
    %v314 = vshrl.u32 %v313, 7
    %v315 = vsub.s32 %v312, %v314
    %v316 = vrot.slane %v301, %v315
    %v317 = vcombine.high %v316, %v316
    %v320 = vmul.f32 %v307, %v316
    %v321 = vmul.f32 %v308, %v317
    %s322 = sld [smem:[#allocation2 + $0x14]]
    %v323 = vstv %s322
    %v324 = vmul.f32 %v323, %v320
    %v325 = vmul.f32 %v323, %v321
    %v326 = vadd.f32 %v250, %v324
    %v327 = vadd.f32 %v251, %v325
    %s328 = sld [smem:[#allocation2 + $0x15]]
    %v329 = vstv %s328
    %v330 = vmul.f32 %v329, %v320
    %v331 = vmul.f32 %v329, %v321
    %v332 = vadd.f32 %v266, %v330
    %v333 = vadd.f32 %v267, %v331
    %s334 = sld [smem:[#allocation2 + $0x16]]
    %v335 = vstv %s334
    %v336 = vmul.f32 %v335, %v320
    %v337 = vmul.f32 %v335, %v321
    %v338 = vadd.f32 %v282, %v336
    %v339 = vadd.f32 %v283, %v337
    %s340 = sld [smem:[#allocation2 + $0x17]]
    %v341 = vstv %s340
    %v342 = vmul.f32 %v341, %v320
    %v343 = vmul.f32 %v341, %v321
    %v344 = vadd.f32 %v298, %v342
    %v345 = vadd.f32 %v299, %v343
    %s346 = scalar_lea.vmem %s2, 24
    %v347 = vld [vmem:[%s346] sm:$0xf]
    %348 = vrot.lane.b32.xlu0 %v48, 113
    %v349 = vpop.permute.xlu0 %348
    %350 = vrot.lane.b32.xlu0 %v49, 113
    %v351 = vpop.permute.xlu0 %350
    %vm352 = vcmp.lt.s32.totalorder %v57, 113
    %v353 = vsel %vm352, %v349, %v351
    %v354 = vsel %vm352, %v351, %v349
    %v357 = vunpack.c.l.s4 1983009808
    %v358 = vunpack.c.0.s8 %v357
    %v359 = vlaneseq
    %v360 = vshrl.u32 %v359, 7
    %v361 = vsub.s32 %v358, %v360
    %v362 = vrot.slane %v347, %v361
    %v363 = vcombine.high %v362, %v362
    %v366 = vmul.f32 %v353, %v362
    %v367 = vmul.f32 %v354, %v363
    %s368 = sld [smem:[#allocation2 + $0x18]]
    %v369 = vstv %s368
    %v370 = vmul.f32 %v369, %v366
    %v371 = vmul.f32 %v369, %v367
    %v372 = vadd.f32 %v326, %v370
    %v373 = vadd.f32 %v327, %v371
    %s374 = sld [smem:[#allocation2 + $0x19]]
    %v375 = vstv %s374
    %v376 = vmul.f32 %v375, %v366
    %v377 = vmul.f32 %v375, %v367
    %v378 = vadd.f32 %v332, %v376
    %v379 = vadd.f32 %v333, %v377
    %s380 = sld [smem:[#allocation2 + $0x1a]]
    %v381 = vstv %s380
    %v382 = vmul.f32 %v381, %v366
    %v383 = vmul.f32 %v381, %v367
    %v384 = vadd.f32 %v338, %v382
    %v385 = vadd.f32 %v339, %v383
    %s386 = sld [smem:[#allocation2 + $0x1b]]
    %v387 = vstv %s386
    %v388 = vmul.f32 %v387, %v366
    %v389 = vmul.f32 %v387, %v367
    %v390 = vadd.f32 %v344, %v388
    %v391 = vadd.f32 %v345, %v389
    %s392 = scalar_lea.vmem %s2, 28
    %v393 = vld [vmem:[%s392] sm:$0xf]
    %394 = vrot.lane.b32.xlu0 %v48, 112
    %v395 = vpop.permute.xlu0 %394
    %396 = vrot.lane.b32.xlu0 %v49, 112
    %v397 = vpop.permute.xlu0 %396
    %vm398 = vcmp.lt.s32.totalorder %v57, 112
    %v399 = vsel %vm398, %v395, %v397
    %v400 = vsel %vm398, %v397, %v395
    %v403 = vunpack.c.l.s4 1983009808
    %v404 = vunpack.c.0.s8 %v403
    %v405 = vlaneseq
    %v406 = vshrl.u32 %v405, 7
    %v407 = vsub.s32 %v404, %v406
    %v408 = vrot.slane %v393, %v407
    %v409 = vcombine.high %v408, %v408
    %v412 = vmul.f32 %v399, %v408
    %v413 = vmul.f32 %v400, %v409
    %s414 = sld [smem:[#allocation2 + $0x1c]]
    %v415 = vstv %s414
    %v416 = vmul.f32 %v415, %v412
    %v417 = vmul.f32 %v415, %v413
    %v418 = vadd.f32 %v372, %v416
    %v419 = vadd.f32 %v373, %v417
    %s420 = sld [smem:[#allocation2 + $0x1d]]
    %v421 = vstv %s420
    %v422 = vmul.f32 %v421, %v412
    %v423 = vmul.f32 %v421, %v413
    %v424 = vadd.f32 %v378, %v422
    %v425 = vadd.f32 %v379, %v423
    %s426 = sld [smem:[#allocation2 + $0x1e]]
    %v427 = vstv %s426
    %v428 = vmul.f32 %v427, %v412
    %v429 = vmul.f32 %v427, %v413
    %v430 = vadd.f32 %v384, %v428
    %v431 = vadd.f32 %v385, %v429
    %s432 = sld [smem:[#allocation2 + $0x1f]]
    %v433 = vstv %s432
    %v434 = vmul.f32 %v433, %v412
    %v435 = vmul.f32 %v433, %v413
    %v436 = vadd.f32 %v390, %v434
    %v437 = vadd.f32 %v391, %v435
    %s438 = scalar_lea.vmem %s2, 32
    %v439 = vld [vmem:[%s438] sm:$0xf]
    %440 = vrot.lane.b32.xlu0 %v48, 111
    %v441 = vpop.permute.xlu0 %440
    %442 = vrot.lane.b32.xlu0 %v49, 111
    %v443 = vpop.permute.xlu0 %442
    %vm444 = vcmp.lt.s32.totalorder %v57, 111
    %v445 = vsel %vm444, %v441, %v443
    %v446 = vsel %vm444, %v443, %v441
    %v449 = vunpack.c.l.s4 1983009808
    %v450 = vunpack.c.0.s8 %v449
    %v451 = vlaneseq
    %v452 = vshrl.u32 %v451, 7
    %v453 = vsub.s32 %v450, %v452
    %v454 = vrot.slane %v439, %v453
    %v455 = vcombine.high %v454, %v454
    %v458 = vmul.f32 %v445, %v454
    %v459 = vmul.f32 %v446, %v455
    %s460 = sld [smem:[#allocation2 + $0x20]]
    %v461 = vstv %s460
    %v462 = vmul.f32 %v461, %v458
    %v463 = vmul.f32 %v461, %v459
    %v464 = vadd.f32 %v418, %v462
    %v465 = vadd.f32 %v419, %v463
    %s466 = sld [smem:[#allocation2 + $0x21]]
    %v467 = vstv %s466
    %v468 = vmul.f32 %v467, %v458
    %v469 = vmul.f32 %v467, %v459
    %v470 = vadd.f32 %v424, %v468
    %v471 = vadd.f32 %v425, %v469
    %s472 = sld [smem:[#allocation2 + $0x22]]
    %v473 = vstv %s472
    %v474 = vmul.f32 %v473, %v458
    %v475 = vmul.f32 %v473, %v459
    %v476 = vadd.f32 %v430, %v474
    %v477 = vadd.f32 %v431, %v475
    %s478 = sld [smem:[#allocation2 + $0x23]]
    %v479 = vstv %s478
    %v480 = vmul.f32 %v479, %v458
    %v481 = vmul.f32 %v479, %v459
    %v482 = vadd.f32 %v436, %v480
    %v483 = vadd.f32 %v437, %v481
    %vm484 = vcmask 1041408
    %v485 = vsel %vm484, %v464, 0.0
    %v486 = vsel %vm484, %v465, 0.0
    %v487 = vadd.f32 %v485, %v486
    %488 = vadd.xlane.f32.xlu0 %v487
    %v489 = vpop.xlane.xlu0 %488
    %v490 = vsel %vm484, %v489, 0.0
    %v491 = vrot.slane %v490, 4
    %v492 = vadd.f32 %v490, %v491
    %v493 = vrot.slane %v492, 2
    %v494 = vadd.f32 %v492, %v493
    %v495 = vrot.slane %v494, 1
    %v496 = vadd.f32 %v494, %v495
    %v497 = vmul.f32 %v496, 0.001953125
    %v498 = vsub.f32 %v464, %v497
    %v499 = vsub.f32 %v465, %v497
    %v500 = vmul.f32 %v498, %v498
    %v501 = vmul.f32 %v499, %v499
    %v502 = vsel %vm484, %v500, 0.0
    %v503 = vsel %vm484, %v501, 0.0
    %v504 = vadd.f32 %v502, %v503
    %505 = vadd.xlane.f32.xlu0 %v504
    %v506 = vpop.xlane.xlu0 %505
    %v507 = vsel %vm484, %v506, 0.0
    %v508 = vrot.slane %v507, 4
    %v509 = vadd.f32 %v507, %v508
    %v510 = vrot.slane %v509, 2
    %v511 = vadd.f32 %v509, %v510
    %v512 = vrot.slane %v511, 1
    %v513 = vadd.f32 %v511, %v512
    %v514 = vmul.f32 %v513, 0.001953125
    %v515 = vadd.f32 %v514, 1e-05
    %v516 = vrsqrt.pop %v515
    %s517 = sld [smem:[#allocation2 + $0x28]]
    %v518 = vstv %s517
    %v519 = vmul.f32 %v516, %v518
    %v520 = vmul.f32 %v498, %v519
    %v521 = vmul.f32 %v499, %v519
    %s522 = sld [smem:[#allocation2 + $0x2c]]
    %v523 = vstv %s522
    %v524 = vadd.f32 %v520, %v523
    %v525 = vadd.f32 %v521, %v523
    %v526 = vmax.f32 %v524, 0.0
    %v527 = vmax.f32 %v525, 0.0
    %v528 = vsel %vm484, %v470, 0.0
    %v529 = vsel %vm484, %v471, 0.0
    %v530 = vadd.f32 %v528, %v529
    %531 = vadd.xlane.f32.xlu0 %v530
    %v532 = vpop.xlane.xlu0 %531
    %v533 = vsel %vm484, %v532, 0.0
    %v534 = vrot.slane %v533, 4
    %v535 = vadd.f32 %v533, %v534
    %v536 = vrot.slane %v535, 2
    %v537 = vadd.f32 %v535, %v536
    %v538 = vrot.slane %v537, 1
    %v539 = vadd.f32 %v537, %v538
    %v540 = vmul.f32 %v539, 0.001953125
    %v541 = vsub.f32 %v470, %v540
    %v542 = vsub.f32 %v471, %v540
    %v543 = vmul.f32 %v541, %v541
    %v544 = vmul.f32 %v542, %v542
    %v545 = vsel %vm484, %v543, 0.0
    %v546 = vsel %vm484, %v544, 0.0
    %v547 = vadd.f32 %v545, %v546
    %548 = vadd.xlane.f32.xlu0 %v547
    %v549 = vpop.xlane.xlu0 %548
    %v550 = vsel %vm484, %v549, 0.0
    %v551 = vrot.slane %v550, 4
    %v552 = vadd.f32 %v550, %v551
    %v553 = vrot.slane %v552, 2
    %v554 = vadd.f32 %v552, %v553
    %v555 = vrot.slane %v554, 1
    %v556 = vadd.f32 %v554, %v555
    %v557 = vmul.f32 %v556, 0.001953125
    %v558 = vadd.f32 %v557, 1e-05
    %v559 = vrsqrt.pop %v558
    %s560 = sld [smem:[#allocation2 + $0x29]]
    %v561 = vstv %s560
    %v562 = vmul.f32 %v559, %v561
    %v563 = vmul.f32 %v541, %v562
    %v564 = vmul.f32 %v542, %v562
    %s565 = sld [smem:[#allocation2 + $0x2d]]
    %v566 = vstv %s565
    %v567 = vadd.f32 %v563, %v566
    %v568 = vadd.f32 %v564, %v566
    %v569 = vmax.f32 %v567, 0.0
    %v570 = vmax.f32 %v568, 0.0
    %v571 = vsel %vm484, %v476, 0.0
    %v572 = vsel %vm484, %v477, 0.0
    %v573 = vadd.f32 %v571, %v572
    %574 = vadd.xlane.f32.xlu0 %v573
    %v575 = vpop.xlane.xlu0 %574
    %v576 = vsel %vm484, %v575, 0.0
    %v577 = vrot.slane %v576, 4
    %v578 = vadd.f32 %v576, %v577
    %v579 = vrot.slane %v578, 2
    %v580 = vadd.f32 %v578, %v579
    %v581 = vrot.slane %v580, 1
    %v582 = vadd.f32 %v580, %v581
    %v583 = vmul.f32 %v582, 0.001953125
    %v584 = vsub.f32 %v476, %v583
    %v585 = vsub.f32 %v477, %v583
    %v586 = vmul.f32 %v584, %v584
    %v587 = vmul.f32 %v585, %v585
    %v588 = vsel %vm484, %v586, 0.0
    %v589 = vsel %vm484, %v587, 0.0
    %v590 = vadd.f32 %v588, %v589
    %591 = vadd.xlane.f32.xlu0 %v590
    %v592 = vpop.xlane.xlu0 %591
    %v593 = vsel %vm484, %v592, 0.0
    %v594 = vrot.slane %v593, 4
    %v595 = vadd.f32 %v593, %v594
    %v596 = vrot.slane %v595, 2
    %v597 = vadd.f32 %v595, %v596
    %v598 = vrot.slane %v597, 1
    %v599 = vadd.f32 %v597, %v598
    %v600 = vmul.f32 %v599, 0.001953125
    %v601 = vadd.f32 %v600, 1e-05
    %v602 = vrsqrt.pop %v601
    %s603 = sld [smem:[#allocation2 + $0x2a]]
    %v604 = vstv %s603
    %v605 = vmul.f32 %v602, %v604
    %v606 = vmul.f32 %v584, %v605
    %v607 = vmul.f32 %v585, %v605
    %s608 = sld [smem:[#allocation2 + $0x2e]]
    %v609 = vstv %s608
    %v610 = vadd.f32 %v606, %v609
    %v611 = vadd.f32 %v607, %v609
    %v612 = vmax.f32 %v610, 0.0
    %v613 = vmax.f32 %v611, 0.0
    %v614 = vsel %vm484, %v482, 0.0
    %v615 = vsel %vm484, %v483, 0.0
    %v616 = vadd.f32 %v614, %v615
    %617 = vadd.xlane.f32.xlu0 %v616
    %v618 = vpop.xlane.xlu0 %617
    %v619 = vsel %vm484, %v618, 0.0
    %v620 = vrot.slane %v619, 4
    %v621 = vadd.f32 %v619, %v620
    %v622 = vrot.slane %v621, 2
    %v623 = vadd.f32 %v621, %v622
    %v624 = vrot.slane %v623, 1
    %v625 = vadd.f32 %v623, %v624
    %v626 = vmul.f32 %v625, 0.001953125
    %v627 = vsub.f32 %v482, %v626
    %v628 = vsub.f32 %v483, %v626
    %v629 = vmul.f32 %v627, %v627
    %v630 = vmul.f32 %v628, %v628
    %v631 = vsel %vm484, %v629, 0.0
    %v632 = vsel %vm484, %v630, 0.0
    %v633 = vadd.f32 %v631, %v632
    %634 = vadd.xlane.f32.xlu0 %v633
    %v635 = vpop.xlane.xlu0 %634
    %v636 = vsel %vm484, %v635, 0.0
    %v637 = vrot.slane %v636, 4
    %v638 = vadd.f32 %v636, %v637
    %v639 = vrot.slane %v638, 2
    %v640 = vadd.f32 %v638, %v639
    %v641 = vrot.slane %v640, 1
    %v642 = vadd.f32 %v640, %v641
    %v643 = vmul.f32 %v642, 0.001953125
    %v644 = vadd.f32 %v643, 1e-05
    %v645 = vrsqrt.pop %v644
    %s646 = sld [smem:[#allocation2 + $0x2b]]
    %v647 = vstv %s646
    %v648 = vmul.f32 %v645, %v647
    %v649 = vmul.f32 %v627, %v648
    %v650 = vmul.f32 %v628, %v648
    %s651 = sld [smem:[#allocation2 + $0x2f]]
    %v652 = vstv %s651
    %v653 = vadd.f32 %v649, %v652
    %v654 = vadd.f32 %v650, %v652
    %v655 = vmax.f32 %v653, 0.0
    %v656 = vmax.f32 %v654, 0.0
    %s657 = sld [smem:[#allocation2 + $0xc0]]
    %v658 = vstv %s657
    %v659 = vadd.f32 %v658, 0.0
    %s660 = sld [smem:[#allocation2 + $0xc1]]
    %v661 = vstv %s660
    %v662 = vadd.f32 %v661, 0.0
    %s663 = sld [smem:[#allocation2 + $0xc2]]
    %v664 = vstv %s663
    %v665 = vadd.f32 %v664, 0.0
    %s666 = sld [smem:[#allocation2 + $0xc3]]
    %v667 = vstv %s666
    %v668 = vadd.f32 %v667, 0.0
    %669 = vrot.lane.b32.xlu0 %v526, 17
    %v670 = vpop.permute.xlu0 %669
    %671 = vrot.lane.b32.xlu0 %v527, 17
    %v672 = vpop.permute.xlu0 %671
    %v673 = vsel %vm58, %v670, %v672
    %v674 = vsel %vm58, %v672, %v670
    %v675 = vmul.f32 %v674, %v68
    %v676 = vmul.f32 %v673, %v69
    %677 = vrot.lane.b32.xlu0 %v569, 17
    %v678 = vpop.permute.xlu0 %677
    %679 = vrot.lane.b32.xlu0 %v570, 17
    %v680 = vpop.permute.xlu0 %679
    %v681 = vsel %vm58, %v678, %v680
    %v682 = vsel %vm58, %v680, %v678
    %v683 = vmul.f32 %v682, %v68
    %v684 = vmul.f32 %v681, %v69
    %685 = vrot.lane.b32.xlu0 %v612, 17
    %v686 = vpop.permute.xlu0 %685
    %687 = vrot.lane.b32.xlu0 %v613, 17
    %v688 = vpop.permute.xlu0 %687
    %v689 = vsel %vm58, %v686, %v688
    %v690 = vsel %vm58, %v688, %v686
    %v691 = vmul.f32 %v690, %v68
    %v692 = vmul.f32 %v689, %v69
    %693 = vrot.lane.b32.xlu0 %v655, 17
    %v694 = vpop.permute.xlu0 %693
    %695 = vrot.lane.b32.xlu0 %v656, 17
    %v696 = vpop.permute.xlu0 %695
    %v697 = vsel %vm58, %v694, %v696
    %v698 = vsel %vm58, %v696, %v694
    %v699 = vmul.f32 %v698, %v68
    %v700 = vmul.f32 %v697, %v69
    %s701 = sld [smem:[#allocation2 + $0x30]]
    %v702 = vstv %s701
    %v703 = vmul.f32 %v702, %v675
    %v704 = vmul.f32 %v702, %v676
    %v705 = vadd.f32 %v659, %v703
    %v706 = vadd.f32 %v659, %v704
    %s707 = sld [smem:[#allocation2 + $0x31]]
    %v708 = vstv %s707
    %v709 = vmul.f32 %v708, %v675
    %v710 = vmul.f32 %v708, %v676
    %v711 = vadd.f32 %v662, %v709
    %v712 = vadd.f32 %v662, %v710
    %s713 = sld [smem:[#allocation2 + $0x32]]
    %v714 = vstv %s713
    %v715 = vmul.f32 %v714, %v675
    %v716 = vmul.f32 %v714, %v676
    %v717 = vadd.f32 %v665, %v715
    %v718 = vadd.f32 %v665, %v716
    %s719 = sld [smem:[#allocation2 + $0x33]]
    %v720 = vstv %s719
    %v721 = vmul.f32 %v720, %v675
    %v722 = vmul.f32 %v720, %v676
    %v723 = vadd.f32 %v668, %v721
    %v724 = vadd.f32 %v668, %v722
    %s725 = sld [smem:[#allocation2 + $0x34]]
    %v726 = vstv %s725
    %v727 = vmul.f32 %v726, %v683
    %v728 = vmul.f32 %v726, %v684
    %v729 = vadd.f32 %v705, %v727
    %v730 = vadd.f32 %v706, %v728
    %s731 = sld [smem:[#allocation2 + $0x35]]
    %v732 = vstv %s731
    %v733 = vmul.f32 %v732, %v683
    %v734 = vmul.f32 %v732, %v684
    %v735 = vadd.f32 %v711, %v733
    %v736 = vadd.f32 %v712, %v734
    %s737 = sld [smem:[#allocation2 + $0x36]]
    %v738 = vstv %s737
    %v739 = vmul.f32 %v738, %v683
    %v740 = vmul.f32 %v738, %v684
    %v741 = vadd.f32 %v717, %v739
    %v742 = vadd.f32 %v718, %v740
    %s743 = sld [smem:[#allocation2 + $0x37]]
    %v744 = vstv %s743
    %v745 = vmul.f32 %v744, %v683
    %v746 = vmul.f32 %v744, %v684
    %v747 = vadd.f32 %v723, %v745
    %v748 = vadd.f32 %v724, %v746
    %s749 = sld [smem:[#allocation2 + $0x38]]
    %v750 = vstv %s749
    %v751 = vmul.f32 %v750, %v691
    %v752 = vmul.f32 %v750, %v692
    %v753 = vadd.f32 %v729, %v751
    %v754 = vadd.f32 %v730, %v752
    %s755 = sld [smem:[#allocation2 + $0x39]]
    %v756 = vstv %s755
    %v757 = vmul.f32 %v756, %v691
    %v758 = vmul.f32 %v756, %v692
    %v759 = vadd.f32 %v735, %v757
    %v760 = vadd.f32 %v736, %v758
    %s761 = sld [smem:[#allocation2 + $0x3a]]
    %v762 = vstv %s761
    %v763 = vmul.f32 %v762, %v691
    %v764 = vmul.f32 %v762, %v692
    %v765 = vadd.f32 %v741, %v763
    %v766 = vadd.f32 %v742, %v764
    %s767 = sld [smem:[#allocation2 + $0x3b]]
    %v768 = vstv %s767
    %v769 = vmul.f32 %v768, %v691
    %v770 = vmul.f32 %v768, %v692
    %v771 = vadd.f32 %v747, %v769
    %v772 = vadd.f32 %v748, %v770
    %s773 = sld [smem:[#allocation2 + $0x3c]]
    %v774 = vstv %s773
    %v775 = vmul.f32 %v774, %v699
    %v776 = vmul.f32 %v774, %v700
    %v777 = vadd.f32 %v753, %v775
    %v778 = vadd.f32 %v754, %v776
    %s779 = sld [smem:[#allocation2 + $0x3d]]
    %v780 = vstv %s779
    %v781 = vmul.f32 %v780, %v699
    %v782 = vmul.f32 %v780, %v700
    %v783 = vadd.f32 %v759, %v781
    %v784 = vadd.f32 %v760, %v782
    %s785 = sld [smem:[#allocation2 + $0x3e]]
    %v786 = vstv %s785
    %v787 = vmul.f32 %v786, %v699
    %v788 = vmul.f32 %v786, %v700
    %v789 = vadd.f32 %v765, %v787
    %v790 = vadd.f32 %v766, %v788
    %s791 = sld [smem:[#allocation2 + $0x3f]]
    %v792 = vstv %s791
    %v793 = vmul.f32 %v792, %v699
    %v794 = vmul.f32 %v792, %v700
    %v795 = vadd.f32 %v771, %v793
    %v796 = vadd.f32 %v772, %v794
    %797 = vrot.lane.b32.xlu0 %v526, 16
    %v798 = vpop.permute.xlu0 %797
    %799 = vrot.lane.b32.xlu0 %v527, 16
    %v800 = vpop.permute.xlu0 %799
    %v801 = vsel %vm104, %v798, %v800
    %v802 = vsel %vm104, %v800, %v798
    %v803 = vmul.f32 %v802, %v114
    %v804 = vmul.f32 %v801, %v115
    %805 = vrot.lane.b32.xlu0 %v569, 16
    %v806 = vpop.permute.xlu0 %805
    %807 = vrot.lane.b32.xlu0 %v570, 16
    %v808 = vpop.permute.xlu0 %807
    %v809 = vsel %vm104, %v806, %v808
    %v810 = vsel %vm104, %v808, %v806
    %v811 = vmul.f32 %v810, %v114
    %v812 = vmul.f32 %v809, %v115
    %813 = vrot.lane.b32.xlu0 %v612, 16
    %v814 = vpop.permute.xlu0 %813
    %815 = vrot.lane.b32.xlu0 %v613, 16
    %v816 = vpop.permute.xlu0 %815
    %v817 = vsel %vm104, %v814, %v816
    %v818 = vsel %vm104, %v816, %v814
    %v819 = vmul.f32 %v818, %v114
    %v820 = vmul.f32 %v817, %v115
    %821 = vrot.lane.b32.xlu0 %v655, 16
    %v822 = vpop.permute.xlu0 %821
    %823 = vrot.lane.b32.xlu0 %v656, 16
    %v824 = vpop.permute.xlu0 %823
    %v825 = vsel %vm104, %v822, %v824
    %v826 = vsel %vm104, %v824, %v822
    %v827 = vmul.f32 %v826, %v114
    %v828 = vmul.f32 %v825, %v115
    %s829 = sld [smem:[#allocation2 + $0x40]]
    %v830 = vstv %s829
    %v831 = vmul.f32 %v830, %v803
    %v832 = vmul.f32 %v830, %v804
    %v833 = vadd.f32 %v777, %v831
    %v834 = vadd.f32 %v778, %v832
    %s835 = sld [smem:[#allocation2 + $0x41]]
    %v836 = vstv %s835
    %v837 = vmul.f32 %v836, %v803
    %v838 = vmul.f32 %v836, %v804
    %v839 = vadd.f32 %v783, %v837
    %v840 = vadd.f32 %v784, %v838
    %s841 = sld [smem:[#allocation2 + $0x42]]
    %v842 = vstv %s841
    %v843 = vmul.f32 %v842, %v803
    %v844 = vmul.f32 %v842, %v804
    %v845 = vadd.f32 %v789, %v843
    %v846 = vadd.f32 %v790, %v844
    %s847 = sld [smem:[#allocation2 + $0x43]]
    %v848 = vstv %s847
    %v849 = vmul.f32 %v848, %v803
    %v850 = vmul.f32 %v848, %v804
    %v851 = vadd.f32 %v795, %v849
    %v852 = vadd.f32 %v796, %v850
    %s853 = sld [smem:[#allocation2 + $0x44]]
    %v854 = vstv %s853
    %v855 = vmul.f32 %v854, %v811
    %v856 = vmul.f32 %v854, %v812
    %v857 = vadd.f32 %v833, %v855
    %v858 = vadd.f32 %v834, %v856
    %s859 = sld [smem:[#allocation2 + $0x45]]
    %v860 = vstv %s859
    %v861 = vmul.f32 %v860, %v811
    %v862 = vmul.f32 %v860, %v812
    %v863 = vadd.f32 %v839, %v861
    %v864 = vadd.f32 %v840, %v862
    %s865 = sld [smem:[#allocation2 + $0x46]]
    %v866 = vstv %s865
    %v867 = vmul.f32 %v866, %v811
    %v868 = vmul.f32 %v866, %v812
    %v869 = vadd.f32 %v845, %v867
    %v870 = vadd.f32 %v846, %v868
    %s871 = sld [smem:[#allocation2 + $0x47]]
    %v872 = vstv %s871
    %v873 = vmul.f32 %v872, %v811
    %v874 = vmul.f32 %v872, %v812
    %v875 = vadd.f32 %v851, %v873
    %v876 = vadd.f32 %v852, %v874
    %s877 = sld [smem:[#allocation2 + $0x48]]
    %v878 = vstv %s877
    %v879 = vmul.f32 %v878, %v819
    %v880 = vmul.f32 %v878, %v820
    %v881 = vadd.f32 %v857, %v879
    %v882 = vadd.f32 %v858, %v880
    %s883 = sld [smem:[#allocation2 + $0x49]]
    %v884 = vstv %s883
    %v885 = vmul.f32 %v884, %v819
    %v886 = vmul.f32 %v884, %v820
    %v887 = vadd.f32 %v863, %v885
    %v888 = vadd.f32 %v864, %v886
    %s889 = sld [smem:[#allocation2 + $0x4a]]
    %v890 = vstv %s889
    %v891 = vmul.f32 %v890, %v819
    %v892 = vmul.f32 %v890, %v820
    %v893 = vadd.f32 %v869, %v891
    %v894 = vadd.f32 %v870, %v892
    %s895 = sld [smem:[#allocation2 + $0x4b]]
    %v896 = vstv %s895
    %v897 = vmul.f32 %v896, %v819
    %v898 = vmul.f32 %v896, %v820
    %v899 = vadd.f32 %v875, %v897
    %v900 = vadd.f32 %v876, %v898
    %s901 = sld [smem:[#allocation2 + $0x4c]]
    %v902 = vstv %s901
    %v903 = vmul.f32 %v902, %v827
    %v904 = vmul.f32 %v902, %v828
    %v905 = vadd.f32 %v881, %v903
    %v906 = vadd.f32 %v882, %v904
    %s907 = sld [smem:[#allocation2 + $0x4d]]
    %v908 = vstv %s907
    %v909 = vmul.f32 %v908, %v827
    %v910 = vmul.f32 %v908, %v828
    %v911 = vadd.f32 %v887, %v909
    %v912 = vadd.f32 %v888, %v910
    %s913 = sld [smem:[#allocation2 + $0x4e]]
    %v914 = vstv %s913
    %v915 = vmul.f32 %v914, %v827
    %v916 = vmul.f32 %v914, %v828
    %v917 = vadd.f32 %v893, %v915
    %v918 = vadd.f32 %v894, %v916
    %s919 = sld [smem:[#allocation2 + $0x4f]]
    %v920 = vstv %s919
    %v921 = vmul.f32 %v920, %v827
    %v922 = vmul.f32 %v920, %v828
    %v923 = vadd.f32 %v899, %v921
    %v924 = vadd.f32 %v900, %v922
    %925 = vrot.lane.b32.xlu0 %v526, 15
    %v926 = vpop.permute.xlu0 %925
    %927 = vrot.lane.b32.xlu0 %v527, 15
    %v928 = vpop.permute.xlu0 %927
    %v929 = vsel %vm150, %v926, %v928
    %v930 = vsel %vm150, %v928, %v926
    %v931 = vmul.f32 %v930, %v160
    %v932 = vmul.f32 %v929, %v161
    %933 = vrot.lane.b32.xlu0 %v569, 15
    %v934 = vpop.permute.xlu0 %933
    %935 = vrot.lane.b32.xlu0 %v570, 15
    %v936 = vpop.permute.xlu0 %935
    %v937 = vsel %vm150, %v934, %v936
    %v938 = vsel %vm150, %v936, %v934
    %v939 = vmul.f32 %v938, %v160
    %v940 = vmul.f32 %v937, %v161
    %941 = vrot.lane.b32.xlu0 %v612, 15
    %v942 = vpop.permute.xlu0 %941
    %943 = vrot.lane.b32.xlu0 %v613, 15
    %v944 = vpop.permute.xlu0 %943
    %v945 = vsel %vm150, %v942, %v944
    %v946 = vsel %vm150, %v944, %v942
    %v947 = vmul.f32 %v946, %v160
    %v948 = vmul.f32 %v945, %v161
    %949 = vrot.lane.b32.xlu0 %v655, 15
    %v950 = vpop.permute.xlu0 %949
    %951 = vrot.lane.b32.xlu0 %v656, 15
    %v952 = vpop.permute.xlu0 %951
    %v953 = vsel %vm150, %v950, %v952
    %v954 = vsel %vm150, %v952, %v950
    %v955 = vmul.f32 %v954, %v160
    %v956 = vmul.f32 %v953, %v161
    %s957 = sld [smem:[#allocation2 + $0x50]]
    %v958 = vstv %s957
    %v959 = vmul.f32 %v958, %v931
    %v960 = vmul.f32 %v958, %v932
    %v961 = vadd.f32 %v905, %v959
    %v962 = vadd.f32 %v906, %v960
    %s963 = sld [smem:[#allocation2 + $0x51]]
    %v964 = vstv %s963
    %v965 = vmul.f32 %v964, %v931
    %v966 = vmul.f32 %v964, %v932
    %v967 = vadd.f32 %v911, %v965
    %v968 = vadd.f32 %v912, %v966
    %s969 = sld [smem:[#allocation2 + $0x52]]
    %v970 = vstv %s969
    %v971 = vmul.f32 %v970, %v931
    %v972 = vmul.f32 %v970, %v932
    %v973 = vadd.f32 %v917, %v971
    %v974 = vadd.f32 %v918, %v972
    %s975 = sld [smem:[#allocation2 + $0x53]]
    %v976 = vstv %s975
    %v977 = vmul.f32 %v976, %v931
    %v978 = vmul.f32 %v976, %v932
    %v979 = vadd.f32 %v923, %v977
    %v980 = vadd.f32 %v924, %v978
    %s981 = sld [smem:[#allocation2 + $0x54]]
    %v982 = vstv %s981
    %v983 = vmul.f32 %v982, %v939
    %v984 = vmul.f32 %v982, %v940
    %v985 = vadd.f32 %v961, %v983
    %v986 = vadd.f32 %v962, %v984
    %s987 = sld [smem:[#allocation2 + $0x55]]
    %v988 = vstv %s987
    %v989 = vmul.f32 %v988, %v939
    %v990 = vmul.f32 %v988, %v940
    %v991 = vadd.f32 %v967, %v989
    %v992 = vadd.f32 %v968, %v990
    %s993 = sld [smem:[#allocation2 + $0x56]]
    %v994 = vstv %s993
    %v995 = vmul.f32 %v994, %v939
    %v996 = vmul.f32 %v994, %v940
    %v997 = vadd.f32 %v973, %v995
    %v998 = vadd.f32 %v974, %v996
    %s999 = sld [smem:[#allocation2 + $0x57]]
    %v1000 = vstv %s999
    %v1001 = vmul.f32 %v1000, %v939
    %v1002 = vmul.f32 %v1000, %v940
    %v1003 = vadd.f32 %v979, %v1001
    %v1004 = vadd.f32 %v980, %v1002
    %s1005 = sld [smem:[#allocation2 + $0x58]]
    %v1006 = vstv %s1005
    %v1007 = vmul.f32 %v1006, %v947
    %v1008 = vmul.f32 %v1006, %v948
    %v1009 = vadd.f32 %v985, %v1007
    %v1010 = vadd.f32 %v986, %v1008
    %s1011 = sld [smem:[#allocation2 + $0x59]]
    %v1012 = vstv %s1011
    %v1013 = vmul.f32 %v1012, %v947
    %v1014 = vmul.f32 %v1012, %v948
    %v1015 = vadd.f32 %v991, %v1013
    %v1016 = vadd.f32 %v992, %v1014
    %s1017 = sld [smem:[#allocation2 + $0x5a]]
    %v1018 = vstv %s1017
    %v1019 = vmul.f32 %v1018, %v947
    %v1020 = vmul.f32 %v1018, %v948
    %v1021 = vadd.f32 %v997, %v1019
    %v1022 = vadd.f32 %v998, %v1020
    %s1023 = sld [smem:[#allocation2 + $0x5b]]
    %v1024 = vstv %s1023
    %v1025 = vmul.f32 %v1024, %v947
    %v1026 = vmul.f32 %v1024, %v948
    %v1027 = vadd.f32 %v1003, %v1025
    %v1028 = vadd.f32 %v1004, %v1026
    %s1029 = sld [smem:[#allocation2 + $0x5c]]
    %v1030 = vstv %s1029
    %v1031 = vmul.f32 %v1030, %v955
    %v1032 = vmul.f32 %v1030, %v956
    %v1033 = vadd.f32 %v1009, %v1031
    %v1034 = vadd.f32 %v1010, %v1032
    %s1035 = sld [smem:[#allocation2 + $0x5d]]
    %v1036 = vstv %s1035
    %v1037 = vmul.f32 %v1036, %v955
    %v1038 = vmul.f32 %v1036, %v956
    %v1039 = vadd.f32 %v1015, %v1037
    %v1040 = vadd.f32 %v1016, %v1038
    %s1041 = sld [smem:[#allocation2 + $0x5e]]
    %v1042 = vstv %s1041
    %v1043 = vmul.f32 %v1042, %v955
    %v1044 = vmul.f32 %v1042, %v956
    %v1045 = vadd.f32 %v1021, %v1043
    %v1046 = vadd.f32 %v1022, %v1044
    %s1047 = sld [smem:[#allocation2 + $0x5f]]
    %v1048 = vstv %s1047
    %v1049 = vmul.f32 %v1048, %v955
    %v1050 = vmul.f32 %v1048, %v956
    %v1051 = vadd.f32 %v1027, %v1049
    %v1052 = vadd.f32 %v1028, %v1050
    %1053 = vrot.lane.b32.xlu0 %v526, 1
    %v1054 = vpop.permute.xlu0 %1053
    %1055 = vrot.lane.b32.xlu0 %v527, 1
    %v1056 = vpop.permute.xlu0 %1055
    %v1057 = vsel %vm196, %v1054, %v1056
    %v1058 = vsel %vm196, %v1056, %v1054
    %v1059 = vmul.f32 %v1058, %v206
    %v1060 = vmul.f32 %v1057, %v207
    %1061 = vrot.lane.b32.xlu0 %v569, 1
    %v1062 = vpop.permute.xlu0 %1061
    %1063 = vrot.lane.b32.xlu0 %v570, 1
    %v1064 = vpop.permute.xlu0 %1063
    %v1065 = vsel %vm196, %v1062, %v1064
    %v1066 = vsel %vm196, %v1064, %v1062
    %v1067 = vmul.f32 %v1066, %v206
    %v1068 = vmul.f32 %v1065, %v207
    %1069 = vrot.lane.b32.xlu0 %v612, 1
    %v1070 = vpop.permute.xlu0 %1069
    %1071 = vrot.lane.b32.xlu0 %v613, 1
    %v1072 = vpop.permute.xlu0 %1071
    %v1073 = vsel %vm196, %v1070, %v1072
    %v1074 = vsel %vm196, %v1072, %v1070
    %v1075 = vmul.f32 %v1074, %v206
    %v1076 = vmul.f32 %v1073, %v207
    %1077 = vrot.lane.b32.xlu0 %v655, 1
    %v1078 = vpop.permute.xlu0 %1077
    %1079 = vrot.lane.b32.xlu0 %v656, 1
    %v1080 = vpop.permute.xlu0 %1079
    %v1081 = vsel %vm196, %v1078, %v1080
    %v1082 = vsel %vm196, %v1080, %v1078
    %v1083 = vmul.f32 %v1082, %v206
    %v1084 = vmul.f32 %v1081, %v207
    %s1085 = sld [smem:[#allocation2 + $0x60]]
    %v1086 = vstv %s1085
    %v1087 = vmul.f32 %v1086, %v1059
    %v1088 = vmul.f32 %v1086, %v1060
    %v1089 = vadd.f32 %v1033, %v1087
    %v1090 = vadd.f32 %v1034, %v1088
    %s1091 = sld [smem:[#allocation2 + $0x61]]
    %v1092 = vstv %s1091
    %v1093 = vmul.f32 %v1092, %v1059
    %v1094 = vmul.f32 %v1092, %v1060
    %v1095 = vadd.f32 %v1039, %v1093
    %v1096 = vadd.f32 %v1040, %v1094
    %s1097 = sld [smem:[#allocation2 + $0x62]]
    %v1098 = vstv %s1097
    %v1099 = vmul.f32 %v1098, %v1059
    %v1100 = vmul.f32 %v1098, %v1060
    %v1101 = vadd.f32 %v1045, %v1099
    %v1102 = vadd.f32 %v1046, %v1100
    %s1103 = sld [smem:[#allocation2 + $0x63]]
    %v1104 = vstv %s1103
    %v1105 = vmul.f32 %v1104, %v1059
    %v1106 = vmul.f32 %v1104, %v1060
    %v1107 = vadd.f32 %v1051, %v1105
    %v1108 = vadd.f32 %v1052, %v1106
    %s1109 = sld [smem:[#allocation2 + $0x64]]
    %v1110 = vstv %s1109
    %v1111 = vmul.f32 %v1110, %v1067
    %v1112 = vmul.f32 %v1110, %v1068
    %v1113 = vadd.f32 %v1089, %v1111
    %v1114 = vadd.f32 %v1090, %v1112
    %s1115 = sld [smem:[#allocation2 + $0x65]]
    %v1116 = vstv %s1115
    %v1117 = vmul.f32 %v1116, %v1067
    %v1118 = vmul.f32 %v1116, %v1068
    %v1119 = vadd.f32 %v1095, %v1117
    %v1120 = vadd.f32 %v1096, %v1118
    %s1121 = sld [smem:[#allocation2 + $0x66]]
    %v1122 = vstv %s1121
    %v1123 = vmul.f32 %v1122, %v1067
    %v1124 = vmul.f32 %v1122, %v1068
    %v1125 = vadd.f32 %v1101, %v1123
    %v1126 = vadd.f32 %v1102, %v1124
    %s1127 = sld [smem:[#allocation2 + $0x67]]
    %v1128 = vstv %s1127
    %v1129 = vmul.f32 %v1128, %v1067
    %v1130 = vmul.f32 %v1128, %v1068
    %v1131 = vadd.f32 %v1107, %v1129
    %v1132 = vadd.f32 %v1108, %v1130
    %s1133 = sld [smem:[#allocation2 + $0x68]]
    %v1134 = vstv %s1133
    %v1135 = vmul.f32 %v1134, %v1075
    %v1136 = vmul.f32 %v1134, %v1076
    %v1137 = vadd.f32 %v1113, %v1135
    %v1138 = vadd.f32 %v1114, %v1136
    %s1139 = sld [smem:[#allocation2 + $0x69]]
    %v1140 = vstv %s1139
    %v1141 = vmul.f32 %v1140, %v1075
    %v1142 = vmul.f32 %v1140, %v1076
    %v1143 = vadd.f32 %v1119, %v1141
    %v1144 = vadd.f32 %v1120, %v1142
    %s1145 = sld [smem:[#allocation2 + $0x6a]]
    %v1146 = vstv %s1145
    %v1147 = vmul.f32 %v1146, %v1075
    %v1148 = vmul.f32 %v1146, %v1076
    %v1149 = vadd.f32 %v1125, %v1147
    %v1150 = vadd.f32 %v1126, %v1148
    %s1151 = sld [smem:[#allocation2 + $0x6b]]
    %v1152 = vstv %s1151
    %v1153 = vmul.f32 %v1152, %v1075
    %v1154 = vmul.f32 %v1152, %v1076
    %v1155 = vadd.f32 %v1131, %v1153
    %v1156 = vadd.f32 %v1132, %v1154
    %s1157 = sld [smem:[#allocation2 + $0x6c]]
    %v1158 = vstv %s1157
    %v1159 = vmul.f32 %v1158, %v1083
    %v1160 = vmul.f32 %v1158, %v1084
    %v1161 = vadd.f32 %v1137, %v1159
    %v1162 = vadd.f32 %v1138, %v1160
    %s1163 = sld [smem:[#allocation2 + $0x6d]]
    %v1164 = vstv %s1163
    %v1165 = vmul.f32 %v1164, %v1083
    %v1166 = vmul.f32 %v1164, %v1084
    %v1167 = vadd.f32 %v1143, %v1165
    %v1168 = vadd.f32 %v1144, %v1166
    %s1169 = sld [smem:[#allocation2 + $0x6e]]
    %v1170 = vstv %s1169
    %v1171 = vmul.f32 %v1170, %v1083
    %v1172 = vmul.f32 %v1170, %v1084
    %v1173 = vadd.f32 %v1149, %v1171
    %v1174 = vadd.f32 %v1150, %v1172
    %s1175 = sld [smem:[#allocation2 + $0x6f]]
    %v1176 = vstv %s1175
    %v1177 = vmul.f32 %v1176, %v1083
    %v1178 = vmul.f32 %v1176, %v1084
    %v1179 = vadd.f32 %v1155, %v1177
    %v1180 = vadd.f32 %v1156, %v1178
    %s1181 = sld [smem:[#allocation2 + $0x70]]
    %v1182 = vstv %s1181
    %v1183 = vmul.f32 %v1182, %v526
    %v1184 = vmul.f32 %v1182, %v527
    %v1185 = vadd.f32 %v1161, %v1183
    %v1186 = vadd.f32 %v1162, %v1184
    %s1187 = sld [smem:[#allocation2 + $0x71]]
    %v1188 = vstv %s1187
    %v1189 = vmul.f32 %v1188, %v526
    %v1190 = vmul.f32 %v1188, %v527
    %v1191 = vadd.f32 %v1167, %v1189
    %v1192 = vadd.f32 %v1168, %v1190
    %s1193 = sld [smem:[#allocation2 + $0x72]]
    %v1194 = vstv %s1193
    %v1195 = vmul.f32 %v1194, %v526
    %v1196 = vmul.f32 %v1194, %v527
    %v1197 = vadd.f32 %v1173, %v1195
    %v1198 = vadd.f32 %v1174, %v1196
    %s1199 = sld [smem:[#allocation2 + $0x73]]
    %v1200 = vstv %s1199
    %v1201 = vmul.f32 %v1200, %v526
    %v1202 = vmul.f32 %v1200, %v527
    %v1203 = vadd.f32 %v1179, %v1201
    %v1204 = vadd.f32 %v1180, %v1202
    %s1205 = sld [smem:[#allocation2 + $0x74]]
    %v1206 = vstv %s1205
    %v1207 = vmul.f32 %v1206, %v569
    %v1208 = vmul.f32 %v1206, %v570
    %v1209 = vadd.f32 %v1185, %v1207
    %v1210 = vadd.f32 %v1186, %v1208
    %s1211 = sld [smem:[#allocation2 + $0x75]]
    %v1212 = vstv %s1211
    %v1213 = vmul.f32 %v1212, %v569
    %v1214 = vmul.f32 %v1212, %v570
    %v1215 = vadd.f32 %v1191, %v1213
    %v1216 = vadd.f32 %v1192, %v1214
    %s1217 = sld [smem:[#allocation2 + $0x76]]
    %v1218 = vstv %s1217
    %v1219 = vmul.f32 %v1218, %v569
    %v1220 = vmul.f32 %v1218, %v570
    %v1221 = vadd.f32 %v1197, %v1219
    %v1222 = vadd.f32 %v1198, %v1220
    %s1223 = sld [smem:[#allocation2 + $0x77]]
    %v1224 = vstv %s1223
    %v1225 = vmul.f32 %v1224, %v569
    %v1226 = vmul.f32 %v1224, %v570
    %v1227 = vadd.f32 %v1203, %v1225
    %v1228 = vadd.f32 %v1204, %v1226
    %s1229 = sld [smem:[#allocation2 + $0x78]]
    %v1230 = vstv %s1229
    %v1231 = vmul.f32 %v1230, %v612
    %v1232 = vmul.f32 %v1230, %v613
    %v1233 = vadd.f32 %v1209, %v1231
    %v1234 = vadd.f32 %v1210, %v1232
    %s1235 = sld [smem:[#allocation2 + $0x79]]
    %v1236 = vstv %s1235
    %v1237 = vmul.f32 %v1236, %v612
    %v1238 = vmul.f32 %v1236, %v613
    %v1239 = vadd.f32 %v1215, %v1237
    %v1240 = vadd.f32 %v1216, %v1238
    %s1241 = sld [smem:[#allocation2 + $0x7a]]
    %v1242 = vstv %s1241
    %v1243 = vmul.f32 %v1242, %v612
    %v1244 = vmul.f32 %v1242, %v613
    %v1245 = vadd.f32 %v1221, %v1243
    %v1246 = vadd.f32 %v1222, %v1244
    %s1247 = sld [smem:[#allocation2 + $0x7b]]
    %v1248 = vstv %s1247
    %v1249 = vmul.f32 %v1248, %v612
    %v1250 = vmul.f32 %v1248, %v613
    %v1251 = vadd.f32 %v1227, %v1249
    %v1252 = vadd.f32 %v1228, %v1250
    %s1253 = sld [smem:[#allocation2 + $0x7c]]
    %v1254 = vstv %s1253
    %v1255 = vmul.f32 %v1254, %v655
    %v1256 = vmul.f32 %v1254, %v656
    %v1257 = vadd.f32 %v1233, %v1255
    %v1258 = vadd.f32 %v1234, %v1256
    %s1259 = sld [smem:[#allocation2 + $0x7d]]
    %v1260 = vstv %s1259
    %v1261 = vmul.f32 %v1260, %v655
    %v1262 = vmul.f32 %v1260, %v656
    %v1263 = vadd.f32 %v1239, %v1261
    %v1264 = vadd.f32 %v1240, %v1262
    %s1265 = sld [smem:[#allocation2 + $0x7e]]
    %v1266 = vstv %s1265
    %v1267 = vmul.f32 %v1266, %v655
    %v1268 = vmul.f32 %v1266, %v656
    %v1269 = vadd.f32 %v1245, %v1267
    %v1270 = vadd.f32 %v1246, %v1268
    %s1271 = sld [smem:[#allocation2 + $0x7f]]
    %v1272 = vstv %s1271
    %v1273 = vmul.f32 %v1272, %v655
    %v1274 = vmul.f32 %v1272, %v656
    %v1275 = vadd.f32 %v1251, %v1273
    %v1276 = vadd.f32 %v1252, %v1274
    %1277 = vrot.lane.b32.xlu0 %v526, 127
    %v1278 = vpop.permute.xlu0 %1277
    %1279 = vrot.lane.b32.xlu0 %v527, 127
    %v1280 = vpop.permute.xlu0 %1279
    %v1281 = vsel %vm306, %v1278, %v1280
    %v1282 = vsel %vm306, %v1280, %v1278
    %v1283 = vmul.f32 %v1281, %v316
    %v1284 = vmul.f32 %v1282, %v317
    %1285 = vrot.lane.b32.xlu0 %v569, 127
    %v1286 = vpop.permute.xlu0 %1285
    %1287 = vrot.lane.b32.xlu0 %v570, 127
    %v1288 = vpop.permute.xlu0 %1287
    %v1289 = vsel %vm306, %v1286, %v1288
    %v1290 = vsel %vm306, %v1288, %v1286
    %v1291 = vmul.f32 %v1289, %v316
    %v1292 = vmul.f32 %v1290, %v317
    %1293 = vrot.lane.b32.xlu0 %v612, 127
    %v1294 = vpop.permute.xlu0 %1293
    %1295 = vrot.lane.b32.xlu0 %v613, 127
    %v1296 = vpop.permute.xlu0 %1295
    %v1297 = vsel %vm306, %v1294, %v1296
    %v1298 = vsel %vm306, %v1296, %v1294
    %v1299 = vmul.f32 %v1297, %v316
    %v1300 = vmul.f32 %v1298, %v317
    %1301 = vrot.lane.b32.xlu0 %v655, 127
    %v1302 = vpop.permute.xlu0 %1301
    %1303 = vrot.lane.b32.xlu0 %v656, 127
    %v1304 = vpop.permute.xlu0 %1303
    %v1305 = vsel %vm306, %v1302, %v1304
    %v1306 = vsel %vm306, %v1304, %v1302
    %v1307 = vmul.f32 %v1305, %v316
    %v1308 = vmul.f32 %v1306, %v317
    %s1309 = sld [smem:[#allocation2 + $0x80]]
    %v1310 = vstv %s1309
    %v1311 = vmul.f32 %v1310, %v1283
    %v1312 = vmul.f32 %v1310, %v1284
    %v1313 = vadd.f32 %v1257, %v1311
    %v1314 = vadd.f32 %v1258, %v1312
    %s1315 = sld [smem:[#allocation2 + $0x81]]
    %v1316 = vstv %s1315
    %v1317 = vmul.f32 %v1316, %v1283
    %v1318 = vmul.f32 %v1316, %v1284
    %v1319 = vadd.f32 %v1263, %v1317
    %v1320 = vadd.f32 %v1264, %v1318
    %s1321 = sld [smem:[#allocation2 + $0x82]]
    %v1322 = vstv %s1321
    %v1323 = vmul.f32 %v1322, %v1283
    %v1324 = vmul.f32 %v1322, %v1284
    %v1325 = vadd.f32 %v1269, %v1323
    %v1326 = vadd.f32 %v1270, %v1324
    %s1327 = sld [smem:[#allocation2 + $0x83]]
    %v1328 = vstv %s1327
    %v1329 = vmul.f32 %v1328, %v1283
    %v1330 = vmul.f32 %v1328, %v1284
    %v1331 = vadd.f32 %v1275, %v1329
    %v1332 = vadd.f32 %v1276, %v1330
    %s1333 = sld [smem:[#allocation2 + $0x84]]
    %v1334 = vstv %s1333
    %v1335 = vmul.f32 %v1334, %v1291
    %v1336 = vmul.f32 %v1334, %v1292
    %v1337 = vadd.f32 %v1313, %v1335
    %v1338 = vadd.f32 %v1314, %v1336
    %s1339 = sld [smem:[#allocation2 + $0x85]]
    %v1340 = vstv %s1339
    %v1341 = vmul.f32 %v1340, %v1291
    %v1342 = vmul.f32 %v1340, %v1292
    %v1343 = vadd.f32 %v1319, %v1341
    %v1344 = vadd.f32 %v1320, %v1342
    %s1345 = sld [smem:[#allocation2 + $0x86]]
    %v1346 = vstv %s1345
    %v1347 = vmul.f32 %v1346, %v1291
    %v1348 = vmul.f32 %v1346, %v1292
    %v1349 = vadd.f32 %v1325, %v1347
    %v1350 = vadd.f32 %v1326, %v1348
    %s1351 = sld [smem:[#allocation2 + $0x87]]
    %v1352 = vstv %s1351
    %v1353 = vmul.f32 %v1352, %v1291
    %v1354 = vmul.f32 %v1352, %v1292
    %v1355 = vadd.f32 %v1331, %v1353
    %v1356 = vadd.f32 %v1332, %v1354
    %s1357 = sld [smem:[#allocation2 + $0x88]]
    %v1358 = vstv %s1357
    %v1359 = vmul.f32 %v1358, %v1299
    %v1360 = vmul.f32 %v1358, %v1300
    %v1361 = vadd.f32 %v1337, %v1359
    %v1362 = vadd.f32 %v1338, %v1360
    %s1363 = sld [smem:[#allocation2 + $0x89]]
    %v1364 = vstv %s1363
    %v1365 = vmul.f32 %v1364, %v1299
    %v1366 = vmul.f32 %v1364, %v1300
    %v1367 = vadd.f32 %v1343, %v1365
    %v1368 = vadd.f32 %v1344, %v1366
    %s1369 = sld [smem:[#allocation2 + $0x8a]]
    %v1370 = vstv %s1369
    %v1371 = vmul.f32 %v1370, %v1299
    %v1372 = vmul.f32 %v1370, %v1300
    %v1373 = vadd.f32 %v1349, %v1371
    %v1374 = vadd.f32 %v1350, %v1372
    %s1375 = sld [smem:[#allocation2 + $0x8b]]
    %v1376 = vstv %s1375
    %v1377 = vmul.f32 %v1376, %v1299
    %v1378 = vmul.f32 %v1376, %v1300
    %v1379 = vadd.f32 %v1355, %v1377
    %v1380 = vadd.f32 %v1356, %v1378
    %s1381 = sld [smem:[#allocation2 + $0x8c]]
    %v1382 = vstv %s1381
    %v1383 = vmul.f32 %v1382, %v1307
    %v1384 = vmul.f32 %v1382, %v1308
    %v1385 = vadd.f32 %v1361, %v1383
    %v1386 = vadd.f32 %v1362, %v1384
    %s1387 = sld [smem:[#allocation2 + $0x8d]]
    %v1388 = vstv %s1387
    %v1389 = vmul.f32 %v1388, %v1307
    %v1390 = vmul.f32 %v1388, %v1308
    %v1391 = vadd.f32 %v1367, %v1389
    %v1392 = vadd.f32 %v1368, %v1390
    %s1393 = sld [smem:[#allocation2 + $0x8e]]
    %v1394 = vstv %s1393
    %v1395 = vmul.f32 %v1394, %v1307
    %v1396 = vmul.f32 %v1394, %v1308
    %v1397 = vadd.f32 %v1373, %v1395
    %v1398 = vadd.f32 %v1374, %v1396
    %s1399 = sld [smem:[#allocation2 + $0x8f]]
    %v1400 = vstv %s1399
    %v1401 = vmul.f32 %v1400, %v1307
    %v1402 = vmul.f32 %v1400, %v1308
    %v1403 = vadd.f32 %v1379, %v1401
    %v1404 = vadd.f32 %v1380, %v1402
    %1405 = vrot.lane.b32.xlu0 %v526, 113
    %v1406 = vpop.permute.xlu0 %1405
    %1407 = vrot.lane.b32.xlu0 %v527, 113
    %v1408 = vpop.permute.xlu0 %1407
    %v1409 = vsel %vm352, %v1406, %v1408
    %v1410 = vsel %vm352, %v1408, %v1406
    %v1411 = vmul.f32 %v1409, %v362
    %v1412 = vmul.f32 %v1410, %v363
    %1413 = vrot.lane.b32.xlu0 %v569, 113
    %v1414 = vpop.permute.xlu0 %1413
    %1415 = vrot.lane.b32.xlu0 %v570, 113
    %v1416 = vpop.permute.xlu0 %1415
    %v1417 = vsel %vm352, %v1414, %v1416
    %v1418 = vsel %vm352, %v1416, %v1414
    %v1419 = vmul.f32 %v1417, %v362
    %v1420 = vmul.f32 %v1418, %v363
    %1421 = vrot.lane.b32.xlu0 %v612, 113
    %v1422 = vpop.permute.xlu0 %1421
    %1423 = vrot.lane.b32.xlu0 %v613, 113
    %v1424 = vpop.permute.xlu0 %1423
    %v1425 = vsel %vm352, %v1422, %v1424
    %v1426 = vsel %vm352, %v1424, %v1422
    %v1427 = vmul.f32 %v1425, %v362
    %v1428 = vmul.f32 %v1426, %v363
    %1429 = vrot.lane.b32.xlu0 %v655, 113
    %v1430 = vpop.permute.xlu0 %1429
    %1431 = vrot.lane.b32.xlu0 %v656, 113
    %v1432 = vpop.permute.xlu0 %1431
    %v1433 = vsel %vm352, %v1430, %v1432
    %v1434 = vsel %vm352, %v1432, %v1430
    %v1435 = vmul.f32 %v1433, %v362
    %v1436 = vmul.f32 %v1434, %v363
    %s1437 = sld [smem:[#allocation2 + $0x90]]
    %v1438 = vstv %s1437
    %v1439 = vmul.f32 %v1438, %v1411
    %v1440 = vmul.f32 %v1438, %v1412
    %v1441 = vadd.f32 %v1385, %v1439
    %v1442 = vadd.f32 %v1386, %v1440
    %s1443 = sld [smem:[#allocation2 + $0x91]]
    %v1444 = vstv %s1443
    %v1445 = vmul.f32 %v1444, %v1411
    %v1446 = vmul.f32 %v1444, %v1412
    %v1447 = vadd.f32 %v1391, %v1445
    %v1448 = vadd.f32 %v1392, %v1446
    %s1449 = sld [smem:[#allocation2 + $0x92]]
    %v1450 = vstv %s1449
    %v1451 = vmul.f32 %v1450, %v1411
    %v1452 = vmul.f32 %v1450, %v1412
    %v1453 = vadd.f32 %v1397, %v1451
    %v1454 = vadd.f32 %v1398, %v1452
    %s1455 = sld [smem:[#allocation2 + $0x93]]
    %v1456 = vstv %s1455
    %v1457 = vmul.f32 %v1456, %v1411
    %v1458 = vmul.f32 %v1456, %v1412
    %v1459 = vadd.f32 %v1403, %v1457
    %v1460 = vadd.f32 %v1404, %v1458
    %s1461 = sld [smem:[#allocation2 + $0x94]]
    %v1462 = vstv %s1461
    %v1463 = vmul.f32 %v1462, %v1419
    %v1464 = vmul.f32 %v1462, %v1420
    %v1465 = vadd.f32 %v1441, %v1463
    %v1466 = vadd.f32 %v1442, %v1464
    %s1467 = sld [smem:[#allocation2 + $0x95]]
    %v1468 = vstv %s1467
    %v1469 = vmul.f32 %v1468, %v1419
    %v1470 = vmul.f32 %v1468, %v1420
    %v1471 = vadd.f32 %v1447, %v1469
    %v1472 = vadd.f32 %v1448, %v1470
    %s1473 = sld [smem:[#allocation2 + $0x96]]
    %v1474 = vstv %s1473
    %v1475 = vmul.f32 %v1474, %v1419
    %v1476 = vmul.f32 %v1474, %v1420
    %v1477 = vadd.f32 %v1453, %v1475
    %v1478 = vadd.f32 %v1454, %v1476
    %s1479 = sld [smem:[#allocation2 + $0x97]]
    %v1480 = vstv %s1479
    %v1481 = vmul.f32 %v1480, %v1419
    %v1482 = vmul.f32 %v1480, %v1420
    %v1483 = vadd.f32 %v1459, %v1481
    %v1484 = vadd.f32 %v1460, %v1482
    %s1485 = sld [smem:[#allocation2 + $0x98]]
    %v1486 = vstv %s1485
    %v1487 = vmul.f32 %v1486, %v1427
    %v1488 = vmul.f32 %v1486, %v1428
    %v1489 = vadd.f32 %v1465, %v1487
    %v1490 = vadd.f32 %v1466, %v1488
    %s1491 = sld [smem:[#allocation2 + $0x99]]
    %v1492 = vstv %s1491
    %v1493 = vmul.f32 %v1492, %v1427
    %v1494 = vmul.f32 %v1492, %v1428
    %v1495 = vadd.f32 %v1471, %v1493
    %v1496 = vadd.f32 %v1472, %v1494
    %s1497 = sld [smem:[#allocation2 + $0x9a]]
    %v1498 = vstv %s1497
    %v1499 = vmul.f32 %v1498, %v1427
    %v1500 = vmul.f32 %v1498, %v1428
    %v1501 = vadd.f32 %v1477, %v1499
    %v1502 = vadd.f32 %v1478, %v1500
    %s1503 = sld [smem:[#allocation2 + $0x9b]]
    %v1504 = vstv %s1503
    %v1505 = vmul.f32 %v1504, %v1427
    %v1506 = vmul.f32 %v1504, %v1428
    %v1507 = vadd.f32 %v1483, %v1505
    %v1508 = vadd.f32 %v1484, %v1506
    %s1509 = sld [smem:[#allocation2 + $0x9c]]
    %v1510 = vstv %s1509
    %v1511 = vmul.f32 %v1510, %v1435
    %v1512 = vmul.f32 %v1510, %v1436
    %v1513 = vadd.f32 %v1489, %v1511
    %v1514 = vadd.f32 %v1490, %v1512
    %s1515 = sld [smem:[#allocation2 + $0x9d]]
    %v1516 = vstv %s1515
    %v1517 = vmul.f32 %v1516, %v1435
    %v1518 = vmul.f32 %v1516, %v1436
    %v1519 = vadd.f32 %v1495, %v1517
    %v1520 = vadd.f32 %v1496, %v1518
    %s1521 = sld [smem:[#allocation2 + $0x9e]]
    %v1522 = vstv %s1521
    %v1523 = vmul.f32 %v1522, %v1435
    %v1524 = vmul.f32 %v1522, %v1436
    %v1525 = vadd.f32 %v1501, %v1523
    %v1526 = vadd.f32 %v1502, %v1524
    %s1527 = sld [smem:[#allocation2 + $0x9f]]
    %v1528 = vstv %s1527
    %v1529 = vmul.f32 %v1528, %v1435
    %v1530 = vmul.f32 %v1528, %v1436
    %v1531 = vadd.f32 %v1507, %v1529
    %v1532 = vadd.f32 %v1508, %v1530
    %1533 = vrot.lane.b32.xlu0 %v526, 112
    %v1534 = vpop.permute.xlu0 %1533
    %1535 = vrot.lane.b32.xlu0 %v527, 112
    %v1536 = vpop.permute.xlu0 %1535
    %v1537 = vsel %vm398, %v1534, %v1536
    %v1538 = vsel %vm398, %v1536, %v1534
    %v1539 = vmul.f32 %v1537, %v408
    %v1540 = vmul.f32 %v1538, %v409
    %1541 = vrot.lane.b32.xlu0 %v569, 112
    %v1542 = vpop.permute.xlu0 %1541
    %1543 = vrot.lane.b32.xlu0 %v570, 112
    %v1544 = vpop.permute.xlu0 %1543
    %v1545 = vsel %vm398, %v1542, %v1544
    %v1546 = vsel %vm398, %v1544, %v1542
    %v1547 = vmul.f32 %v1545, %v408
    %v1548 = vmul.f32 %v1546, %v409
    %1549 = vrot.lane.b32.xlu0 %v612, 112
    %v1550 = vpop.permute.xlu0 %1549
    %1551 = vrot.lane.b32.xlu0 %v613, 112
    %v1552 = vpop.permute.xlu0 %1551
    %v1553 = vsel %vm398, %v1550, %v1552
    %v1554 = vsel %vm398, %v1552, %v1550
    %v1555 = vmul.f32 %v1553, %v408
    %v1556 = vmul.f32 %v1554, %v409
    %1557 = vrot.lane.b32.xlu0 %v655, 112
    %v1558 = vpop.permute.xlu0 %1557
    %1559 = vrot.lane.b32.xlu0 %v656, 112
    %v1560 = vpop.permute.xlu0 %1559
    %v1561 = vsel %vm398, %v1558, %v1560
    %v1562 = vsel %vm398, %v1560, %v1558
    %v1563 = vmul.f32 %v1561, %v408
    %v1564 = vmul.f32 %v1562, %v409
    %s1565 = sld [smem:[#allocation2 + $0xa0]]
    %v1566 = vstv %s1565
    %v1567 = vmul.f32 %v1566, %v1539
    %v1568 = vmul.f32 %v1566, %v1540
    %v1569 = vadd.f32 %v1513, %v1567
    %v1570 = vadd.f32 %v1514, %v1568
    %s1571 = sld [smem:[#allocation2 + $0xa1]]
    %v1572 = vstv %s1571
    %v1573 = vmul.f32 %v1572, %v1539
    %v1574 = vmul.f32 %v1572, %v1540
    %v1575 = vadd.f32 %v1519, %v1573
    %v1576 = vadd.f32 %v1520, %v1574
    %s1577 = sld [smem:[#allocation2 + $0xa2]]
    %v1578 = vstv %s1577
    %v1579 = vmul.f32 %v1578, %v1539
    %v1580 = vmul.f32 %v1578, %v1540
    %v1581 = vadd.f32 %v1525, %v1579
    %v1582 = vadd.f32 %v1526, %v1580
    %s1583 = sld [smem:[#allocation2 + $0xa3]]
    %v1584 = vstv %s1583
    %v1585 = vmul.f32 %v1584, %v1539
    %v1586 = vmul.f32 %v1584, %v1540
    %v1587 = vadd.f32 %v1531, %v1585
    %v1588 = vadd.f32 %v1532, %v1586
    %s1589 = sld [smem:[#allocation2 + $0xa4]]
    %v1590 = vstv %s1589
    %v1591 = vmul.f32 %v1590, %v1547
    %v1592 = vmul.f32 %v1590, %v1548
    %v1593 = vadd.f32 %v1569, %v1591
    %v1594 = vadd.f32 %v1570, %v1592
    %s1595 = sld [smem:[#allocation2 + $0xa5]]
    %v1596 = vstv %s1595
    %v1597 = vmul.f32 %v1596, %v1547
    %v1598 = vmul.f32 %v1596, %v1548
    %v1599 = vadd.f32 %v1575, %v1597
    %v1600 = vadd.f32 %v1576, %v1598
    %s1601 = sld [smem:[#allocation2 + $0xa6]]
    %v1602 = vstv %s1601
    %v1603 = vmul.f32 %v1602, %v1547
    %v1604 = vmul.f32 %v1602, %v1548
    %v1605 = vadd.f32 %v1581, %v1603
    %v1606 = vadd.f32 %v1582, %v1604
    %s1607 = sld [smem:[#allocation2 + $0xa7]]
    %v1608 = vstv %s1607
    %v1609 = vmul.f32 %v1608, %v1547
    %v1610 = vmul.f32 %v1608, %v1548
    %v1611 = vadd.f32 %v1587, %v1609
    %v1612 = vadd.f32 %v1588, %v1610
    %s1613 = sld [smem:[#allocation2 + $0xa8]]
    %v1614 = vstv %s1613
    %v1615 = vmul.f32 %v1614, %v1555
    %v1616 = vmul.f32 %v1614, %v1556
    %v1617 = vadd.f32 %v1593, %v1615
    %v1618 = vadd.f32 %v1594, %v1616
    %s1619 = sld [smem:[#allocation2 + $0xa9]]
    %v1620 = vstv %s1619
    %v1621 = vmul.f32 %v1620, %v1555
    %v1622 = vmul.f32 %v1620, %v1556
    %v1623 = vadd.f32 %v1599, %v1621
    %v1624 = vadd.f32 %v1600, %v1622
    %s1625 = sld [smem:[#allocation2 + $0xaa]]
    %v1626 = vstv %s1625
    %v1627 = vmul.f32 %v1626, %v1555
    %v1628 = vmul.f32 %v1626, %v1556
    %v1629 = vadd.f32 %v1605, %v1627
    %v1630 = vadd.f32 %v1606, %v1628
    %s1631 = sld [smem:[#allocation2 + $0xab]]
    %v1632 = vstv %s1631
    %v1633 = vmul.f32 %v1632, %v1555
    %v1634 = vmul.f32 %v1632, %v1556
    %v1635 = vadd.f32 %v1611, %v1633
    %v1636 = vadd.f32 %v1612, %v1634
    %s1637 = sld [smem:[#allocation2 + $0xac]]
    %v1638 = vstv %s1637
    %v1639 = vmul.f32 %v1638, %v1563
    %v1640 = vmul.f32 %v1638, %v1564
    %v1641 = vadd.f32 %v1617, %v1639
    %v1642 = vadd.f32 %v1618, %v1640
    %s1643 = sld [smem:[#allocation2 + $0xad]]
    %v1644 = vstv %s1643
    %v1645 = vmul.f32 %v1644, %v1563
    %v1646 = vmul.f32 %v1644, %v1564
    %v1647 = vadd.f32 %v1623, %v1645
    %v1648 = vadd.f32 %v1624, %v1646
    %s1649 = sld [smem:[#allocation2 + $0xae]]
    %v1650 = vstv %s1649
    %v1651 = vmul.f32 %v1650, %v1563
    %v1652 = vmul.f32 %v1650, %v1564
    %v1653 = vadd.f32 %v1629, %v1651
    %v1654 = vadd.f32 %v1630, %v1652
    %s1655 = sld [smem:[#allocation2 + $0xaf]]
    %v1656 = vstv %s1655
    %v1657 = vmul.f32 %v1656, %v1563
    %v1658 = vmul.f32 %v1656, %v1564
    %v1659 = vadd.f32 %v1635, %v1657
    %v1660 = vadd.f32 %v1636, %v1658
    %1661 = vrot.lane.b32.xlu0 %v526, 111
    %v1662 = vpop.permute.xlu0 %1661
    %1663 = vrot.lane.b32.xlu0 %v527, 111
    %v1664 = vpop.permute.xlu0 %1663
    %v1665 = vsel %vm444, %v1662, %v1664
    %v1666 = vsel %vm444, %v1664, %v1662
    %v1667 = vmul.f32 %v1665, %v454
    %v1668 = vmul.f32 %v1666, %v455
    %1669 = vrot.lane.b32.xlu0 %v569, 111
    %v1670 = vpop.permute.xlu0 %1669
    %1671 = vrot.lane.b32.xlu0 %v570, 111
    %v1672 = vpop.permute.xlu0 %1671
    %v1673 = vsel %vm444, %v1670, %v1672
    %v1674 = vsel %vm444, %v1672, %v1670
    %v1675 = vmul.f32 %v1673, %v454
    %v1676 = vmul.f32 %v1674, %v455
    %1677 = vrot.lane.b32.xlu0 %v612, 111
    %v1678 = vpop.permute.xlu0 %1677
    %1679 = vrot.lane.b32.xlu0 %v613, 111
    %v1680 = vpop.permute.xlu0 %1679
    %v1681 = vsel %vm444, %v1678, %v1680
    %v1682 = vsel %vm444, %v1680, %v1678
    %v1683 = vmul.f32 %v1681, %v454
    %v1684 = vmul.f32 %v1682, %v455
    %1685 = vrot.lane.b32.xlu0 %v655, 111
    %v1686 = vpop.permute.xlu0 %1685
    %1687 = vrot.lane.b32.xlu0 %v656, 111
    %v1688 = vpop.permute.xlu0 %1687
    %v1689 = vsel %vm444, %v1686, %v1688
    %v1690 = vsel %vm444, %v1688, %v1686
    %v1691 = vmul.f32 %v1689, %v454
    %v1692 = vmul.f32 %v1690, %v455
    %s1693 = sld [smem:[#allocation2 + $0xb0]]
    %v1694 = vstv %s1693
    %v1695 = vmul.f32 %v1694, %v1667
    %v1696 = vmul.f32 %v1694, %v1668
    %v1697 = vadd.f32 %v1641, %v1695
    %v1698 = vadd.f32 %v1642, %v1696
    %s1699 = sld [smem:[#allocation2 + $0xb1]]
    %v1700 = vstv %s1699
    %v1701 = vmul.f32 %v1700, %v1667
    %v1702 = vmul.f32 %v1700, %v1668
    %v1703 = vadd.f32 %v1647, %v1701
    %v1704 = vadd.f32 %v1648, %v1702
    %s1705 = sld [smem:[#allocation2 + $0xb2]]
    %v1706 = vstv %s1705
    %v1707 = vmul.f32 %v1706, %v1667
    %v1708 = vmul.f32 %v1706, %v1668
    %v1709 = vadd.f32 %v1653, %v1707
    %v1710 = vadd.f32 %v1654, %v1708
    %s1711 = sld [smem:[#allocation2 + $0xb3]]
    %v1712 = vstv %s1711
    %v1713 = vmul.f32 %v1712, %v1667
    %v1714 = vmul.f32 %v1712, %v1668
    %v1715 = vadd.f32 %v1659, %v1713
    %v1716 = vadd.f32 %v1660, %v1714
    %s1717 = sld [smem:[#allocation2 + $0xb4]]
    %v1718 = vstv %s1717
    %v1719 = vmul.f32 %v1718, %v1675
    %v1720 = vmul.f32 %v1718, %v1676
    %v1721 = vadd.f32 %v1697, %v1719
    %v1722 = vadd.f32 %v1698, %v1720
    %s1723 = sld [smem:[#allocation2 + $0xb5]]
    %v1724 = vstv %s1723
    %v1725 = vmul.f32 %v1724, %v1675
    %v1726 = vmul.f32 %v1724, %v1676
    %v1727 = vadd.f32 %v1703, %v1725
    %v1728 = vadd.f32 %v1704, %v1726
    %s1729 = sld [smem:[#allocation2 + $0xb6]]
    %v1730 = vstv %s1729
    %v1731 = vmul.f32 %v1730, %v1675
    %v1732 = vmul.f32 %v1730, %v1676
    %v1733 = vadd.f32 %v1709, %v1731
    %v1734 = vadd.f32 %v1710, %v1732
    %s1735 = sld [smem:[#allocation2 + $0xb7]]
    %v1736 = vstv %s1735
    %v1737 = vmul.f32 %v1736, %v1675
    %v1738 = vmul.f32 %v1736, %v1676
    %v1739 = vadd.f32 %v1715, %v1737
    %v1740 = vadd.f32 %v1716, %v1738
    %s1741 = sld [smem:[#allocation2 + $0xb8]]
    %v1742 = vstv %s1741
    %v1743 = vmul.f32 %v1742, %v1683
    %v1744 = vmul.f32 %v1742, %v1684
    %v1745 = vadd.f32 %v1721, %v1743
    %v1746 = vadd.f32 %v1722, %v1744
    %s1747 = sld [smem:[#allocation2 + $0xb9]]
    %v1748 = vstv %s1747
    %v1749 = vmul.f32 %v1748, %v1683
    %v1750 = vmul.f32 %v1748, %v1684
    %v1751 = vadd.f32 %v1727, %v1749
    %v1752 = vadd.f32 %v1728, %v1750
    %s1753 = sld [smem:[#allocation2 + $0xba]]
    %v1754 = vstv %s1753
    %v1755 = vmul.f32 %v1754, %v1683
    %v1756 = vmul.f32 %v1754, %v1684
    %v1757 = vadd.f32 %v1733, %v1755
    %v1758 = vadd.f32 %v1734, %v1756
    %s1759 = sld [smem:[#allocation2 + $0xbb]]
    %v1760 = vstv %s1759
    %v1761 = vmul.f32 %v1760, %v1683
    %v1762 = vmul.f32 %v1760, %v1684
    %v1763 = vadd.f32 %v1739, %v1761
    %v1764 = vadd.f32 %v1740, %v1762
    %s1765 = sld [smem:[#allocation2 + $0xbc]]
    %v1766 = vstv %s1765
    %v1767 = vmul.f32 %v1766, %v1691
    %v1768 = vmul.f32 %v1766, %v1692
    %v1769 = vadd.f32 %v1745, %v1767
    %v1770 = vadd.f32 %v1746, %v1768
    %s1771 = sld [smem:[#allocation2 + $0xbd]]
    %v1772 = vstv %s1771
    %v1773 = vmul.f32 %v1772, %v1691
    %v1774 = vmul.f32 %v1772, %v1692
    %v1775 = vadd.f32 %v1751, %v1773
    %v1776 = vadd.f32 %v1752, %v1774
    %s1777 = sld [smem:[#allocation2 + $0xbe]]
    %v1778 = vstv %s1777
    %v1779 = vmul.f32 %v1778, %v1691
    %v1780 = vmul.f32 %v1778, %v1692
    %v1781 = vadd.f32 %v1757, %v1779
    %v1782 = vadd.f32 %v1758, %v1780
    %s1783 = sld [smem:[#allocation2 + $0xbf]]
    %v1784 = vstv %s1783
    %v1785 = vmul.f32 %v1784, %v1691
    %v1786 = vmul.f32 %v1784, %v1692
    %v1787 = vadd.f32 %v1763, %v1785
    %v1788 = vadd.f32 %v1764, %v1786
    %v1789 = vsel %vm484, %v1769, 0.0
    %v1790 = vsel %vm484, %v1770, 0.0
    %v1791 = vadd.f32 %v1789, %v1790
    %1792 = vadd.xlane.f32.xlu0 %v1791
    %v1793 = vpop.xlane.xlu0 %1792
    %v1794 = vsel %vm484, %v1793, 0.0
    %v1795 = vrot.slane %v1794, 4
    %v1796 = vadd.f32 %v1794, %v1795
    %v1797 = vrot.slane %v1796, 2
    %v1798 = vadd.f32 %v1796, %v1797
    %v1799 = vrot.slane %v1798, 1
    %v1800 = vadd.f32 %v1798, %v1799
    %v1801 = vmul.f32 %v1800, 0.001953125
    %v1802 = vsub.f32 %v1769, %v1801
    %v1803 = vsub.f32 %v1770, %v1801
    %v1804 = vmul.f32 %v1802, %v1802
    %v1805 = vmul.f32 %v1803, %v1803
    %v1806 = vsel %vm484, %v1804, 0.0
    %v1807 = vsel %vm484, %v1805, 0.0
    %v1808 = vadd.f32 %v1806, %v1807
    %1809 = vadd.xlane.f32.xlu0 %v1808
    %v1810 = vpop.xlane.xlu0 %1809
    %v1811 = vsel %vm484, %v1810, 0.0
    %v1812 = vrot.slane %v1811, 4
    %v1813 = vadd.f32 %v1811, %v1812
    %v1814 = vrot.slane %v1813, 2
    %v1815 = vadd.f32 %v1813, %v1814
    %v1816 = vrot.slane %v1815, 1
    %v1817 = vadd.f32 %v1815, %v1816
    %v1818 = vmul.f32 %v1817, 0.001953125
    %v1819 = vadd.f32 %v1818, 1e-05
    %v1820 = vrsqrt.pop %v1819
    %s1821 = sld [smem:[#allocation2 + $0xc4]]
    %v1822 = vstv %s1821
    %v1823 = vmul.f32 %v1820, %v1822
    %v1824 = vmul.f32 %v1802, %v1823
    %v1825 = vmul.f32 %v1803, %v1823
    %s1826 = sld [smem:[#allocation2 + $0xc8]]
    %v1827 = vstv %s1826
    %v1828 = vadd.f32 %v1824, %v1827
    %v1829 = vadd.f32 %v1825, %v1827
    %v1830 = vmax.f32 %v1828, 0.0
    %v1831 = vmax.f32 %v1829, 0.0
    %v1832 = vsel %vm484, %v1775, 0.0
    %v1833 = vsel %vm484, %v1776, 0.0
    %v1834 = vadd.f32 %v1832, %v1833
    %1835 = vadd.xlane.f32.xlu0 %v1834
    %v1836 = vpop.xlane.xlu0 %1835
    %v1837 = vsel %vm484, %v1836, 0.0
    %v1838 = vrot.slane %v1837, 4
    %v1839 = vadd.f32 %v1837, %v1838
    %v1840 = vrot.slane %v1839, 2
    %v1841 = vadd.f32 %v1839, %v1840
    %v1842 = vrot.slane %v1841, 1
    %v1843 = vadd.f32 %v1841, %v1842
    %v1844 = vmul.f32 %v1843, 0.001953125
    %v1845 = vsub.f32 %v1775, %v1844
    %v1846 = vsub.f32 %v1776, %v1844
    %v1847 = vmul.f32 %v1845, %v1845
    %v1848 = vmul.f32 %v1846, %v1846
    %v1849 = vsel %vm484, %v1847, 0.0
    %v1850 = vsel %vm484, %v1848, 0.0
    %v1851 = vadd.f32 %v1849, %v1850
    %1852 = vadd.xlane.f32.xlu0 %v1851
    %v1853 = vpop.xlane.xlu0 %1852
    %v1854 = vsel %vm484, %v1853, 0.0
    %v1855 = vrot.slane %v1854, 4
    %v1856 = vadd.f32 %v1854, %v1855
    %v1857 = vrot.slane %v1856, 2
    %v1858 = vadd.f32 %v1856, %v1857
    %v1859 = vrot.slane %v1858, 1
    %v1860 = vadd.f32 %v1858, %v1859
    %v1861 = vmul.f32 %v1860, 0.001953125
    %v1862 = vadd.f32 %v1861, 1e-05
    %v1863 = vrsqrt.pop %v1862
    %s1864 = sld [smem:[#allocation2 + $0xc5]]
    %v1865 = vstv %s1864
    %v1866 = vmul.f32 %v1863, %v1865
    %v1867 = vmul.f32 %v1845, %v1866
    %v1868 = vmul.f32 %v1846, %v1866
    %s1869 = sld [smem:[#allocation2 + $0xc9]]
    %v1870 = vstv %s1869
    %v1871 = vadd.f32 %v1867, %v1870
    %v1872 = vadd.f32 %v1868, %v1870
    %v1873 = vmax.f32 %v1871, 0.0
    %v1874 = vmax.f32 %v1872, 0.0
    %v1875 = vsel %vm484, %v1781, 0.0
    %v1876 = vsel %vm484, %v1782, 0.0
    %v1877 = vadd.f32 %v1875, %v1876
    %1878 = vadd.xlane.f32.xlu0 %v1877
    %v1879 = vpop.xlane.xlu0 %1878
    %v1880 = vsel %vm484, %v1879, 0.0
    %v1881 = vrot.slane %v1880, 4
    %v1882 = vadd.f32 %v1880, %v1881
    %v1883 = vrot.slane %v1882, 2
    %v1884 = vadd.f32 %v1882, %v1883
    %v1885 = vrot.slane %v1884, 1
    %v1886 = vadd.f32 %v1884, %v1885
    %v1887 = vmul.f32 %v1886, 0.001953125
    %v1888 = vsub.f32 %v1781, %v1887
    %v1889 = vsub.f32 %v1782, %v1887
    %v1890 = vmul.f32 %v1888, %v1888
    %v1891 = vmul.f32 %v1889, %v1889
    %v1892 = vsel %vm484, %v1890, 0.0
    %v1893 = vsel %vm484, %v1891, 0.0
    %v1894 = vadd.f32 %v1892, %v1893
    %1895 = vadd.xlane.f32.xlu0 %v1894
    %v1896 = vpop.xlane.xlu0 %1895
    %v1897 = vsel %vm484, %v1896, 0.0
    %v1898 = vrot.slane %v1897, 4
    %v1899 = vadd.f32 %v1897, %v1898
    %v1900 = vrot.slane %v1899, 2
    %v1901 = vadd.f32 %v1899, %v1900
    %v1902 = vrot.slane %v1901, 1
    %v1903 = vadd.f32 %v1901, %v1902
    %v1904 = vmul.f32 %v1903, 0.001953125
    %v1905 = vadd.f32 %v1904, 1e-05
    %v1906 = vrsqrt.pop %v1905
    %s1907 = sld [smem:[#allocation2 + $0xc6]]
    %v1908 = vstv %s1907
    %v1909 = vmul.f32 %v1906, %v1908
    %v1910 = vmul.f32 %v1888, %v1909
    %v1911 = vmul.f32 %v1889, %v1909
    %s1912 = sld [smem:[#allocation2 + $0xca]]
    %v1913 = vstv %s1912
    %v1914 = vadd.f32 %v1910, %v1913
    %v1915 = vadd.f32 %v1911, %v1913
    %v1916 = vmax.f32 %v1914, 0.0
    %v1917 = vmax.f32 %v1915, 0.0
    %v1918 = vsel %vm484, %v1787, 0.0
    %v1919 = vsel %vm484, %v1788, 0.0
    %v1920 = vadd.f32 %v1918, %v1919
    %1921 = vadd.xlane.f32.xlu0 %v1920
    %v1922 = vpop.xlane.xlu0 %1921
    %v1923 = vsel %vm484, %v1922, 0.0
    %v1924 = vrot.slane %v1923, 4
    %v1925 = vadd.f32 %v1923, %v1924
    %v1926 = vrot.slane %v1925, 2
    %v1927 = vadd.f32 %v1925, %v1926
    %v1928 = vrot.slane %v1927, 1
    %v1929 = vadd.f32 %v1927, %v1928
    %v1930 = vmul.f32 %v1929, 0.001953125
    %v1931 = vsub.f32 %v1787, %v1930
    %v1932 = vsub.f32 %v1788, %v1930
    %v1933 = vmul.f32 %v1931, %v1931
    %v1934 = vmul.f32 %v1932, %v1932
    %v1935 = vsel %vm484, %v1933, 0.0
    %v1936 = vsel %vm484, %v1934, 0.0
    %v1937 = vadd.f32 %v1935, %v1936
    %1938 = vadd.xlane.f32.xlu0 %v1937
    %v1939 = vpop.xlane.xlu0 %1938
    %v1940 = vsel %vm484, %v1939, 0.0
    %v1941 = vrot.slane %v1940, 4
    %v1942 = vadd.f32 %v1940, %v1941
    %v1943 = vrot.slane %v1942, 2
    %v1944 = vadd.f32 %v1942, %v1943
    %v1945 = vrot.slane %v1944, 1
    %v1946 = vadd.f32 %v1944, %v1945
    %v1947 = vmul.f32 %v1946, 0.001953125
    %v1948 = vadd.f32 %v1947, 1e-05
    %v1949 = vrsqrt.pop %v1948
    %s1950 = sld [smem:[#allocation2 + $0xc7]]
    %v1951 = vstv %s1950
    %v1952 = vmul.f32 %v1949, %v1951
    %v1953 = vmul.f32 %v1931, %v1952
    %v1954 = vmul.f32 %v1932, %v1952
    %s1955 = sld [smem:[#allocation2 + $0xcb]]
    %v1956 = vstv %s1955
    %v1957 = vadd.f32 %v1953, %v1956
    %v1958 = vadd.f32 %v1954, %v1956
    %v1959 = vmax.f32 %v1957, 0.0
    %v1960 = vmax.f32 %v1958, 0.0
    %s1961 = sld [smem:[#allocation2 + $0xf0]]
    %v1962 = vstv %s1961
    %v1963 = vadd.f32 %v1962, 0.0
    %1964 = vrot.lane.b32.xlu0 %v1830, 17
    %v1965 = vpop.permute.xlu0 %1964
    %1966 = vrot.lane.b32.xlu0 %v1831, 17
    %v1967 = vpop.permute.xlu0 %1966
    %v1968 = vsel %vm58, %v1965, %v1967
    %v1969 = vsel %vm58, %v1967, %v1965
    %v1970 = vmul.f32 %v1969, %v68
    %v1971 = vmul.f32 %v1968, %v69
    %1972 = vrot.lane.b32.xlu0 %v1873, 17
    %v1973 = vpop.permute.xlu0 %1972
    %1974 = vrot.lane.b32.xlu0 %v1874, 17
    %v1975 = vpop.permute.xlu0 %1974
    %v1976 = vsel %vm58, %v1973, %v1975
    %v1977 = vsel %vm58, %v1975, %v1973
    %v1978 = vmul.f32 %v1977, %v68
    %v1979 = vmul.f32 %v1976, %v69
    %1980 = vrot.lane.b32.xlu0 %v1916, 17
    %v1981 = vpop.permute.xlu0 %1980
    %1982 = vrot.lane.b32.xlu0 %v1917, 17
    %v1983 = vpop.permute.xlu0 %1982
    %v1984 = vsel %vm58, %v1981, %v1983
    %v1985 = vsel %vm58, %v1983, %v1981
    %v1986 = vmul.f32 %v1985, %v68
    %v1987 = vmul.f32 %v1984, %v69
    %1988 = vrot.lane.b32.xlu0 %v1959, 17
    %v1989 = vpop.permute.xlu0 %1988
    %1990 = vrot.lane.b32.xlu0 %v1960, 17
    %v1991 = vpop.permute.xlu0 %1990
    %v1992 = vsel %vm58, %v1989, %v1991
    %v1993 = vsel %vm58, %v1991, %v1989
    %v1994 = vmul.f32 %v1993, %v68
    %v1995 = vmul.f32 %v1992, %v69
    %s1996 = sld [smem:[#allocation2 + $0xcc]]
    %v1997 = vstv %s1996
    %v1998 = vmul.f32 %v1997, %v1970
    %v1999 = vmul.f32 %v1997, %v1971
    %v2000 = vadd.f32 %v1963, %v1998
    %v2001 = vadd.f32 %v1963, %v1999
    %s2002 = sld [smem:[#allocation2 + $0xcd]]
    %v2003 = vstv %s2002
    %v2004 = vmul.f32 %v2003, %v1978
    %v2005 = vmul.f32 %v2003, %v1979
    %v2006 = vadd.f32 %v2000, %v2004
    %v2007 = vadd.f32 %v2001, %v2005
    %s2008 = sld [smem:[#allocation2 + $0xce]]
    %v2009 = vstv %s2008
    %v2010 = vmul.f32 %v2009, %v1986
    %v2011 = vmul.f32 %v2009, %v1987
    %v2012 = vadd.f32 %v2006, %v2010
    %v2013 = vadd.f32 %v2007, %v2011
    %s2014 = sld [smem:[#allocation2 + $0xcf]]
    %v2015 = vstv %s2014
    %v2016 = vmul.f32 %v2015, %v1994
    %v2017 = vmul.f32 %v2015, %v1995
    %v2018 = vadd.f32 %v2012, %v2016
    %v2019 = vadd.f32 %v2013, %v2017
    %2020 = vrot.lane.b32.xlu0 %v1830, 16
    %v2021 = vpop.permute.xlu0 %2020
    %2022 = vrot.lane.b32.xlu0 %v1831, 16
    %v2023 = vpop.permute.xlu0 %2022
    %v2024 = vsel %vm104, %v2021, %v2023
    %v2025 = vsel %vm104, %v2023, %v2021
    %v2026 = vmul.f32 %v2025, %v114
    %v2027 = vmul.f32 %v2024, %v115
    %2028 = vrot.lane.b32.xlu0 %v1873, 16
    %v2029 = vpop.permute.xlu0 %2028
    %2030 = vrot.lane.b32.xlu0 %v1874, 16
    %v2031 = vpop.permute.xlu0 %2030
    %v2032 = vsel %vm104, %v2029, %v2031
    %v2033 = vsel %vm104, %v2031, %v2029
    %v2034 = vmul.f32 %v2033, %v114
    %v2035 = vmul.f32 %v2032, %v115
    %2036 = vrot.lane.b32.xlu0 %v1916, 16
    %v2037 = vpop.permute.xlu0 %2036
    %2038 = vrot.lane.b32.xlu0 %v1917, 16
    %v2039 = vpop.permute.xlu0 %2038
    %v2040 = vsel %vm104, %v2037, %v2039
    %v2041 = vsel %vm104, %v2039, %v2037
    %v2042 = vmul.f32 %v2041, %v114
    %v2043 = vmul.f32 %v2040, %v115
    %2044 = vrot.lane.b32.xlu0 %v1959, 16
    %v2045 = vpop.permute.xlu0 %2044
    %2046 = vrot.lane.b32.xlu0 %v1960, 16
    %v2047 = vpop.permute.xlu0 %2046
    %v2048 = vsel %vm104, %v2045, %v2047
    %v2049 = vsel %vm104, %v2047, %v2045
    %v2050 = vmul.f32 %v2049, %v114
    %v2051 = vmul.f32 %v2048, %v115
    %s2052 = sld [smem:[#allocation2 + $0xd0]]
    %v2053 = vstv %s2052
    %v2054 = vmul.f32 %v2053, %v2026
    %v2055 = vmul.f32 %v2053, %v2027
    %v2056 = vadd.f32 %v2018, %v2054
    %v2057 = vadd.f32 %v2019, %v2055
    %s2058 = sld [smem:[#allocation2 + $0xd1]]
    %v2059 = vstv %s2058
    %v2060 = vmul.f32 %v2059, %v2034
    %v2061 = vmul.f32 %v2059, %v2035
    %v2062 = vadd.f32 %v2056, %v2060
    %v2063 = vadd.f32 %v2057, %v2061
    %s2064 = sld [smem:[#allocation2 + $0xd2]]
    %v2065 = vstv %s2064
    %v2066 = vmul.f32 %v2065, %v2042
    %v2067 = vmul.f32 %v2065, %v2043
    %v2068 = vadd.f32 %v2062, %v2066
    %v2069 = vadd.f32 %v2063, %v2067
    %s2070 = sld [smem:[#allocation2 + $0xd3]]
    %v2071 = vstv %s2070
    %v2072 = vmul.f32 %v2071, %v2050
    %v2073 = vmul.f32 %v2071, %v2051
    %v2074 = vadd.f32 %v2068, %v2072
    %v2075 = vadd.f32 %v2069, %v2073
    %2076 = vrot.lane.b32.xlu0 %v1830, 15
    %v2077 = vpop.permute.xlu0 %2076
    %2078 = vrot.lane.b32.xlu0 %v1831, 15
    %v2079 = vpop.permute.xlu0 %2078
    %v2080 = vsel %vm150, %v2077, %v2079
    %v2081 = vsel %vm150, %v2079, %v2077
    %v2082 = vmul.f32 %v2081, %v160
    %v2083 = vmul.f32 %v2080, %v161
    %2084 = vrot.lane.b32.xlu0 %v1873, 15
    %v2085 = vpop.permute.xlu0 %2084
    %2086 = vrot.lane.b32.xlu0 %v1874, 15
    %v2087 = vpop.permute.xlu0 %2086
    %v2088 = vsel %vm150, %v2085, %v2087
    %v2089 = vsel %vm150, %v2087, %v2085
    %v2090 = vmul.f32 %v2089, %v160
    %v2091 = vmul.f32 %v2088, %v161
    %2092 = vrot.lane.b32.xlu0 %v1916, 15
    %v2093 = vpop.permute.xlu0 %2092
    %2094 = vrot.lane.b32.xlu0 %v1917, 15
    %v2095 = vpop.permute.xlu0 %2094
    %v2096 = vsel %vm150, %v2093, %v2095
    %v2097 = vsel %vm150, %v2095, %v2093
    %v2098 = vmul.f32 %v2097, %v160
    %v2099 = vmul.f32 %v2096, %v161
    %2100 = vrot.lane.b32.xlu0 %v1959, 15
    %v2101 = vpop.permute.xlu0 %2100
    %2102 = vrot.lane.b32.xlu0 %v1960, 15
    %v2103 = vpop.permute.xlu0 %2102
    %v2104 = vsel %vm150, %v2101, %v2103
    %v2105 = vsel %vm150, %v2103, %v2101
    %v2106 = vmul.f32 %v2105, %v160
    %v2107 = vmul.f32 %v2104, %v161
    %s2108 = sld [smem:[#allocation2 + $0xd4]]
    %v2109 = vstv %s2108
    %v2110 = vmul.f32 %v2109, %v2082
    %v2111 = vmul.f32 %v2109, %v2083
    %v2112 = vadd.f32 %v2074, %v2110
    %v2113 = vadd.f32 %v2075, %v2111
    %s2114 = sld [smem:[#allocation2 + $0xd5]]
    %v2115 = vstv %s2114
    %v2116 = vmul.f32 %v2115, %v2090
    %v2117 = vmul.f32 %v2115, %v2091
    %v2118 = vadd.f32 %v2112, %v2116
    %v2119 = vadd.f32 %v2113, %v2117
    %s2120 = sld [smem:[#allocation2 + $0xd6]]
    %v2121 = vstv %s2120
    %v2122 = vmul.f32 %v2121, %v2098
    %v2123 = vmul.f32 %v2121, %v2099
    %v2124 = vadd.f32 %v2118, %v2122
    %v2125 = vadd.f32 %v2119, %v2123
    %s2126 = sld [smem:[#allocation2 + $0xd7]]
    %v2127 = vstv %s2126
    %v2128 = vmul.f32 %v2127, %v2106
    %v2129 = vmul.f32 %v2127, %v2107
    %v2130 = vadd.f32 %v2124, %v2128
    %v2131 = vadd.f32 %v2125, %v2129
    %2132 = vrot.lane.b32.xlu0 %v1830, 1
    %v2133 = vpop.permute.xlu0 %2132
    %2134 = vrot.lane.b32.xlu0 %v1831, 1
    %v2135 = vpop.permute.xlu0 %2134
    %v2136 = vsel %vm196, %v2133, %v2135
    %v2137 = vsel %vm196, %v2135, %v2133
    %v2138 = vmul.f32 %v2137, %v206
    %v2139 = vmul.f32 %v2136, %v207
    %2140 = vrot.lane.b32.xlu0 %v1873, 1
    %v2141 = vpop.permute.xlu0 %2140
    %2142 = vrot.lane.b32.xlu0 %v1874, 1
    %v2143 = vpop.permute.xlu0 %2142
    %v2144 = vsel %vm196, %v2141, %v2143
    %v2145 = vsel %vm196, %v2143, %v2141
    %v2146 = vmul.f32 %v2145, %v206
    %v2147 = vmul.f32 %v2144, %v207
    %2148 = vrot.lane.b32.xlu0 %v1916, 1
    %v2149 = vpop.permute.xlu0 %2148
    %2150 = vrot.lane.b32.xlu0 %v1917, 1
    %v2151 = vpop.permute.xlu0 %2150
    %v2152 = vsel %vm196, %v2149, %v2151
    %v2153 = vsel %vm196, %v2151, %v2149
    %v2154 = vmul.f32 %v2153, %v206
    %v2155 = vmul.f32 %v2152, %v207
    %2156 = vrot.lane.b32.xlu0 %v1959, 1
    %v2157 = vpop.permute.xlu0 %2156
    %2158 = vrot.lane.b32.xlu0 %v1960, 1
    %v2159 = vpop.permute.xlu0 %2158
    %v2160 = vsel %vm196, %v2157, %v2159
    %v2161 = vsel %vm196, %v2159, %v2157
    %v2162 = vmul.f32 %v2161, %v206
    %v2163 = vmul.f32 %v2160, %v207
    %s2164 = sld [smem:[#allocation2 + $0xd8]]
    %v2165 = vstv %s2164
    %v2166 = vmul.f32 %v2165, %v2138
    %v2167 = vmul.f32 %v2165, %v2139
    %v2168 = vadd.f32 %v2130, %v2166
    %v2169 = vadd.f32 %v2131, %v2167
    %s2170 = sld [smem:[#allocation2 + $0xd9]]
    %v2171 = vstv %s2170
    %v2172 = vmul.f32 %v2171, %v2146
    %v2173 = vmul.f32 %v2171, %v2147
    %v2174 = vadd.f32 %v2168, %v2172
    %v2175 = vadd.f32 %v2169, %v2173
    %s2176 = sld [smem:[#allocation2 + $0xda]]
    %v2177 = vstv %s2176
    %v2178 = vmul.f32 %v2177, %v2154
    %v2179 = vmul.f32 %v2177, %v2155
    %v2180 = vadd.f32 %v2174, %v2178
    %v2181 = vadd.f32 %v2175, %v2179
    %s2182 = sld [smem:[#allocation2 + $0xdb]]
    %v2183 = vstv %s2182
    %v2184 = vmul.f32 %v2183, %v2162
    %v2185 = vmul.f32 %v2183, %v2163
    %v2186 = vadd.f32 %v2180, %v2184
    %v2187 = vadd.f32 %v2181, %v2185
    %s2188 = sld [smem:[#allocation2 + $0xdc]]
    %v2189 = vstv %s2188
    %v2190 = vmul.f32 %v2189, %v1830
    %v2191 = vmul.f32 %v2189, %v1831
    %v2192 = vadd.f32 %v2186, %v2190
    %v2193 = vadd.f32 %v2187, %v2191
    %s2194 = sld [smem:[#allocation2 + $0xdd]]
    %v2195 = vstv %s2194
    %v2196 = vmul.f32 %v2195, %v1873
    %v2197 = vmul.f32 %v2195, %v1874
    %v2198 = vadd.f32 %v2192, %v2196
    %v2199 = vadd.f32 %v2193, %v2197
    %s2200 = sld [smem:[#allocation2 + $0xde]]
    %v2201 = vstv %s2200
    %v2202 = vmul.f32 %v2201, %v1916
    %v2203 = vmul.f32 %v2201, %v1917
    %v2204 = vadd.f32 %v2198, %v2202
    %v2205 = vadd.f32 %v2199, %v2203
    %s2206 = sld [smem:[#allocation2 + $0xdf]]
    %v2207 = vstv %s2206
    %v2208 = vmul.f32 %v2207, %v1959
    %v2209 = vmul.f32 %v2207, %v1960
    %v2210 = vadd.f32 %v2204, %v2208
    %v2211 = vadd.f32 %v2205, %v2209
    %2212 = vrot.lane.b32.xlu0 %v1830, 127
    %v2213 = vpop.permute.xlu0 %2212
    %2214 = vrot.lane.b32.xlu0 %v1831, 127
    %v2215 = vpop.permute.xlu0 %2214
    %v2216 = vsel %vm306, %v2213, %v2215
    %v2217 = vsel %vm306, %v2215, %v2213
    %v2218 = vmul.f32 %v2216, %v316
    %v2219 = vmul.f32 %v2217, %v317
    %2220 = vrot.lane.b32.xlu0 %v1873, 127
    %v2221 = vpop.permute.xlu0 %2220
    %2222 = vrot.lane.b32.xlu0 %v1874, 127
    %v2223 = vpop.permute.xlu0 %2222
    %v2224 = vsel %vm306, %v2221, %v2223
    %v2225 = vsel %vm306, %v2223, %v2221
    %v2226 = vmul.f32 %v2224, %v316
    %v2227 = vmul.f32 %v2225, %v317
    %2228 = vrot.lane.b32.xlu0 %v1916, 127
    %v2229 = vpop.permute.xlu0 %2228
    %2230 = vrot.lane.b32.xlu0 %v1917, 127
    %v2231 = vpop.permute.xlu0 %2230
    %v2232 = vsel %vm306, %v2229, %v2231
    %v2233 = vsel %vm306, %v2231, %v2229
    %v2234 = vmul.f32 %v2232, %v316
    %v2235 = vmul.f32 %v2233, %v317
    %2236 = vrot.lane.b32.xlu0 %v1959, 127
    %v2237 = vpop.permute.xlu0 %2236
    %2238 = vrot.lane.b32.xlu0 %v1960, 127
    %v2239 = vpop.permute.xlu0 %2238
    %v2240 = vsel %vm306, %v2237, %v2239
    %v2241 = vsel %vm306, %v2239, %v2237
    %v2242 = vmul.f32 %v2240, %v316
    %v2243 = vmul.f32 %v2241, %v317
    %s2244 = sld [smem:[#allocation2 + $0xe0]]
    %v2245 = vstv %s2244
    %v2246 = vmul.f32 %v2245, %v2218
    %v2247 = vmul.f32 %v2245, %v2219
    %v2248 = vadd.f32 %v2210, %v2246
    %v2249 = vadd.f32 %v2211, %v2247
    %s2250 = sld [smem:[#allocation2 + $0xe1]]
    %v2251 = vstv %s2250
    %v2252 = vmul.f32 %v2251, %v2226
    %v2253 = vmul.f32 %v2251, %v2227
    %v2254 = vadd.f32 %v2248, %v2252
    %v2255 = vadd.f32 %v2249, %v2253
    %s2256 = sld [smem:[#allocation2 + $0xe2]]
    %v2257 = vstv %s2256
    %v2258 = vmul.f32 %v2257, %v2234
    %v2259 = vmul.f32 %v2257, %v2235
    %v2260 = vadd.f32 %v2254, %v2258
    %v2261 = vadd.f32 %v2255, %v2259
    %s2262 = sld [smem:[#allocation2 + $0xe3]]
    %v2263 = vstv %s2262
    %v2264 = vmul.f32 %v2263, %v2242
    %v2265 = vmul.f32 %v2263, %v2243
    %v2266 = vadd.f32 %v2260, %v2264
    %v2267 = vadd.f32 %v2261, %v2265
    %2268 = vrot.lane.b32.xlu0 %v1830, 113
    %v2269 = vpop.permute.xlu0 %2268
    %2270 = vrot.lane.b32.xlu0 %v1831, 113
    %v2271 = vpop.permute.xlu0 %2270
    %v2272 = vsel %vm352, %v2269, %v2271
    %v2273 = vsel %vm352, %v2271, %v2269
    %v2274 = vmul.f32 %v2272, %v362
    %v2275 = vmul.f32 %v2273, %v363
    %2276 = vrot.lane.b32.xlu0 %v1873, 113
    %v2277 = vpop.permute.xlu0 %2276
    %2278 = vrot.lane.b32.xlu0 %v1874, 113
    %v2279 = vpop.permute.xlu0 %2278
    %v2280 = vsel %vm352, %v2277, %v2279
    %v2281 = vsel %vm352, %v2279, %v2277
    %v2282 = vmul.f32 %v2280, %v362
    %v2283 = vmul.f32 %v2281, %v363
    %2284 = vrot.lane.b32.xlu0 %v1916, 113
    %v2285 = vpop.permute.xlu0 %2284
    %2286 = vrot.lane.b32.xlu0 %v1917, 113
    %v2287 = vpop.permute.xlu0 %2286
    %v2288 = vsel %vm352, %v2285, %v2287
    %v2289 = vsel %vm352, %v2287, %v2285
    %v2290 = vmul.f32 %v2288, %v362
    %v2291 = vmul.f32 %v2289, %v363
    %2292 = vrot.lane.b32.xlu0 %v1959, 113
    %v2293 = vpop.permute.xlu0 %2292
    %2294 = vrot.lane.b32.xlu0 %v1960, 113
    %v2295 = vpop.permute.xlu0 %2294
    %v2296 = vsel %vm352, %v2293, %v2295
    %v2297 = vsel %vm352, %v2295, %v2293
    %v2298 = vmul.f32 %v2296, %v362
    %v2299 = vmul.f32 %v2297, %v363
    %s2300 = sld [smem:[#allocation2 + $0xe4]]
    %v2301 = vstv %s2300
    %v2302 = vmul.f32 %v2301, %v2274
    %v2303 = vmul.f32 %v2301, %v2275
    %v2304 = vadd.f32 %v2266, %v2302
    %v2305 = vadd.f32 %v2267, %v2303
    %s2306 = sld [smem:[#allocation2 + $0xe5]]
    %v2307 = vstv %s2306
    %v2308 = vmul.f32 %v2307, %v2282
    %v2309 = vmul.f32 %v2307, %v2283
    %v2310 = vadd.f32 %v2304, %v2308
    %v2311 = vadd.f32 %v2305, %v2309
    %s2312 = sld [smem:[#allocation2 + $0xe6]]
    %v2313 = vstv %s2312
    %v2314 = vmul.f32 %v2313, %v2290
    %v2315 = vmul.f32 %v2313, %v2291
    %v2316 = vadd.f32 %v2310, %v2314
    %v2317 = vadd.f32 %v2311, %v2315
    %s2318 = sld [smem:[#allocation2 + $0xe7]]
    %v2319 = vstv %s2318
    %v2320 = vmul.f32 %v2319, %v2298
    %v2321 = vmul.f32 %v2319, %v2299
    %v2322 = vadd.f32 %v2316, %v2320
    %v2323 = vadd.f32 %v2317, %v2321
    %2324 = vrot.lane.b32.xlu0 %v1830, 112
    %v2325 = vpop.permute.xlu0 %2324
    %2326 = vrot.lane.b32.xlu0 %v1831, 112
    %v2327 = vpop.permute.xlu0 %2326
    %v2328 = vsel %vm398, %v2325, %v2327
    %v2329 = vsel %vm398, %v2327, %v2325
    %v2330 = vmul.f32 %v2328, %v408
    %v2331 = vmul.f32 %v2329, %v409
    %2332 = vrot.lane.b32.xlu0 %v1873, 112
    %v2333 = vpop.permute.xlu0 %2332
    %2334 = vrot.lane.b32.xlu0 %v1874, 112
    %v2335 = vpop.permute.xlu0 %2334
    %v2336 = vsel %vm398, %v2333, %v2335
    %v2337 = vsel %vm398, %v2335, %v2333
    %v2338 = vmul.f32 %v2336, %v408
    %v2339 = vmul.f32 %v2337, %v409
    %2340 = vrot.lane.b32.xlu0 %v1916, 112
    %v2341 = vpop.permute.xlu0 %2340
    %2342 = vrot.lane.b32.xlu0 %v1917, 112
    %v2343 = vpop.permute.xlu0 %2342
    %v2344 = vsel %vm398, %v2341, %v2343
    %v2345 = vsel %vm398, %v2343, %v2341
    %v2346 = vmul.f32 %v2344, %v408
    %v2347 = vmul.f32 %v2345, %v409
    %2348 = vrot.lane.b32.xlu0 %v1959, 112
    %v2349 = vpop.permute.xlu0 %2348
    %2350 = vrot.lane.b32.xlu0 %v1960, 112
    %v2351 = vpop.permute.xlu0 %2350
    %v2352 = vsel %vm398, %v2349, %v2351
    %v2353 = vsel %vm398, %v2351, %v2349
    %v2354 = vmul.f32 %v2352, %v408
    %v2355 = vmul.f32 %v2353, %v409
    %s2356 = sld [smem:[#allocation2 + $0xe8]]
    %v2357 = vstv %s2356
    %v2358 = vmul.f32 %v2357, %v2330
    %v2359 = vmul.f32 %v2357, %v2331
    %v2360 = vadd.f32 %v2322, %v2358
    %v2361 = vadd.f32 %v2323, %v2359
    %s2362 = sld [smem:[#allocation2 + $0xe9]]
    %v2363 = vstv %s2362
    %v2364 = vmul.f32 %v2363, %v2338
    %v2365 = vmul.f32 %v2363, %v2339
    %v2366 = vadd.f32 %v2360, %v2364
    %v2367 = vadd.f32 %v2361, %v2365
    %s2368 = sld [smem:[#allocation2 + $0xea]]
    %v2369 = vstv %s2368
    %v2370 = vmul.f32 %v2369, %v2346
    %v2371 = vmul.f32 %v2369, %v2347
    %v2372 = vadd.f32 %v2366, %v2370
    %v2373 = vadd.f32 %v2367, %v2371
    %s2374 = sld [smem:[#allocation2 + $0xeb]]
    %v2375 = vstv %s2374
    %v2376 = vmul.f32 %v2375, %v2354
    %v2377 = vmul.f32 %v2375, %v2355
    %v2378 = vadd.f32 %v2372, %v2376
    %v2379 = vadd.f32 %v2373, %v2377
    %2380 = vrot.lane.b32.xlu0 %v1830, 111
    %v2381 = vpop.permute.xlu0 %2380
    %2382 = vrot.lane.b32.xlu0 %v1831, 111
    %v2383 = vpop.permute.xlu0 %2382
    %v2384 = vsel %vm444, %v2381, %v2383
    %v2385 = vsel %vm444, %v2383, %v2381
    %v2386 = vmul.f32 %v2384, %v454
    %v2387 = vmul.f32 %v2385, %v455
    %2388 = vrot.lane.b32.xlu0 %v1873, 111
    %v2389 = vpop.permute.xlu0 %2388
    %2390 = vrot.lane.b32.xlu0 %v1874, 111
    %v2391 = vpop.permute.xlu0 %2390
    %v2392 = vsel %vm444, %v2389, %v2391
    %v2393 = vsel %vm444, %v2391, %v2389
    %v2394 = vmul.f32 %v2392, %v454
    %v2395 = vmul.f32 %v2393, %v455
    %2396 = vrot.lane.b32.xlu0 %v1916, 111
    %v2397 = vpop.permute.xlu0 %2396
    %2398 = vrot.lane.b32.xlu0 %v1917, 111
    %v2399 = vpop.permute.xlu0 %2398
    %v2400 = vsel %vm444, %v2397, %v2399
    %v2401 = vsel %vm444, %v2399, %v2397
    %v2402 = vmul.f32 %v2400, %v454
    %v2403 = vmul.f32 %v2401, %v455
    %2404 = vrot.lane.b32.xlu0 %v1959, 111
    %v2405 = vpop.permute.xlu0 %2404
    %2406 = vrot.lane.b32.xlu0 %v1960, 111
    %v2407 = vpop.permute.xlu0 %2406
    %v2408 = vsel %vm444, %v2405, %v2407
    %v2409 = vsel %vm444, %v2407, %v2405
    %v2410 = vmul.f32 %v2408, %v454
    %v2411 = vmul.f32 %v2409, %v455
    %s2412 = sld [smem:[#allocation2 + $0xec]]
    %v2413 = vstv %s2412
    %v2414 = vmul.f32 %v2413, %v2386
    %v2415 = vmul.f32 %v2413, %v2387
    %v2416 = vadd.f32 %v2378, %v2414
    %v2417 = vadd.f32 %v2379, %v2415
    %s2418 = sld [smem:[#allocation2 + $0xed]]
    %v2419 = vstv %s2418
    %v2420 = vmul.f32 %v2419, %v2394
    %v2421 = vmul.f32 %v2419, %v2395
    %v2422 = vadd.f32 %v2416, %v2420
    %v2423 = vadd.f32 %v2417, %v2421
    %s2424 = sld [smem:[#allocation2 + $0xee]]
    %v2425 = vstv %s2424
    %v2426 = vmul.f32 %v2425, %v2402
    %v2427 = vmul.f32 %v2425, %v2403
    %v2428 = vadd.f32 %v2422, %v2426
    %v2429 = vadd.f32 %v2423, %v2427
    %s2430 = sld [smem:[#allocation2 + $0xef]]
    %v2431 = vstv %s2430
    %v2432 = vmul.f32 %v2431, %v2410
    %v2433 = vmul.f32 %v2431, %v2411
    %v2434 = vadd.f32 %v2428, %v2432
    %v2435 = vadd.f32 %v2429, %v2433
    %v2438 = vcombine.low %v2434, %v2435
    %v2440 = vunpack.c.l.s4 1983009808
    %v2441 = vunpack.c.0.s8 %v2440
    %v2442 = vlaneseq
    %v2443 = vshrl.u32 %v2442, 7
    %v2444 = vsub.s32 %v2441, %v2443
    %v2445 = vrot.slane %v2438, %v2444
    %2447 = vst [vmem:[%s3] sm:$0xf] %v2445
    // Predicated region
    $region18: #{_lambda_.1} parent=1 // pred_check
      _
    $region19: #{_lambda_.1} parent=1 // pred_check_branch
      %2449 = sbr.rel (0) target = $region21
    $region20: #{_lambda_.1} parent=1 // pred_region
      _
    $region21: #{_lambda_.1} parent=1 // pred_fallthru
      _
    // Predicated region
    $region22: #{_lambda_.1} parent=1 // pred_check
      _
    $region23: #{_lambda_.1} parent=1 // pred_check_branch
      %2451 = sbr.rel (0) target = $region25
    $region24: #{_lambda_.1} parent=1 // pred_region
      _
    $region25: #{_lambda_.1} parent=1 // pred_fallthru
      _
    %2452 = vsyncpa [#allocation3], 1

</llo_original>
